<compile_context>
chip_gen: v7x
topology: tpu7x:2x2x1
jax: 0.10.0
libtpu: 0.0.40
codegen_flags: <defaults>
</compile_context>

<pallas_src>
import functools

import jax
import jax.numpy as jnp
import numpy as np
from jax import lax
from jax.experimental import pallas as pl
from jax.experimental.pallas import tpu as pltpu

BETA = 0.2
KS = 7
PAD = 3


def _spatial_attn_kernel(w_ref, b_ref, *rest, BT, C, W, HWp, combined):
    if combined:
        cmask_ref, x_ref, o_ref = rest
    else:
        hmask_ref, wmask_ref, x_ref, o_ref = rest

    # ---- Phase 1: per-image channel mean / max -----------------------------
    # Elementwise accumulation over <=8-channel slabs (pure VPU), one
    # cross-sublane reduce per image at the end (keeps XLU free for the rolls).
    CR = min(8, C)
    n_red, red_rem = C // CR, C % CR

    sum_rows, max_rows = [], []
    for bt in range(BT):
        acc_s = x_ref[bt, 0:CR, :]                               # (CR, HWp)
        acc_m = acc_s
        if n_red > 1:
            if n_red <= 8:
                for ci in range(1, n_red):
                    chunk = x_ref[bt, ci * CR:(ci + 1) * CR, :]
                    acc_s = acc_s + chunk
                    acc_m = jnp.maximum(acc_m, chunk)
            else:
                def red_body(ci, carry, bt=bt):
                    s, m = carry
                    c0 = pl.multiple_of(ci * CR, CR)
                    chunk = x_ref[bt, pl.ds(c0, CR), :]
                    return s + chunk, jnp.maximum(m, chunk)
                acc_s, acc_m = lax.fori_loop(1, n_red, red_body, (acc_s, acc_m))
        s_row = jnp.sum(acc_s, axis=0, keepdims=True)            # (1, HWp)
        m_row = jnp.max(acc_m, axis=0, keepdims=True)
        if red_rem:
            tail = x_ref[bt, n_red * CR:C, :]
            s_row = s_row + jnp.sum(tail, axis=0, keepdims=True)
            m_row = jnp.maximum(m_row, jnp.max(tail, axis=0, keepdims=True))
        sum_rows.append(s_row)
        max_rows.append(m_row)

    avg_all = jnp.concatenate(sum_rows, axis=0) * (1.0 / C)      # (BT, HWp)
    max_all = jnp.concatenate(max_rows, axis=0)                  # (BT, HWp)

    # ---- Phase 2: 7x7 conv as 49 masked XLU rolls, batch-vectorized ---------
    # Zero padding is reproduced by per-tap validity masks: any wrapped roll
    # read is masked to zero.  Two partial accumulators break the add chain.
    accs = [jnp.full((BT, HWp), b_ref[0], dtype=jnp.float32),
            jnp.zeros((BT, HWp), dtype=jnp.float32)]
    for dh in range(-PAD, PAD + 1):
        if not combined:
            hrow = hmask_ref[dh + PAD:dh + PAD + 1, :]           # (1, HWp)
        for dw in range(-PAD, PAD + 1):
            t = (dh + PAD) * KS + (dw + PAD)
            # want shifted[i] = map[(i + d) mod HWp]  with d = dh*W + dw
            shift = (-(dh * W + dw)) % HWp
            sa = pltpu.roll(avg_all, shift, axis=1) if shift else avg_all
            sm = pltpu.roll(max_all, shift, axis=1) if shift else max_all
            if combined:
                m = cmask_ref[t:t + 1, :]                        # (1, HWp)
            else:
                m = hrow * wmask_ref[dw + PAD:dw + PAD + 1, :]
            tap = w_ref[t] * sa + w_ref[KS * KS + t] * sm
            accs[t % 2] = accs[t % 2] + m * tap
    conv = accs[0] + accs[1]
    s = jax.nn.sigmoid(conv)
    thr = jnp.where(s >= BETA, s, 0.0)                           # (BT, HWp)

    # ---- Phase 3: stream the channel broadcast to the lane-dense output -----
    CS = min(8, C)
    n_st, st_rem = C // CS, C % CS
    slab = jnp.broadcast_to(jnp.expand_dims(thr, 1), (BT, CS, HWp))  # hoisted
    if n_st <= 8:
        for ci in range(n_st):
            o_ref[:, ci * CS:(ci + 1) * CS, :] = slab
    else:
        def store_body(ci, carry):
            c0 = pl.multiple_of(ci * CS, CS)
            o_ref[:, pl.ds(c0, CS), :] = slab
            return carry
        lax.fori_loop(0, n_st, store_body, 0)
    if st_rem:
        o_ref[:, n_st * CS:C, :] = slab[:, :st_rem, :]


def spatial_attention_pallas(x, conv_w, conv_b, *, batch_tile=None):
    """x: (B,C,H,W); conv_w: (1,2,7,7); conv_b: (1,).  Returns (B,C,H,W) f32."""
    B, C, H, W = x.shape
    HW = H * W
    HWp = ((HW + 127) // 128) * 128            # lane-dense, unmasked stores

    x_flat = jnp.reshape(x.astype(jnp.float32), (B, C, HW))
    if HWp != HW:
        # One extra HBM pass over x when H*W is not a 128-multiple; free otherwise.
        x_flat = jnp.pad(x_flat, ((0, 0), (0, 0), (0, HWp - HW)))
    w_flat = conv_w.reshape(-1).astype(jnp.float32)              # (98,)
    b_flat = conv_b.reshape(-1).astype(jnp.float32)              # (1,)

    # Per-tap validity masks (output coordinates).  Combined (49, HWp) mask
    # saves 49 VPU multiplies + a load per tap; fall back to 7+7 row/col masks
    # when the combined mask would eat too much resident VMEM (large H*W).
    hh = np.arange(HWp) // W
    ww = np.arange(HWp) % W
    valid = np.arange(HWp) < HW
    combined = 49 * HWp * 4 <= 2 * 1024 * 1024
    if combined:
        rows = []
        for dh in range(-PAD, PAD + 1):
            hok = (hh + dh >= 0) & (hh + dh < H)
            for dw in range(-PAD, PAD + 1):
                wok = (ww + dw >= 0) & (ww + dw < W)
                rows.append((valid & hok & wok).astype(np.float32))
        mask_args = (jnp.asarray(np.stack(rows)),)               # (49, HWp)
        mask_specs = [pl.BlockSpec((KS * KS, HWp), lambda i: (0, 0))]
    else:
        hmask = np.stack([(valid & (hh + dh >= 0) & (hh + dh < H)).astype(np.float32)
                          for dh in range(-PAD, PAD + 1)])       # (7, HWp)
        wmask = np.stack([((ww + dw >= 0) & (ww + dw < W)).astype(np.float32)
                          for dw in range(-PAD, PAD + 1)])       # (7, HWp)
        mask_args = (jnp.asarray(hmask), jnp.asarray(wmask))
        mask_specs = [pl.BlockSpec((KS, HWp), lambda i: (0, 0)),
                      pl.BlockSpec((KS, HWp), lambda i: (0, 0))]

    # VMEM budgets: conservative on v7x (64 MiB physical / 32 MiB scoped).
    try:
        vmem_cap = int(pltpu.get_tpu_info().vmem_capacity_bytes)
    except Exception:
        vmem_cap = 64 * 1024 * 1024
    if vmem_cap >= 96 * 1024 * 1024:           # v5e / v6e (128 MiB VMEM)
        block_budget, vmem_cap_limit = 40 << 20, 64 << 20
    else:                                      # v7x
        block_budget, vmem_cap_limit = 18 << 20, 32 << 20

    per_image = C * HWp * 4
    if batch_tile is None:
        # Fill all 8 sublanes of the conv/threshold phase; go higher (<=32) for
        # tiny images so each step moves ~2 MiB of x; respect double-buffered
        # in+out VMEM footprint (4 * block bytes resident).
        bt = min(32, max(8, pl.cdiv(2 * 1024 * 1024, per_image)))
        bt = min(bt, max(1, block_budget // (4 * per_image)), B)
        # Keep >=4 grid steps (>=2 per TensorCore on dual-TC chips) when the
        # batch allows it without dropping below a full 8-image sublane stack.
        if B >= 32:
            bt = min(bt, B // 4)
        elif B >= 16:
            bt = min(bt, B // 2)
        bt = max(1, bt)
        while B % bt:
            bt -= 1
        batch_tile = bt
    BT = batch_tile
    assert B % BT == 0, "batch_tile must divide B"

    mask_bytes = sum(int(np.prod(m.shape)) * 4 for m in mask_args)
    needed = 4 * BT * per_image + 2 * mask_bytes + (2 << 20)
    vmem_limit = int(min(vmem_cap_limit, max(16 << 20, needed)))

    kernel = functools.partial(_spatial_attn_kernel, BT=BT, C=C, W=W, HWp=HWp,
                               combined=combined)

    out_flat = pl.pallas_call(
        kernel,
        out_shape=jax.ShapeDtypeStruct((B, C, HWp), jnp.float32),
        grid_spec=pltpu.PrefetchScalarGridSpec(
            num_scalar_prefetch=0,
            grid=(B // BT,),
            in_specs=[
                pl.BlockSpec(memory_space=pltpu.MemorySpace.SMEM),   # conv weights
                pl.BlockSpec(memory_space=pltpu.MemorySpace.SMEM),   # conv bias
                *mask_specs,                                          # tap masks
                pl.BlockSpec((BT, C, HWp), lambda i: (i, 0, 0)),      # x block
            ],
            out_specs=pl.BlockSpec((BT, C, HWp), lambda i: (i, 0, 0)),
        ),
        compiler_params=pltpu.CompilerParams(
            dimension_semantics=("parallel",),
            vmem_limit_bytes=vmem_limit,
        ),
    )(w_flat, b_flat, *mask_args, x_flat)

    out = out_flat[:, :, :HW] if HWp != HW else out_flat
    return out.reshape(B, C, H, W)


def spatial_attention_ref(x, conv_w, conv_b):
    """Pure-JAX reference matching the PyTorch forward."""
    avg = jnp.mean(x, axis=1, keepdims=True)
    mx = jnp.max(x, axis=1, keepdims=True)
    cat = jnp.concatenate([avg, mx], axis=1)                     # (B,2,H,W)
    conv = lax.conv_general_dilated(
        cat, conv_w, window_strides=(1, 1),
        padding=((PAD, PAD), (PAD, PAD)),
        dimension_numbers=("NCHW", "OIHW", "NCHW"))
    conv = conv + conv_b.reshape(1, -1, 1, 1)
    s = jax.nn.sigmoid(conv)                                     # (B,1,H,W)
    z = jnp.zeros(x.shape, dtype=jnp.float32)
    return jnp.where(s >= BETA, s, z)                            # (B,C,H,W)


if __name__ == "__main__":
    key = jax.random.PRNGKey(0)
    kx, kw, kb = jax.random.split(key, 3)

    B, C, H, W = 2, 4, 16, 16
    x = jax.random.normal(kx, (B, C, H, W), dtype=jnp.float32)
    # Deterministic synthetic conv parameters (shapes from nn.Conv2d(2,1,7)).
    conv_w = 0.1 * jax.random.normal(kw, (1, 2, KS, KS), dtype=jnp.float32)
    conv_b = 0.1 * jax.random.normal(kb, (1,), dtype=jnp.float32)

    out = spatial_attention_pallas(x, conv_w, conv_b)
    out = jax.block_until_ready(out)

    ref = spatial_attention_ref(x, conv_w, conv_b)
    np.testing.assert_allclose(np.asarray(out), np.asarray(ref),
                               rtol=1e-5, atol=1e-5)
    print("KERNEL_OK")
</pallas_src>

<mosaic_0001>
module attributes {stable_mosaic.version = 11 : i64} {
  func.func @_spatial_attn_kernel(%arg0: i32, %arg1: memref<98xf32, #tpu.memory_space<smem>>, %arg2: memref<1xf32, #tpu.memory_space<smem>>, %arg3: memref<49x256xf32, #tpu.memory_space<vmem>>, %arg4: memref<2x4x256xf32, #tpu.memory_space<vmem>>, %arg5: memref<2x4x256xf32, #tpu.memory_space<vmem>>) attributes {dimension_semantics = [#tpu.dimension_semantics<parallel>], iteration_bounds = array<i64: 1>, scalar_prefetch = 0 : i64, scratch_operands = 0 : i64, tpu.core_type = #tpu.core_type<tc>, window_params = [{transform_indices = @transform_0, window_bounds = array<i64: 98>}, {transform_indices = @transform_1, window_bounds = array<i64: 1>}, {pipeline_mode = #tpu.pipeline_mode<synchronous>, transform_indices = @transform_2, window_bounds = array<i64: 49, 256>}, {transform_indices = @transform_3, window_bounds = array<i64: 2, 4, 256>}, {transform_indices = @transform_4, window_bounds = array<i64: 2, 4, 256>}]} {
    %c0 = arith.constant 0 : index
    %c0_0 = arith.constant 0 : index
    %c0_1 = arith.constant 0 : index
    %0 = vector.load %arg4[%c0, %c0_0, %c0_1] : memref<2x4x256xf32, #tpu.memory_space<vmem>>, vector<1x4x256xf32>
    %1 = vector.shape_cast %0 : vector<1x4x256xf32> to vector<4x256xf32>
    %cst = arith.constant dense<0.000000e+00> : vector<256xf32>
    %2 = vector.multi_reduction <add>, %1, %cst [0] : vector<4x256xf32> to vector<256xf32>
    %3 = vector.shape_cast %2 : vector<256xf32> to vector<1x256xf32>
    %cst_2 = arith.constant dense<0xFF800000> : vector<256xf32>
    %4 = vector.multi_reduction <maximumf>, %1, %cst_2 [0] : vector<4x256xf32> to vector<256xf32>
    %5 = vector.shape_cast %4 : vector<256xf32> to vector<1x256xf32>
    %c1 = arith.constant 1 : index
    %c0_3 = arith.constant 0 : index
    %c0_4 = arith.constant 0 : index
    %6 = vector.load %arg4[%c1, %c0_3, %c0_4] : memref<2x4x256xf32, #tpu.memory_space<vmem>>, vector<1x4x256xf32>
    %7 = vector.shape_cast %6 : vector<1x4x256xf32> to vector<4x256xf32>
    %cst_5 = arith.constant dense<0.000000e+00> : vector<256xf32>
    %8 = vector.multi_reduction <add>, %7, %cst_5 [0] : vector<4x256xf32> to vector<256xf32>
    %9 = vector.shape_cast %8 : vector<256xf32> to vector<1x256xf32>
    %cst_6 = arith.constant dense<0xFF800000> : vector<256xf32>
    %10 = vector.multi_reduction <maximumf>, %7, %cst_6 [0] : vector<4x256xf32> to vector<256xf32>
    %11 = vector.shape_cast %10 : vector<256xf32> to vector<1x256xf32>
    %12 = tpu.concatenate %3, %9 in 0 : vector<1x256xf32>, vector<1x256xf32> -> vector<2x256xf32>
    %cst_7 = arith.constant 2.500000e-01 : f32
    %13 = vector.broadcast %cst_7 : f32 to vector<2x256xf32>
    %14 = arith.mulf %12, %13 : vector<2x256xf32>
    %15 = tpu.concatenate %5, %11 in 0 : vector<1x256xf32>, vector<1x256xf32> -> vector<2x256xf32>
    %c0_8 = arith.constant 0 : index
    %16 = memref.load %arg2[%c0_8] : memref<1xf32, #tpu.memory_space<smem>>
    %17 = vector.broadcast %16 : f32 to vector<2x256xf32>
    %cst_9 = arith.constant 0.000000e+00 : f32
    %18 = vector.broadcast %cst_9 : f32 to vector<2x256xf32>
    %c51_i32 = arith.constant 51 : i32
    %19 = tpu.dynamic_rotate %14 by %c51_i32 dim 1 : vector<2x256xf32>, i32 -> vector<2x256xf32>
    %c51_i32_10 = arith.constant 51 : i32
    %20 = tpu.dynamic_rotate %15 by %c51_i32_10 dim 1 : vector<2x256xf32>, i32 -> vector<2x256xf32>
    %c0_11 = arith.constant 0 : index
    %c0_12 = arith.constant 0 : index
    %21 = vector.load %arg3[%c0_11, %c0_12] : memref<49x256xf32, #tpu.memory_space<vmem>>, vector<1x256xf32>
    %c0_13 = arith.constant 0 : index
    %22 = memref.load %arg1[%c0_13] : memref<98xf32, #tpu.memory_space<smem>>
    %23 = vector.broadcast %22 : f32 to vector<2x256xf32>
    %24 = arith.mulf %23, %19 : vector<2x256xf32>
    %c49 = arith.constant 49 : index
    %25 = memref.load %arg1[%c49] : memref<98xf32, #tpu.memory_space<smem>>
    %26 = vector.broadcast %25 : f32 to vector<2x256xf32>
    %27 = arith.mulf %26, %20 : vector<2x256xf32>
    %28 = arith.addf %24, %27 : vector<2x256xf32>
    %29 = vector.broadcast %21 : vector<1x256xf32> to vector<2x256xf32>
    %30 = arith.mulf %29, %28 : vector<2x256xf32>
    %31 = arith.addf %17, %30 : vector<2x256xf32>
    %c50_i32 = arith.constant 50 : i32
    %32 = tpu.dynamic_rotate %14 by %c50_i32 dim 1 : vector<2x256xf32>, i32 -> vector<2x256xf32>
    %c50_i32_14 = arith.constant 50 : i32
    %33 = tpu.dynamic_rotate %15 by %c50_i32_14 dim 1 : vector<2x256xf32>, i32 -> vector<2x256xf32>
    %c1_15 = arith.constant 1 : index
    %c0_16 = arith.constant 0 : index
    %34 = vector.load %arg3[%c1_15, %c0_16] : memref<49x256xf32, #tpu.memory_space<vmem>>, vector<1x256xf32>
    %c1_17 = arith.constant 1 : index
    %35 = memref.load %arg1[%c1_17] : memref<98xf32, #tpu.memory_space<smem>>
    %36 = vector.broadcast %35 : f32 to vector<2x256xf32>
    %37 = arith.mulf %36, %32 : vector<2x256xf32>
    %c50 = arith.constant 50 : index
    %38 = memref.load %arg1[%c50] : memref<98xf32, #tpu.memory_space<smem>>
    %39 = vector.broadcast %38 : f32 to vector<2x256xf32>
    %40 = arith.mulf %39, %33 : vector<2x256xf32>
    %41 = arith.addf %37, %40 : vector<2x256xf32>
    %42 = vector.broadcast %34 : vector<1x256xf32> to vector<2x256xf32>
    %43 = arith.mulf %42, %41 : vector<2x256xf32>
    %44 = arith.addf %18, %43 : vector<2x256xf32>
    %c49_i32 = arith.constant 49 : i32
    %45 = tpu.dynamic_rotate %14 by %c49_i32 dim 1 : vector<2x256xf32>, i32 -> vector<2x256xf32>
    %c49_i32_18 = arith.constant 49 : i32
    %46 = tpu.dynamic_rotate %15 by %c49_i32_18 dim 1 : vector<2x256xf32>, i32 -> vector<2x256xf32>
    %c2 = arith.constant 2 : index
    %c0_19 = arith.constant 0 : index
    %47 = vector.load %arg3[%c2, %c0_19] : memref<49x256xf32, #tpu.memory_space<vmem>>, vector<1x256xf32>
    %c2_20 = arith.constant 2 : index
    %48 = memref.load %arg1[%c2_20] : memref<98xf32, #tpu.memory_space<smem>>
    %49 = vector.broadcast %48 : f32 to vector<2x256xf32>
    %50 = arith.mulf %49, %45 : vector<2x256xf32>
    %c51 = arith.constant 51 : index
    %51 = memref.load %arg1[%c51] : memref<98xf32, #tpu.memory_space<smem>>
    %52 = vector.broadcast %51 : f32 to vector<2x256xf32>
    %53 = arith.mulf %52, %46 : vector<2x256xf32>
    %54 = arith.addf %50, %53 : vector<2x256xf32>
    %55 = vector.broadcast %47 : vector<1x256xf32> to vector<2x256xf32>
    %56 = arith.mulf %55, %54 : vector<2x256xf32>
    %57 = arith.addf %31, %56 : vector<2x256xf32>
    %c48_i32 = arith.constant 48 : i32
    %58 = tpu.dynamic_rotate %14 by %c48_i32 dim 1 : vector<2x256xf32>, i32 -> vector<2x256xf32>
    %c48_i32_21 = arith.constant 48 : i32
    %59 = tpu.dynamic_rotate %15 by %c48_i32_21 dim 1 : vector<2x256xf32>, i32 -> vector<2x256xf32>
    %c3 = arith.constant 3 : index
    %c0_22 = arith.constant 0 : index
    %60 = vector.load %arg3[%c3, %c0_22] : memref<49x256xf32, #tpu.memory_space<vmem>>, vector<1x256xf32>
    %c3_23 = arith.constant 3 : index
    %61 = memref.load %arg1[%c3_23] : memref<98xf32, #tpu.memory_space<smem>>
    %62 = vector.broadcast %61 : f32 to vector<2x256xf32>
    %63 = arith.mulf %62, %58 : vector<2x256xf32>
    %c52 = arith.constant 52 : index
    %64 = memref.load %arg1[%c52] : memref<98xf32, #tpu.memory_space<smem>>
    %65 = vector.broadcast %64 : f32 to vector<2x256xf32>
    %66 = arith.mulf %65, %59 : vector<2x256xf32>
    %67 = arith.addf %63, %66 : vector<2x256xf32>
    %68 = vector.broadcast %60 : vector<1x256xf32> to vector<2x256xf32>
    %69 = arith.mulf %68, %67 : vector<2x256xf32>
    %70 = arith.addf %44, %69 : vector<2x256xf32>
    %c47_i32 = arith.constant 47 : i32
    %71 = tpu.dynamic_rotate %14 by %c47_i32 dim 1 : vector<2x256xf32>, i32 -> vector<2x256xf32>
    %c47_i32_24 = arith.constant 47 : i32
    %72 = tpu.dynamic_rotate %15 by %c47_i32_24 dim 1 : vector<2x256xf32>, i32 -> vector<2x256xf32>
    %c4 = arith.constant 4 : index
    %c0_25 = arith.constant 0 : index
    %73 = vector.load %arg3[%c4, %c0_25] : memref<49x256xf32, #tpu.memory_space<vmem>>, vector<1x256xf32>
    %c4_26 = arith.constant 4 : index
    %74 = memref.load %arg1[%c4_26] : memref<98xf32, #tpu.memory_space<smem>>
    %75 = vector.broadcast %74 : f32 to vector<2x256xf32>
    %76 = arith.mulf %75, %71 : vector<2x256xf32>
    %c53 = arith.constant 53 : index
    %77 = memref.load %arg1[%c53] : memref<98xf32, #tpu.memory_space<smem>>
    %78 = vector.broadcast %77 : f32 to vector<2x256xf32>
    %79 = arith.mulf %78, %72 : vector<2x256xf32>
    %80 = arith.addf %76, %79 : vector<2x256xf32>
    %81 = vector.broadcast %73 : vector<1x256xf32> to vector<2x256xf32>
    %82 = arith.mulf %81, %80 : vector<2x256xf32>
    %83 = arith.addf %57, %82 : vector<2x256xf32>
    %c46_i32 = arith.constant 46 : i32
    %84 = tpu.dynamic_rotate %14 by %c46_i32 dim 1 : vector<2x256xf32>, i32 -> vector<2x256xf32>
    %c46_i32_27 = arith.constant 46 : i32
    %85 = tpu.dynamic_rotate %15 by %c46_i32_27 dim 1 : vector<2x256xf32>, i32 -> vector<2x256xf32>
    %c5 = arith.constant 5 : index
    %c0_28 = arith.constant 0 : index
    %86 = vector.load %arg3[%c5, %c0_28] : memref<49x256xf32, #tpu.memory_space<vmem>>, vector<1x256xf32>
    %c5_29 = arith.constant 5 : index
    %87 = memref.load %arg1[%c5_29] : memref<98xf32, #tpu.memory_space<smem>>
    %88 = vector.broadcast %87 : f32 to vector<2x256xf32>
    %89 = arith.mulf %88, %84 : vector<2x256xf32>
    %c54 = arith.constant 54 : index
    %90 = memref.load %arg1[%c54] : memref<98xf32, #tpu.memory_space<smem>>
    %91 = vector.broadcast %90 : f32 to vector<2x256xf32>
    %92 = arith.mulf %91, %85 : vector<2x256xf32>
    %93 = arith.addf %89, %92 : vector<2x256xf32>
    %94 = vector.broadcast %86 : vector<1x256xf32> to vector<2x256xf32>
    %95 = arith.mulf %94, %93 : vector<2x256xf32>
    %96 = arith.addf %70, %95 : vector<2x256xf32>
    %c45_i32 = arith.constant 45 : i32
    %97 = tpu.dynamic_rotate %14 by %c45_i32 dim 1 : vector<2x256xf32>, i32 -> vector<2x256xf32>
    %c45_i32_30 = arith.constant 45 : i32
    %98 = tpu.dynamic_rotate %15 by %c45_i32_30 dim 1 : vector<2x256xf32>, i32 -> vector<2x256xf32>
    %c6 = arith.constant 6 : index
    %c0_31 = arith.constant 0 : index
    %99 = vector.load %arg3[%c6, %c0_31] : memref<49x256xf32, #tpu.memory_space<vmem>>, vector<1x256xf32>
    %c6_32 = arith.constant 6 : index
    %100 = memref.load %arg1[%c6_32] : memref<98xf32, #tpu.memory_space<smem>>
    %101 = vector.broadcast %100 : f32 to vector<2x256xf32>
    %102 = arith.mulf %101, %97 : vector<2x256xf32>
    %c55 = arith.constant 55 : index
    %103 = memref.load %arg1[%c55] : memref<98xf32, #tpu.memory_space<smem>>
    %104 = vector.broadcast %103 : f32 to vector<2x256xf32>
    %105 = arith.mulf %104, %98 : vector<2x256xf32>
    %106 = arith.addf %102, %105 : vector<2x256xf32>
    %107 = vector.broadcast %99 : vector<1x256xf32> to vector<2x256xf32>
    %108 = arith.mulf %107, %106 : vector<2x256xf32>
    %109 = arith.addf %83, %108 : vector<2x256xf32>
    %c35_i32 = arith.constant 35 : i32
    %110 = tpu.dynamic_rotate %14 by %c35_i32 dim 1 : vector<2x256xf32>, i32 -> vector<2x256xf32>
    %c35_i32_33 = arith.constant 35 : i32
    %111 = tpu.dynamic_rotate %15 by %c35_i32_33 dim 1 : vector<2x256xf32>, i32 -> vector<2x256xf32>
    %c7 = arith.constant 7 : index
    %c0_34 = arith.constant 0 : index
    %112 = vector.load %arg3[%c7, %c0_34] : memref<49x256xf32, #tpu.memory_space<vmem>>, vector<1x256xf32>
    %c7_35 = arith.constant 7 : index
    %113 = memref.load %arg1[%c7_35] : memref<98xf32, #tpu.memory_space<smem>>
    %114 = vector.broadcast %113 : f32 to vector<2x256xf32>
    %115 = arith.mulf %114, %110 : vector<2x256xf32>
    %c56 = arith.constant 56 : index
    %116 = memref.load %arg1[%c56] : memref<98xf32, #tpu.memory_space<smem>>
    %117 = vector.broadcast %116 : f32 to vector<2x256xf32>
    %118 = arith.mulf %117, %111 : vector<2x256xf32>
    %119 = arith.addf %115, %118 : vector<2x256xf32>
    %120 = vector.broadcast %112 : vector<1x256xf32> to vector<2x256xf32>
    %121 = arith.mulf %120, %119 : vector<2x256xf32>
    %122 = arith.addf %96, %121 : vector<2x256xf32>
    %c34_i32 = arith.constant 34 : i32
    %123 = tpu.dynamic_rotate %14 by %c34_i32 dim 1 : vector<2x256xf32>, i32 -> vector<2x256xf32>
    %c34_i32_36 = arith.constant 34 : i32
    %124 = tpu.dynamic_rotate %15 by %c34_i32_36 dim 1 : vector<2x256xf32>, i32 -> vector<2x256xf32>
    %c8 = arith.constant 8 : index
    %c0_37 = arith.constant 0 : index
    %125 = vector.load %arg3[%c8, %c0_37] : memref<49x256xf32, #tpu.memory_space<vmem>>, vector<1x256xf32>
    %c8_38 = arith.constant 8 : index
    %126 = memref.load %arg1[%c8_38] : memref<98xf32, #tpu.memory_space<smem>>
    %127 = vector.broadcast %126 : f32 to vector<2x256xf32>
    %128 = arith.mulf %127, %123 : vector<2x256xf32>
    %c57 = arith.constant 57 : index
    %129 = memref.load %arg1[%c57] : memref<98xf32, #tpu.memory_space<smem>>
    %130 = vector.broadcast %129 : f32 to vector<2x256xf32>
    %131 = arith.mulf %130, %124 : vector<2x256xf32>
    %132 = arith.addf %128, %131 : vector<2x256xf32>
    %133 = vector.broadcast %125 : vector<1x256xf32> to vector<2x256xf32>
    %134 = arith.mulf %133, %132 : vector<2x256xf32>
    %135 = arith.addf %109, %134 : vector<2x256xf32>
    %c33_i32 = arith.constant 33 : i32
    %136 = tpu.dynamic_rotate %14 by %c33_i32 dim 1 : vector<2x256xf32>, i32 -> vector<2x256xf32>
    %c33_i32_39 = arith.constant 33 : i32
    %137 = tpu.dynamic_rotate %15 by %c33_i32_39 dim 1 : vector<2x256xf32>, i32 -> vector<2x256xf32>
    %c9 = arith.constant 9 : index
    %c0_40 = arith.constant 0 : index
    %138 = vector.load %arg3[%c9, %c0_40] : memref<49x256xf32, #tpu.memory_space<vmem>>, vector<1x256xf32>
    %c9_41 = arith.constant 9 : index
    %139 = memref.load %arg1[%c9_41] : memref<98xf32, #tpu.memory_space<smem>>
    %140 = vector.broadcast %139 : f32 to vector<2x256xf32>
    %141 = arith.mulf %140, %136 : vector<2x256xf32>
    %c58 = arith.constant 58 : index
    %142 = memref.load %arg1[%c58] : memref<98xf32, #tpu.memory_space<smem>>
    %143 = vector.broadcast %142 : f32 to vector<2x256xf32>
    %144 = arith.mulf %143, %137 : vector<2x256xf32>
    %145 = arith.addf %141, %144 : vector<2x256xf32>
    %146 = vector.broadcast %138 : vector<1x256xf32> to vector<2x256xf32>
    %147 = arith.mulf %146, %145 : vector<2x256xf32>
    %148 = arith.addf %122, %147 : vector<2x256xf32>
    %c32_i32 = arith.constant 32 : i32
    %149 = tpu.dynamic_rotate %14 by %c32_i32 dim 1 : vector<2x256xf32>, i32 -> vector<2x256xf32>
    %c32_i32_42 = arith.constant 32 : i32
    %150 = tpu.dynamic_rotate %15 by %c32_i32_42 dim 1 : vector<2x256xf32>, i32 -> vector<2x256xf32>
    %c10 = arith.constant 10 : index
    %c0_43 = arith.constant 0 : index
    %151 = vector.load %arg3[%c10, %c0_43] : memref<49x256xf32, #tpu.memory_space<vmem>>, vector<1x256xf32>
    %c10_44 = arith.constant 10 : index
    %152 = memref.load %arg1[%c10_44] : memref<98xf32, #tpu.memory_space<smem>>
    %153 = vector.broadcast %152 : f32 to vector<2x256xf32>
    %154 = arith.mulf %153, %149 : vector<2x256xf32>
    %c59 = arith.constant 59 : index
    %155 = memref.load %arg1[%c59] : memref<98xf32, #tpu.memory_space<smem>>
    %156 = vector.broadcast %155 : f32 to vector<2x256xf32>
    %157 = arith.mulf %156, %150 : vector<2x256xf32>
    %158 = arith.addf %154, %157 : vector<2x256xf32>
    %159 = vector.broadcast %151 : vector<1x256xf32> to vector<2x256xf32>
    %160 = arith.mulf %159, %158 : vector<2x256xf32>
    %161 = arith.addf %135, %160 : vector<2x256xf32>
    %c31_i32 = arith.constant 31 : i32
    %162 = tpu.dynamic_rotate %14 by %c31_i32 dim 1 : vector<2x256xf32>, i32 -> vector<2x256xf32>
    %c31_i32_45 = arith.constant 31 : i32
    %163 = tpu.dynamic_rotate %15 by %c31_i32_45 dim 1 : vector<2x256xf32>, i32 -> vector<2x256xf32>
    %c11 = arith.constant 11 : index
    %c0_46 = arith.constant 0 : index
    %164 = vector.load %arg3[%c11, %c0_46] : memref<49x256xf32, #tpu.memory_space<vmem>>, vector<1x256xf32>
    %c11_47 = arith.constant 11 : index
    %165 = memref.load %arg1[%c11_47] : memref<98xf32, #tpu.memory_space<smem>>
    %166 = vector.broadcast %165 : f32 to vector<2x256xf32>
    %167 = arith.mulf %166, %162 : vector<2x256xf32>
    %c60 = arith.constant 60 : index
    %168 = memref.load %arg1[%c60] : memref<98xf32, #tpu.memory_space<smem>>
    %169 = vector.broadcast %168 : f32 to vector<2x256xf32>
    %170 = arith.mulf %169, %163 : vector<2x256xf32>
    %171 = arith.addf %167, %170 : vector<2x256xf32>
    %172 = vector.broadcast %164 : vector<1x256xf32> to vector<2x256xf32>
    %173 = arith.mulf %172, %171 : vector<2x256xf32>
    %174 = arith.addf %148, %173 : vector<2x256xf32>
    %c30_i32 = arith.constant 30 : i32
    %175 = tpu.dynamic_rotate %14 by %c30_i32 dim 1 : vector<2x256xf32>, i32 -> vector<2x256xf32>
    %c30_i32_48 = arith.constant 30 : i32
    %176 = tpu.dynamic_rotate %15 by %c30_i32_48 dim 1 : vector<2x256xf32>, i32 -> vector<2x256xf32>
    %c12 = arith.constant 12 : index
    %c0_49 = arith.constant 0 : index
    %177 = vector.load %arg3[%c12, %c0_49] : memref<49x256xf32, #tpu.memory_space<vmem>>, vector<1x256xf32>
    %c12_50 = arith.constant 12 : index
    %178 = memref.load %arg1[%c12_50] : memref<98xf32, #tpu.memory_space<smem>>
    %179 = vector.broadcast %178 : f32 to vector<2x256xf32>
    %180 = arith.mulf %179, %175 : vector<2x256xf32>
    %c61 = arith.constant 61 : index
    %181 = memref.load %arg1[%c61] : memref<98xf32, #tpu.memory_space<smem>>
    %182 = vector.broadcast %181 : f32 to vector<2x256xf32>
    %183 = arith.mulf %182, %176 : vector<2x256xf32>
    %184 = arith.addf %180, %183 : vector<2x256xf32>
    %185 = vector.broadcast %177 : vector<1x256xf32> to vector<2x256xf32>
    %186 = arith.mulf %185, %184 : vector<2x256xf32>
    %187 = arith.addf %161, %186 : vector<2x256xf32>
    %c29_i32 = arith.constant 29 : i32
    %188 = tpu.dynamic_rotate %14 by %c29_i32 dim 1 : vector<2x256xf32>, i32 -> vector<2x256xf32>
    %c29_i32_51 = arith.constant 29 : i32
    %189 = tpu.dynamic_rotate %15 by %c29_i32_51 dim 1 : vector<2x256xf32>, i32 -> vector<2x256xf32>
    %c13 = arith.constant 13 : index
    %c0_52 = arith.constant 0 : index
    %190 = vector.load %arg3[%c13, %c0_52] : memref<49x256xf32, #tpu.memory_space<vmem>>, vector<1x256xf32>
    %c13_53 = arith.constant 13 : index
    %191 = memref.load %arg1[%c13_53] : memref<98xf32, #tpu.memory_space<smem>>
    %192 = vector.broadcast %191 : f32 to vector<2x256xf32>
    %193 = arith.mulf %192, %188 : vector<2x256xf32>
    %c62 = arith.constant 62 : index
    %194 = memref.load %arg1[%c62] : memref<98xf32, #tpu.memory_space<smem>>
    %195 = vector.broadcast %194 : f32 to vector<2x256xf32>
    %196 = arith.mulf %195, %189 : vector<2x256xf32>
    %197 = arith.addf %193, %196 : vector<2x256xf32>
    %198 = vector.broadcast %190 : vector<1x256xf32> to vector<2x256xf32>
    %199 = arith.mulf %198, %197 : vector<2x256xf32>
    %200 = arith.addf %174, %199 : vector<2x256xf32>
    %c19_i32 = arith.constant 19 : i32
    %201 = tpu.dynamic_rotate %14 by %c19_i32 dim 1 : vector<2x256xf32>, i32 -> vector<2x256xf32>
    %c19_i32_54 = arith.constant 19 : i32
    %202 = tpu.dynamic_rotate %15 by %c19_i32_54 dim 1 : vector<2x256xf32>, i32 -> vector<2x256xf32>
    %c14 = arith.constant 14 : index
    %c0_55 = arith.constant 0 : index
    %203 = vector.load %arg3[%c14, %c0_55] : memref<49x256xf32, #tpu.memory_space<vmem>>, vector<1x256xf32>
    %c14_56 = arith.constant 14 : index
    %204 = memref.load %arg1[%c14_56] : memref<98xf32, #tpu.memory_space<smem>>
    %205 = vector.broadcast %204 : f32 to vector<2x256xf32>
    %206 = arith.mulf %205, %201 : vector<2x256xf32>
    %c63 = arith.constant 63 : index
    %207 = memref.load %arg1[%c63] : memref<98xf32, #tpu.memory_space<smem>>
    %208 = vector.broadcast %207 : f32 to vector<2x256xf32>
    %209 = arith.mulf %208, %202 : vector<2x256xf32>
    %210 = arith.addf %206, %209 : vector<2x256xf32>
    %211 = vector.broadcast %203 : vector<1x256xf32> to vector<2x256xf32>
    %212 = arith.mulf %211, %210 : vector<2x256xf32>
    %213 = arith.addf %187, %212 : vector<2x256xf32>
    %c18_i32 = arith.constant 18 : i32
    %214 = tpu.dynamic_rotate %14 by %c18_i32 dim 1 : vector<2x256xf32>, i32 -> vector<2x256xf32>
    %c18_i32_57 = arith.constant 18 : i32
    %215 = tpu.dynamic_rotate %15 by %c18_i32_57 dim 1 : vector<2x256xf32>, i32 -> vector<2x256xf32>
    %c15 = arith.constant 15 : index
    %c0_58 = arith.constant 0 : index
    %216 = vector.load %arg3[%c15, %c0_58] : memref<49x256xf32, #tpu.memory_space<vmem>>, vector<1x256xf32>
    %c15_59 = arith.constant 15 : index
    %217 = memref.load %arg1[%c15_59] : memref<98xf32, #tpu.memory_space<smem>>
    %218 = vector.broadcast %217 : f32 to vector<2x256xf32>
    %219 = arith.mulf %218, %214 : vector<2x256xf32>
    %c64 = arith.constant 64 : index
    %220 = memref.load %arg1[%c64] : memref<98xf32, #tpu.memory_space<smem>>
    %221 = vector.broadcast %220 : f32 to vector<2x256xf32>
    %222 = arith.mulf %221, %215 : vector<2x256xf32>
    %223 = arith.addf %219, %222 : vector<2x256xf32>
    %224 = vector.broadcast %216 : vector<1x256xf32> to vector<2x256xf32>
    %225 = arith.mulf %224, %223 : vector<2x256xf32>
    %226 = arith.addf %200, %225 : vector<2x256xf32>
    %c17_i32 = arith.constant 17 : i32
    %227 = tpu.dynamic_rotate %14 by %c17_i32 dim 1 : vector<2x256xf32>, i32 -> vector<2x256xf32>
    %c17_i32_60 = arith.constant 17 : i32
    %228 = tpu.dynamic_rotate %15 by %c17_i32_60 dim 1 : vector<2x256xf32>, i32 -> vector<2x256xf32>
    %c16 = arith.constant 16 : index
    %c0_61 = arith.constant 0 : index
    %229 = vector.load %arg3[%c16, %c0_61] : memref<49x256xf32, #tpu.memory_space<vmem>>, vector<1x256xf32>
    %c16_62 = arith.constant 16 : index
    %230 = memref.load %arg1[%c16_62] : memref<98xf32, #tpu.memory_space<smem>>
    %231 = vector.broadcast %230 : f32 to vector<2x256xf32>
    %232 = arith.mulf %231, %227 : vector<2x256xf32>
    %c65 = arith.constant 65 : index
    %233 = memref.load %arg1[%c65] : memref<98xf32, #tpu.memory_space<smem>>
    %234 = vector.broadcast %233 : f32 to vector<2x256xf32>
    %235 = arith.mulf %234, %228 : vector<2x256xf32>
    %236 = arith.addf %232, %235 : vector<2x256xf32>
    %237 = vector.broadcast %229 : vector<1x256xf32> to vector<2x256xf32>
    %238 = arith.mulf %237, %236 : vector<2x256xf32>
    %239 = arith.addf %213, %238 : vector<2x256xf32>
    %c16_i32 = arith.constant 16 : i32
    %240 = tpu.dynamic_rotate %14 by %c16_i32 dim 1 : vector<2x256xf32>, i32 -> vector<2x256xf32>
    %c16_i32_63 = arith.constant 16 : i32
    %241 = tpu.dynamic_rotate %15 by %c16_i32_63 dim 1 : vector<2x256xf32>, i32 -> vector<2x256xf32>
    %c17 = arith.constant 17 : index
    %c0_64 = arith.constant 0 : index
    %242 = vector.load %arg3[%c17, %c0_64] : memref<49x256xf32, #tpu.memory_space<vmem>>, vector<1x256xf32>
    %c17_65 = arith.constant 17 : index
    %243 = memref.load %arg1[%c17_65] : memref<98xf32, #tpu.memory_space<smem>>
    %244 = vector.broadcast %243 : f32 to vector<2x256xf32>
    %245 = arith.mulf %244, %240 : vector<2x256xf32>
    %c66 = arith.constant 66 : index
    %246 = memref.load %arg1[%c66] : memref<98xf32, #tpu.memory_space<smem>>
    %247 = vector.broadcast %246 : f32 to vector<2x256xf32>
    %248 = arith.mulf %247, %241 : vector<2x256xf32>
    %249 = arith.addf %245, %248 : vector<2x256xf32>
    %250 = vector.broadcast %242 : vector<1x256xf32> to vector<2x256xf32>
    %251 = arith.mulf %250, %249 : vector<2x256xf32>
    %252 = arith.addf %226, %251 : vector<2x256xf32>
    %c15_i32 = arith.constant 15 : i32
    %253 = tpu.dynamic_rotate %14 by %c15_i32 dim 1 : vector<2x256xf32>, i32 -> vector<2x256xf32>
    %c15_i32_66 = arith.constant 15 : i32
    %254 = tpu.dynamic_rotate %15 by %c15_i32_66 dim 1 : vector<2x256xf32>, i32 -> vector<2x256xf32>
    %c18 = arith.constant 18 : index
    %c0_67 = arith.constant 0 : index
    %255 = vector.load %arg3[%c18, %c0_67] : memref<49x256xf32, #tpu.memory_space<vmem>>, vector<1x256xf32>
    %c18_68 = arith.constant 18 : index
    %256 = memref.load %arg1[%c18_68] : memref<98xf32, #tpu.memory_space<smem>>
    %257 = vector.broadcast %256 : f32 to vector<2x256xf32>
    %258 = arith.mulf %257, %253 : vector<2x256xf32>
    %c67 = arith.constant 67 : index
    %259 = memref.load %arg1[%c67] : memref<98xf32, #tpu.memory_space<smem>>
    %260 = vector.broadcast %259 : f32 to vector<2x256xf32>
    %261 = arith.mulf %260, %254 : vector<2x256xf32>
    %262 = arith.addf %258, %261 : vector<2x256xf32>
    %263 = vector.broadcast %255 : vector<1x256xf32> to vector<2x256xf32>
    %264 = arith.mulf %263, %262 : vector<2x256xf32>
    %265 = arith.addf %239, %264 : vector<2x256xf32>
    %c14_i32 = arith.constant 14 : i32
    %266 = tpu.dynamic_rotate %14 by %c14_i32 dim 1 : vector<2x256xf32>, i32 -> vector<2x256xf32>
    %c14_i32_69 = arith.constant 14 : i32
    %267 = tpu.dynamic_rotate %15 by %c14_i32_69 dim 1 : vector<2x256xf32>, i32 -> vector<2x256xf32>
    %c19 = arith.constant 19 : index
    %c0_70 = arith.constant 0 : index
    %268 = vector.load %arg3[%c19, %c0_70] : memref<49x256xf32, #tpu.memory_space<vmem>>, vector<1x256xf32>
    %c19_71 = arith.constant 19 : index
    %269 = memref.load %arg1[%c19_71] : memref<98xf32, #tpu.memory_space<smem>>
    %270 = vector.broadcast %269 : f32 to vector<2x256xf32>
    %271 = arith.mulf %270, %266 : vector<2x256xf32>
    %c68 = arith.constant 68 : index
    %272 = memref.load %arg1[%c68] : memref<98xf32, #tpu.memory_space<smem>>
    %273 = vector.broadcast %272 : f32 to vector<2x256xf32>
    %274 = arith.mulf %273, %267 : vector<2x256xf32>
    %275 = arith.addf %271, %274 : vector<2x256xf32>
    %276 = vector.broadcast %268 : vector<1x256xf32> to vector<2x256xf32>
    %277 = arith.mulf %276, %275 : vector<2x256xf32>
    %278 = arith.addf %252, %277 : vector<2x256xf32>
    %c13_i32 = arith.constant 13 : i32
    %279 = tpu.dynamic_rotate %14 by %c13_i32 dim 1 : vector<2x256xf32>, i32 -> vector<2x256xf32>
    %c13_i32_72 = arith.constant 13 : i32
    %280 = tpu.dynamic_rotate %15 by %c13_i32_72 dim 1 : vector<2x256xf32>, i32 -> vector<2x256xf32>
    %c20 = arith.constant 20 : index
    %c0_73 = arith.constant 0 : index
    %281 = vector.load %arg3[%c20, %c0_73] : memref<49x256xf32, #tpu.memory_space<vmem>>, vector<1x256xf32>
    %c20_74 = arith.constant 20 : index
    %282 = memref.load %arg1[%c20_74] : memref<98xf32, #tpu.memory_space<smem>>
    %283 = vector.broadcast %282 : f32 to vector<2x256xf32>
    %284 = arith.mulf %283, %279 : vector<2x256xf32>
    %c69 = arith.constant 69 : index
    %285 = memref.load %arg1[%c69] : memref<98xf32, #tpu.memory_space<smem>>
    %286 = vector.broadcast %285 : f32 to vector<2x256xf32>
    %287 = arith.mulf %286, %280 : vector<2x256xf32>
    %288 = arith.addf %284, %287 : vector<2x256xf32>
    %289 = vector.broadcast %281 : vector<1x256xf32> to vector<2x256xf32>
    %290 = arith.mulf %289, %288 : vector<2x256xf32>
    %291 = arith.addf %265, %290 : vector<2x256xf32>
    %c3_i32 = arith.constant 3 : i32
    %292 = tpu.dynamic_rotate %14 by %c3_i32 dim 1 : vector<2x256xf32>, i32 -> vector<2x256xf32>
    %c3_i32_75 = arith.constant 3 : i32
    %293 = tpu.dynamic_rotate %15 by %c3_i32_75 dim 1 : vector<2x256xf32>, i32 -> vector<2x256xf32>
    %c21 = arith.constant 21 : index
    %c0_76 = arith.constant 0 : index
    %294 = vector.load %arg3[%c21, %c0_76] : memref<49x256xf32, #tpu.memory_space<vmem>>, vector<1x256xf32>
    %c21_77 = arith.constant 21 : index
    %295 = memref.load %arg1[%c21_77] : memref<98xf32, #tpu.memory_space<smem>>
    %296 = vector.broadcast %295 : f32 to vector<2x256xf32>
    %297 = arith.mulf %296, %292 : vector<2x256xf32>
    %c70 = arith.constant 70 : index
    %298 = memref.load %arg1[%c70] : memref<98xf32, #tpu.memory_space<smem>>
    %299 = vector.broadcast %298 : f32 to vector<2x256xf32>
    %300 = arith.mulf %299, %293 : vector<2x256xf32>
    %301 = arith.addf %297, %300 : vector<2x256xf32>
    %302 = vector.broadcast %294 : vector<1x256xf32> to vector<2x256xf32>
    %303 = arith.mulf %302, %301 : vector<2x256xf32>
    %304 = arith.addf %278, %303 : vector<2x256xf32>
    %c2_i32 = arith.constant 2 : i32
    %305 = tpu.dynamic_rotate %14 by %c2_i32 dim 1 : vector<2x256xf32>, i32 -> vector<2x256xf32>
    %c2_i32_78 = arith.constant 2 : i32
    %306 = tpu.dynamic_rotate %15 by %c2_i32_78 dim 1 : vector<2x256xf32>, i32 -> vector<2x256xf32>
    %c22 = arith.constant 22 : index
    %c0_79 = arith.constant 0 : index
    %307 = vector.load %arg3[%c22, %c0_79] : memref<49x256xf32, #tpu.memory_space<vmem>>, vector<1x256xf32>
    %c22_80 = arith.constant 22 : index
    %308 = memref.load %arg1[%c22_80] : memref<98xf32, #tpu.memory_space<smem>>
    %309 = vector.broadcast %308 : f32 to vector<2x256xf32>
    %310 = arith.mulf %309, %305 : vector<2x256xf32>
    %c71 = arith.constant 71 : index
    %311 = memref.load %arg1[%c71] : memref<98xf32, #tpu.memory_space<smem>>
    %312 = vector.broadcast %311 : f32 to vector<2x256xf32>
    %313 = arith.mulf %312, %306 : vector<2x256xf32>
    %314 = arith.addf %310, %313 : vector<2x256xf32>
    %315 = vector.broadcast %307 : vector<1x256xf32> to vector<2x256xf32>
    %316 = arith.mulf %315, %314 : vector<2x256xf32>
    %317 = arith.addf %291, %316 : vector<2x256xf32>
    %c1_i32 = arith.constant 1 : i32
    %318 = tpu.dynamic_rotate %14 by %c1_i32 dim 1 : vector<2x256xf32>, i32 -> vector<2x256xf32>
    %c1_i32_81 = arith.constant 1 : i32
    %319 = tpu.dynamic_rotate %15 by %c1_i32_81 dim 1 : vector<2x256xf32>, i32 -> vector<2x256xf32>
    %c23 = arith.constant 23 : index
    %c0_82 = arith.constant 0 : index
    %320 = vector.load %arg3[%c23, %c0_82] : memref<49x256xf32, #tpu.memory_space<vmem>>, vector<1x256xf32>
    %c23_83 = arith.constant 23 : index
    %321 = memref.load %arg1[%c23_83] : memref<98xf32, #tpu.memory_space<smem>>
    %322 = vector.broadcast %321 : f32 to vector<2x256xf32>
    %323 = arith.mulf %322, %318 : vector<2x256xf32>
    %c72 = arith.constant 72 : index
    %324 = memref.load %arg1[%c72] : memref<98xf32, #tpu.memory_space<smem>>
    %325 = vector.broadcast %324 : f32 to vector<2x256xf32>
    %326 = arith.mulf %325, %319 : vector<2x256xf32>
    %327 = arith.addf %323, %326 : vector<2x256xf32>
    %328 = vector.broadcast %320 : vector<1x256xf32> to vector<2x256xf32>
    %329 = arith.mulf %328, %327 : vector<2x256xf32>
    %330 = arith.addf %304, %329 : vector<2x256xf32>
    %c24 = arith.constant 24 : index
    %c0_84 = arith.constant 0 : index
    %331 = vector.load %arg3[%c24, %c0_84] : memref<49x256xf32, #tpu.memory_space<vmem>>, vector<1x256xf32>
    %c24_85 = arith.constant 24 : index
    %332 = memref.load %arg1[%c24_85] : memref<98xf32, #tpu.memory_space<smem>>
    %333 = vector.broadcast %332 : f32 to vector<2x256xf32>
    %334 = arith.mulf %333, %14 : vector<2x256xf32>
    %c73 = arith.constant 73 : index
    %335 = memref.load %arg1[%c73] : memref<98xf32, #tpu.memory_space<smem>>
    %336 = vector.broadcast %335 : f32 to vector<2x256xf32>
    %337 = arith.mulf %336, %15 : vector<2x256xf32>
    %338 = arith.addf %334, %337 : vector<2x256xf32>
    %339 = vector.broadcast %331 : vector<1x256xf32> to vector<2x256xf32>
    %340 = arith.mulf %339, %338 : vector<2x256xf32>
    %341 = arith.addf %317, %340 : vector<2x256xf32>
    %c255_i32 = arith.constant 255 : i32
    %342 = tpu.dynamic_rotate %14 by %c255_i32 dim 1 : vector<2x256xf32>, i32 -> vector<2x256xf32>
    %c255_i32_86 = arith.constant 255 : i32
    %343 = tpu.dynamic_rotate %15 by %c255_i32_86 dim 1 : vector<2x256xf32>, i32 -> vector<2x256xf32>
    %c25 = arith.constant 25 : index
    %c0_87 = arith.constant 0 : index
    %344 = vector.load %arg3[%c25, %c0_87] : memref<49x256xf32, #tpu.memory_space<vmem>>, vector<1x256xf32>
    %c25_88 = arith.constant 25 : index
    %345 = memref.load %arg1[%c25_88] : memref<98xf32, #tpu.memory_space<smem>>
    %346 = vector.broadcast %345 : f32 to vector<2x256xf32>
    %347 = arith.mulf %346, %342 : vector<2x256xf32>
    %c74 = arith.constant 74 : index
    %348 = memref.load %arg1[%c74] : memref<98xf32, #tpu.memory_space<smem>>
    %349 = vector.broadcast %348 : f32 to vector<2x256xf32>
    %350 = arith.mulf %349, %343 : vector<2x256xf32>
    %351 = arith.addf %347, %350 : vector<2x256xf32>
    %352 = vector.broadcast %344 : vector<1x256xf32> to vector<2x256xf32>
    %353 = arith.mulf %352, %351 : vector<2x256xf32>
    %354 = arith.addf %330, %353 : vector<2x256xf32>
    %c254_i32 = arith.constant 254 : i32
    %355 = tpu.dynamic_rotate %14 by %c254_i32 dim 1 : vector<2x256xf32>, i32 -> vector<2x256xf32>
    %c254_i32_89 = arith.constant 254 : i32
    %356 = tpu.dynamic_rotate %15 by %c254_i32_89 dim 1 : vector<2x256xf32>, i32 -> vector<2x256xf32>
    %c26 = arith.constant 26 : index
    %c0_90 = arith.constant 0 : index
    %357 = vector.load %arg3[%c26, %c0_90] : memref<49x256xf32, #tpu.memory_space<vmem>>, vector<1x256xf32>
    %c26_91 = arith.constant 26 : index
    %358 = memref.load %arg1[%c26_91] : memref<98xf32, #tpu.memory_space<smem>>
    %359 = vector.broadcast %358 : f32 to vector<2x256xf32>
    %360 = arith.mulf %359, %355 : vector<2x256xf32>
    %c75 = arith.constant 75 : index
    %361 = memref.load %arg1[%c75] : memref<98xf32, #tpu.memory_space<smem>>
    %362 = vector.broadcast %361 : f32 to vector<2x256xf32>
    %363 = arith.mulf %362, %356 : vector<2x256xf32>
    %364 = arith.addf %360, %363 : vector<2x256xf32>
    %365 = vector.broadcast %357 : vector<1x256xf32> to vector<2x256xf32>
    %366 = arith.mulf %365, %364 : vector<2x256xf32>
    %367 = arith.addf %341, %366 : vector<2x256xf32>
    %c253_i32 = arith.constant 253 : i32
    %368 = tpu.dynamic_rotate %14 by %c253_i32 dim 1 : vector<2x256xf32>, i32 -> vector<2x256xf32>
    %c253_i32_92 = arith.constant 253 : i32
    %369 = tpu.dynamic_rotate %15 by %c253_i32_92 dim 1 : vector<2x256xf32>, i32 -> vector<2x256xf32>
    %c27 = arith.constant 27 : index
    %c0_93 = arith.constant 0 : index
    %370 = vector.load %arg3[%c27, %c0_93] : memref<49x256xf32, #tpu.memory_space<vmem>>, vector<1x256xf32>
    %c27_94 = arith.constant 27 : index
    %371 = memref.load %arg1[%c27_94] : memref<98xf32, #tpu.memory_space<smem>>
    %372 = vector.broadcast %371 : f32 to vector<2x256xf32>
    %373 = arith.mulf %372, %368 : vector<2x256xf32>
    %c76 = arith.constant 76 : index
    %374 = memref.load %arg1[%c76] : memref<98xf32, #tpu.memory_space<smem>>
    %375 = vector.broadcast %374 : f32 to vector<2x256xf32>
    %376 = arith.mulf %375, %369 : vector<2x256xf32>
    %377 = arith.addf %373, %376 : vector<2x256xf32>
    %378 = vector.broadcast %370 : vector<1x256xf32> to vector<2x256xf32>
    %379 = arith.mulf %378, %377 : vector<2x256xf32>
    %380 = arith.addf %354, %379 : vector<2x256xf32>
    %c243_i32 = arith.constant 243 : i32
    %381 = tpu.dynamic_rotate %14 by %c243_i32 dim 1 : vector<2x256xf32>, i32 -> vector<2x256xf32>
    %c243_i32_95 = arith.constant 243 : i32
    %382 = tpu.dynamic_rotate %15 by %c243_i32_95 dim 1 : vector<2x256xf32>, i32 -> vector<2x256xf32>
    %c28 = arith.constant 28 : index
    %c0_96 = arith.constant 0 : index
    %383 = vector.load %arg3[%c28, %c0_96] : memref<49x256xf32, #tpu.memory_space<vmem>>, vector<1x256xf32>
    %c28_97 = arith.constant 28 : index
    %384 = memref.load %arg1[%c28_97] : memref<98xf32, #tpu.memory_space<smem>>
    %385 = vector.broadcast %384 : f32 to vector<2x256xf32>
    %386 = arith.mulf %385, %381 : vector<2x256xf32>
    %c77 = arith.constant 77 : index
    %387 = memref.load %arg1[%c77] : memref<98xf32, #tpu.memory_space<smem>>
    %388 = vector.broadcast %387 : f32 to vector<2x256xf32>
    %389 = arith.mulf %388, %382 : vector<2x256xf32>
    %390 = arith.addf %386, %389 : vector<2x256xf32>
    %391 = vector.broadcast %383 : vector<1x256xf32> to vector<2x256xf32>
    %392 = arith.mulf %391, %390 : vector<2x256xf32>
    %393 = arith.addf %367, %392 : vector<2x256xf32>
    %c242_i32 = arith.constant 242 : i32
    %394 = tpu.dynamic_rotate %14 by %c242_i32 dim 1 : vector<2x256xf32>, i32 -> vector<2x256xf32>
    %c242_i32_98 = arith.constant 242 : i32
    %395 = tpu.dynamic_rotate %15 by %c242_i32_98 dim 1 : vector<2x256xf32>, i32 -> vector<2x256xf32>
    %c29 = arith.constant 29 : index
    %c0_99 = arith.constant 0 : index
    %396 = vector.load %arg3[%c29, %c0_99] : memref<49x256xf32, #tpu.memory_space<vmem>>, vector<1x256xf32>
    %c29_100 = arith.constant 29 : index
    %397 = memref.load %arg1[%c29_100] : memref<98xf32, #tpu.memory_space<smem>>
    %398 = vector.broadcast %397 : f32 to vector<2x256xf32>
    %399 = arith.mulf %398, %394 : vector<2x256xf32>
    %c78 = arith.constant 78 : index
    %400 = memref.load %arg1[%c78] : memref<98xf32, #tpu.memory_space<smem>>
    %401 = vector.broadcast %400 : f32 to vector<2x256xf32>
    %402 = arith.mulf %401, %395 : vector<2x256xf32>
    %403 = arith.addf %399, %402 : vector<2x256xf32>
    %404 = vector.broadcast %396 : vector<1x256xf32> to vector<2x256xf32>
    %405 = arith.mulf %404, %403 : vector<2x256xf32>
    %406 = arith.addf %380, %405 : vector<2x256xf32>
    %c241_i32 = arith.constant 241 : i32
    %407 = tpu.dynamic_rotate %14 by %c241_i32 dim 1 : vector<2x256xf32>, i32 -> vector<2x256xf32>
    %c241_i32_101 = arith.constant 241 : i32
    %408 = tpu.dynamic_rotate %15 by %c241_i32_101 dim 1 : vector<2x256xf32>, i32 -> vector<2x256xf32>
    %c30 = arith.constant 30 : index
    %c0_102 = arith.constant 0 : index
    %409 = vector.load %arg3[%c30, %c0_102] : memref<49x256xf32, #tpu.memory_space<vmem>>, vector<1x256xf32>
    %c30_103 = arith.constant 30 : index
    %410 = memref.load %arg1[%c30_103] : memref<98xf32, #tpu.memory_space<smem>>
    %411 = vector.broadcast %410 : f32 to vector<2x256xf32>
    %412 = arith.mulf %411, %407 : vector<2x256xf32>
    %c79 = arith.constant 79 : index
    %413 = memref.load %arg1[%c79] : memref<98xf32, #tpu.memory_space<smem>>
    %414 = vector.broadcast %413 : f32 to vector<2x256xf32>
    %415 = arith.mulf %414, %408 : vector<2x256xf32>
    %416 = arith.addf %412, %415 : vector<2x256xf32>
    %417 = vector.broadcast %409 : vector<1x256xf32> to vector<2x256xf32>
    %418 = arith.mulf %417, %416 : vector<2x256xf32>
    %419 = arith.addf %393, %418 : vector<2x256xf32>
    %c240_i32 = arith.constant 240 : i32
    %420 = tpu.dynamic_rotate %14 by %c240_i32 dim 1 : vector<2x256xf32>, i32 -> vector<2x256xf32>
    %c240_i32_104 = arith.constant 240 : i32
    %421 = tpu.dynamic_rotate %15 by %c240_i32_104 dim 1 : vector<2x256xf32>, i32 -> vector<2x256xf32>
    %c31 = arith.constant 31 : index
    %c0_105 = arith.constant 0 : index
    %422 = vector.load %arg3[%c31, %c0_105] : memref<49x256xf32, #tpu.memory_space<vmem>>, vector<1x256xf32>
    %c31_106 = arith.constant 31 : index
    %423 = memref.load %arg1[%c31_106] : memref<98xf32, #tpu.memory_space<smem>>
    %424 = vector.broadcast %423 : f32 to vector<2x256xf32>
    %425 = arith.mulf %424, %420 : vector<2x256xf32>
    %c80 = arith.constant 80 : index
    %426 = memref.load %arg1[%c80] : memref<98xf32, #tpu.memory_space<smem>>
    %427 = vector.broadcast %426 : f32 to vector<2x256xf32>
    %428 = arith.mulf %427, %421 : vector<2x256xf32>
    %429 = arith.addf %425, %428 : vector<2x256xf32>
    %430 = vector.broadcast %422 : vector<1x256xf32> to vector<2x256xf32>
    %431 = arith.mulf %430, %429 : vector<2x256xf32>
    %432 = arith.addf %406, %431 : vector<2x256xf32>
    %c239_i32 = arith.constant 239 : i32
    %433 = tpu.dynamic_rotate %14 by %c239_i32 dim 1 : vector<2x256xf32>, i32 -> vector<2x256xf32>
    %c239_i32_107 = arith.constant 239 : i32
    %434 = tpu.dynamic_rotate %15 by %c239_i32_107 dim 1 : vector<2x256xf32>, i32 -> vector<2x256xf32>
    %c32 = arith.constant 32 : index
    %c0_108 = arith.constant 0 : index
    %435 = vector.load %arg3[%c32, %c0_108] : memref<49x256xf32, #tpu.memory_space<vmem>>, vector<1x256xf32>
    %c32_109 = arith.constant 32 : index
    %436 = memref.load %arg1[%c32_109] : memref<98xf32, #tpu.memory_space<smem>>
    %437 = vector.broadcast %436 : f32 to vector<2x256xf32>
    %438 = arith.mulf %437, %433 : vector<2x256xf32>
    %c81 = arith.constant 81 : index
    %439 = memref.load %arg1[%c81] : memref<98xf32, #tpu.memory_space<smem>>
    %440 = vector.broadcast %439 : f32 to vector<2x256xf32>
    %441 = arith.mulf %440, %434 : vector<2x256xf32>
    %442 = arith.addf %438, %441 : vector<2x256xf32>
    %443 = vector.broadcast %435 : vector<1x256xf32> to vector<2x256xf32>
    %444 = arith.mulf %443, %442 : vector<2x256xf32>
    %445 = arith.addf %419, %444 : vector<2x256xf32>
    %c238_i32 = arith.constant 238 : i32
    %446 = tpu.dynamic_rotate %14 by %c238_i32 dim 1 : vector<2x256xf32>, i32 -> vector<2x256xf32>
    %c238_i32_110 = arith.constant 238 : i32
    %447 = tpu.dynamic_rotate %15 by %c238_i32_110 dim 1 : vector<2x256xf32>, i32 -> vector<2x256xf32>
    %c33 = arith.constant 33 : index
    %c0_111 = arith.constant 0 : index
    %448 = vector.load %arg3[%c33, %c0_111] : memref<49x256xf32, #tpu.memory_space<vmem>>, vector<1x256xf32>
    %c33_112 = arith.constant 33 : index
    %449 = memref.load %arg1[%c33_112] : memref<98xf32, #tpu.memory_space<smem>>
    %450 = vector.broadcast %449 : f32 to vector<2x256xf32>
    %451 = arith.mulf %450, %446 : vector<2x256xf32>
    %c82 = arith.constant 82 : index
    %452 = memref.load %arg1[%c82] : memref<98xf32, #tpu.memory_space<smem>>
    %453 = vector.broadcast %452 : f32 to vector<2x256xf32>
    %454 = arith.mulf %453, %447 : vector<2x256xf32>
    %455 = arith.addf %451, %454 : vector<2x256xf32>
    %456 = vector.broadcast %448 : vector<1x256xf32> to vector<2x256xf32>
    %457 = arith.mulf %456, %455 : vector<2x256xf32>
    %458 = arith.addf %432, %457 : vector<2x256xf32>
    %c237_i32 = arith.constant 237 : i32
    %459 = tpu.dynamic_rotate %14 by %c237_i32 dim 1 : vector<2x256xf32>, i32 -> vector<2x256xf32>
    %c237_i32_113 = arith.constant 237 : i32
    %460 = tpu.dynamic_rotate %15 by %c237_i32_113 dim 1 : vector<2x256xf32>, i32 -> vector<2x256xf32>
    %c34 = arith.constant 34 : index
    %c0_114 = arith.constant 0 : index
    %461 = vector.load %arg3[%c34, %c0_114] : memref<49x256xf32, #tpu.memory_space<vmem>>, vector<1x256xf32>
    %c34_115 = arith.constant 34 : index
    %462 = memref.load %arg1[%c34_115] : memref<98xf32, #tpu.memory_space<smem>>
    %463 = vector.broadcast %462 : f32 to vector<2x256xf32>
    %464 = arith.mulf %463, %459 : vector<2x256xf32>
    %c83 = arith.constant 83 : index
    %465 = memref.load %arg1[%c83] : memref<98xf32, #tpu.memory_space<smem>>
    %466 = vector.broadcast %465 : f32 to vector<2x256xf32>
    %467 = arith.mulf %466, %460 : vector<2x256xf32>
    %468 = arith.addf %464, %467 : vector<2x256xf32>
    %469 = vector.broadcast %461 : vector<1x256xf32> to vector<2x256xf32>
    %470 = arith.mulf %469, %468 : vector<2x256xf32>
    %471 = arith.addf %445, %470 : vector<2x256xf32>
    %c227_i32 = arith.constant 227 : i32
    %472 = tpu.dynamic_rotate %14 by %c227_i32 dim 1 : vector<2x256xf32>, i32 -> vector<2x256xf32>
    %c227_i32_116 = arith.constant 227 : i32
    %473 = tpu.dynamic_rotate %15 by %c227_i32_116 dim 1 : vector<2x256xf32>, i32 -> vector<2x256xf32>
    %c35 = arith.constant 35 : index
    %c0_117 = arith.constant 0 : index
    %474 = vector.load %arg3[%c35, %c0_117] : memref<49x256xf32, #tpu.memory_space<vmem>>, vector<1x256xf32>
    %c35_118 = arith.constant 35 : index
    %475 = memref.load %arg1[%c35_118] : memref<98xf32, #tpu.memory_space<smem>>
    %476 = vector.broadcast %475 : f32 to vector<2x256xf32>
    %477 = arith.mulf %476, %472 : vector<2x256xf32>
    %c84 = arith.constant 84 : index
    %478 = memref.load %arg1[%c84] : memref<98xf32, #tpu.memory_space<smem>>
    %479 = vector.broadcast %478 : f32 to vector<2x256xf32>
    %480 = arith.mulf %479, %473 : vector<2x256xf32>
    %481 = arith.addf %477, %480 : vector<2x256xf32>
    %482 = vector.broadcast %474 : vector<1x256xf32> to vector<2x256xf32>
    %483 = arith.mulf %482, %481 : vector<2x256xf32>
    %484 = arith.addf %458, %483 : vector<2x256xf32>
    %c226_i32 = arith.constant 226 : i32
    %485 = tpu.dynamic_rotate %14 by %c226_i32 dim 1 : vector<2x256xf32>, i32 -> vector<2x256xf32>
    %c226_i32_119 = arith.constant 226 : i32
    %486 = tpu.dynamic_rotate %15 by %c226_i32_119 dim 1 : vector<2x256xf32>, i32 -> vector<2x256xf32>
    %c36 = arith.constant 36 : index
    %c0_120 = arith.constant 0 : index
    %487 = vector.load %arg3[%c36, %c0_120] : memref<49x256xf32, #tpu.memory_space<vmem>>, vector<1x256xf32>
    %c36_121 = arith.constant 36 : index
    %488 = memref.load %arg1[%c36_121] : memref<98xf32, #tpu.memory_space<smem>>
    %489 = vector.broadcast %488 : f32 to vector<2x256xf32>
    %490 = arith.mulf %489, %485 : vector<2x256xf32>
    %c85 = arith.constant 85 : index
    %491 = memref.load %arg1[%c85] : memref<98xf32, #tpu.memory_space<smem>>
    %492 = vector.broadcast %491 : f32 to vector<2x256xf32>
    %493 = arith.mulf %492, %486 : vector<2x256xf32>
    %494 = arith.addf %490, %493 : vector<2x256xf32>
    %495 = vector.broadcast %487 : vector<1x256xf32> to vector<2x256xf32>
    %496 = arith.mulf %495, %494 : vector<2x256xf32>
    %497 = arith.addf %471, %496 : vector<2x256xf32>
    %c225_i32 = arith.constant 225 : i32
    %498 = tpu.dynamic_rotate %14 by %c225_i32 dim 1 : vector<2x256xf32>, i32 -> vector<2x256xf32>
    %c225_i32_122 = arith.constant 225 : i32
    %499 = tpu.dynamic_rotate %15 by %c225_i32_122 dim 1 : vector<2x256xf32>, i32 -> vector<2x256xf32>
    %c37 = arith.constant 37 : index
    %c0_123 = arith.constant 0 : index
    %500 = vector.load %arg3[%c37, %c0_123] : memref<49x256xf32, #tpu.memory_space<vmem>>, vector<1x256xf32>
    %c37_124 = arith.constant 37 : index
    %501 = memref.load %arg1[%c37_124] : memref<98xf32, #tpu.memory_space<smem>>
    %502 = vector.broadcast %501 : f32 to vector<2x256xf32>
    %503 = arith.mulf %502, %498 : vector<2x256xf32>
    %c86 = arith.constant 86 : index
    %504 = memref.load %arg1[%c86] : memref<98xf32, #tpu.memory_space<smem>>
    %505 = vector.broadcast %504 : f32 to vector<2x256xf32>
    %506 = arith.mulf %505, %499 : vector<2x256xf32>
    %507 = arith.addf %503, %506 : vector<2x256xf32>
    %508 = vector.broadcast %500 : vector<1x256xf32> to vector<2x256xf32>
    %509 = arith.mulf %508, %507 : vector<2x256xf32>
    %510 = arith.addf %484, %509 : vector<2x256xf32>
    %c224_i32 = arith.constant 224 : i32
    %511 = tpu.dynamic_rotate %14 by %c224_i32 dim 1 : vector<2x256xf32>, i32 -> vector<2x256xf32>
    %c224_i32_125 = arith.constant 224 : i32
    %512 = tpu.dynamic_rotate %15 by %c224_i32_125 dim 1 : vector<2x256xf32>, i32 -> vector<2x256xf32>
    %c38 = arith.constant 38 : index
    %c0_126 = arith.constant 0 : index
    %513 = vector.load %arg3[%c38, %c0_126] : memref<49x256xf32, #tpu.memory_space<vmem>>, vector<1x256xf32>
    %c38_127 = arith.constant 38 : index
    %514 = memref.load %arg1[%c38_127] : memref<98xf32, #tpu.memory_space<smem>>
    %515 = vector.broadcast %514 : f32 to vector<2x256xf32>
    %516 = arith.mulf %515, %511 : vector<2x256xf32>
    %c87 = arith.constant 87 : index
    %517 = memref.load %arg1[%c87] : memref<98xf32, #tpu.memory_space<smem>>
    %518 = vector.broadcast %517 : f32 to vector<2x256xf32>
    %519 = arith.mulf %518, %512 : vector<2x256xf32>
    %520 = arith.addf %516, %519 : vector<2x256xf32>
    %521 = vector.broadcast %513 : vector<1x256xf32> to vector<2x256xf32>
    %522 = arith.mulf %521, %520 : vector<2x256xf32>
    %523 = arith.addf %497, %522 : vector<2x256xf32>
    %c223_i32 = arith.constant 223 : i32
    %524 = tpu.dynamic_rotate %14 by %c223_i32 dim 1 : vector<2x256xf32>, i32 -> vector<2x256xf32>
    %c223_i32_128 = arith.constant 223 : i32
    %525 = tpu.dynamic_rotate %15 by %c223_i32_128 dim 1 : vector<2x256xf32>, i32 -> vector<2x256xf32>
    %c39 = arith.constant 39 : index
    %c0_129 = arith.constant 0 : index
    %526 = vector.load %arg3[%c39, %c0_129] : memref<49x256xf32, #tpu.memory_space<vmem>>, vector<1x256xf32>
    %c39_130 = arith.constant 39 : index
    %527 = memref.load %arg1[%c39_130] : memref<98xf32, #tpu.memory_space<smem>>
    %528 = vector.broadcast %527 : f32 to vector<2x256xf32>
    %529 = arith.mulf %528, %524 : vector<2x256xf32>
    %c88 = arith.constant 88 : index
    %530 = memref.load %arg1[%c88] : memref<98xf32, #tpu.memory_space<smem>>
    %531 = vector.broadcast %530 : f32 to vector<2x256xf32>
    %532 = arith.mulf %531, %525 : vector<2x256xf32>
    %533 = arith.addf %529, %532 : vector<2x256xf32>
    %534 = vector.broadcast %526 : vector<1x256xf32> to vector<2x256xf32>
    %535 = arith.mulf %534, %533 : vector<2x256xf32>
    %536 = arith.addf %510, %535 : vector<2x256xf32>
    %c222_i32 = arith.constant 222 : i32
    %537 = tpu.dynamic_rotate %14 by %c222_i32 dim 1 : vector<2x256xf32>, i32 -> vector<2x256xf32>
    %c222_i32_131 = arith.constant 222 : i32
    %538 = tpu.dynamic_rotate %15 by %c222_i32_131 dim 1 : vector<2x256xf32>, i32 -> vector<2x256xf32>
    %c40 = arith.constant 40 : index
    %c0_132 = arith.constant 0 : index
    %539 = vector.load %arg3[%c40, %c0_132] : memref<49x256xf32, #tpu.memory_space<vmem>>, vector<1x256xf32>
    %c40_133 = arith.constant 40 : index
    %540 = memref.load %arg1[%c40_133] : memref<98xf32, #tpu.memory_space<smem>>
    %541 = vector.broadcast %540 : f32 to vector<2x256xf32>
    %542 = arith.mulf %541, %537 : vector<2x256xf32>
    %c89 = arith.constant 89 : index
    %543 = memref.load %arg1[%c89] : memref<98xf32, #tpu.memory_space<smem>>
    %544 = vector.broadcast %543 : f32 to vector<2x256xf32>
    %545 = arith.mulf %544, %538 : vector<2x256xf32>
    %546 = arith.addf %542, %545 : vector<2x256xf32>
    %547 = vector.broadcast %539 : vector<1x256xf32> to vector<2x256xf32>
    %548 = arith.mulf %547, %546 : vector<2x256xf32>
    %549 = arith.addf %523, %548 : vector<2x256xf32>
    %c221_i32 = arith.constant 221 : i32
    %550 = tpu.dynamic_rotate %14 by %c221_i32 dim 1 : vector<2x256xf32>, i32 -> vector<2x256xf32>
    %c221_i32_134 = arith.constant 221 : i32
    %551 = tpu.dynamic_rotate %15 by %c221_i32_134 dim 1 : vector<2x256xf32>, i32 -> vector<2x256xf32>
    %c41 = arith.constant 41 : index
    %c0_135 = arith.constant 0 : index
    %552 = vector.load %arg3[%c41, %c0_135] : memref<49x256xf32, #tpu.memory_space<vmem>>, vector<1x256xf32>
    %c41_136 = arith.constant 41 : index
    %553 = memref.load %arg1[%c41_136] : memref<98xf32, #tpu.memory_space<smem>>
    %554 = vector.broadcast %553 : f32 to vector<2x256xf32>
    %555 = arith.mulf %554, %550 : vector<2x256xf32>
    %c90 = arith.constant 90 : index
    %556 = memref.load %arg1[%c90] : memref<98xf32, #tpu.memory_space<smem>>
    %557 = vector.broadcast %556 : f32 to vector<2x256xf32>
    %558 = arith.mulf %557, %551 : vector<2x256xf32>
    %559 = arith.addf %555, %558 : vector<2x256xf32>
    %560 = vector.broadcast %552 : vector<1x256xf32> to vector<2x256xf32>
    %561 = arith.mulf %560, %559 : vector<2x256xf32>
    %562 = arith.addf %536, %561 : vector<2x256xf32>
    %c211_i32 = arith.constant 211 : i32
    %563 = tpu.dynamic_rotate %14 by %c211_i32 dim 1 : vector<2x256xf32>, i32 -> vector<2x256xf32>
    %c211_i32_137 = arith.constant 211 : i32
    %564 = tpu.dynamic_rotate %15 by %c211_i32_137 dim 1 : vector<2x256xf32>, i32 -> vector<2x256xf32>
    %c42 = arith.constant 42 : index
    %c0_138 = arith.constant 0 : index
    %565 = vector.load %arg3[%c42, %c0_138] : memref<49x256xf32, #tpu.memory_space<vmem>>, vector<1x256xf32>
    %c42_139 = arith.constant 42 : index
    %566 = memref.load %arg1[%c42_139] : memref<98xf32, #tpu.memory_space<smem>>
    %567 = vector.broadcast %566 : f32 to vector<2x256xf32>
    %568 = arith.mulf %567, %563 : vector<2x256xf32>
    %c91 = arith.constant 91 : index
    %569 = memref.load %arg1[%c91] : memref<98xf32, #tpu.memory_space<smem>>
    %570 = vector.broadcast %569 : f32 to vector<2x256xf32>
    %571 = arith.mulf %570, %564 : vector<2x256xf32>
    %572 = arith.addf %568, %571 : vector<2x256xf32>
    %573 = vector.broadcast %565 : vector<1x256xf32> to vector<2x256xf32>
    %574 = arith.mulf %573, %572 : vector<2x256xf32>
    %575 = arith.addf %549, %574 : vector<2x256xf32>
    %c210_i32 = arith.constant 210 : i32
    %576 = tpu.dynamic_rotate %14 by %c210_i32 dim 1 : vector<2x256xf32>, i32 -> vector<2x256xf32>
    %c210_i32_140 = arith.constant 210 : i32
    %577 = tpu.dynamic_rotate %15 by %c210_i32_140 dim 1 : vector<2x256xf32>, i32 -> vector<2x256xf32>
    %c43 = arith.constant 43 : index
    %c0_141 = arith.constant 0 : index
    %578 = vector.load %arg3[%c43, %c0_141] : memref<49x256xf32, #tpu.memory_space<vmem>>, vector<1x256xf32>
    %c43_142 = arith.constant 43 : index
    %579 = memref.load %arg1[%c43_142] : memref<98xf32, #tpu.memory_space<smem>>
    %580 = vector.broadcast %579 : f32 to vector<2x256xf32>
    %581 = arith.mulf %580, %576 : vector<2x256xf32>
    %c92 = arith.constant 92 : index
    %582 = memref.load %arg1[%c92] : memref<98xf32, #tpu.memory_space<smem>>
    %583 = vector.broadcast %582 : f32 to vector<2x256xf32>
    %584 = arith.mulf %583, %577 : vector<2x256xf32>
    %585 = arith.addf %581, %584 : vector<2x256xf32>
    %586 = vector.broadcast %578 : vector<1x256xf32> to vector<2x256xf32>
    %587 = arith.mulf %586, %585 : vector<2x256xf32>
    %588 = arith.addf %562, %587 : vector<2x256xf32>
    %c209_i32 = arith.constant 209 : i32
    %589 = tpu.dynamic_rotate %14 by %c209_i32 dim 1 : vector<2x256xf32>, i32 -> vector<2x256xf32>
    %c209_i32_143 = arith.constant 209 : i32
    %590 = tpu.dynamic_rotate %15 by %c209_i32_143 dim 1 : vector<2x256xf32>, i32 -> vector<2x256xf32>
    %c44 = arith.constant 44 : index
    %c0_144 = arith.constant 0 : index
    %591 = vector.load %arg3[%c44, %c0_144] : memref<49x256xf32, #tpu.memory_space<vmem>>, vector<1x256xf32>
    %c44_145 = arith.constant 44 : index
    %592 = memref.load %arg1[%c44_145] : memref<98xf32, #tpu.memory_space<smem>>
    %593 = vector.broadcast %592 : f32 to vector<2x256xf32>
    %594 = arith.mulf %593, %589 : vector<2x256xf32>
    %c93 = arith.constant 93 : index
    %595 = memref.load %arg1[%c93] : memref<98xf32, #tpu.memory_space<smem>>
    %596 = vector.broadcast %595 : f32 to vector<2x256xf32>
    %597 = arith.mulf %596, %590 : vector<2x256xf32>
    %598 = arith.addf %594, %597 : vector<2x256xf32>
    %599 = vector.broadcast %591 : vector<1x256xf32> to vector<2x256xf32>
    %600 = arith.mulf %599, %598 : vector<2x256xf32>
    %601 = arith.addf %575, %600 : vector<2x256xf32>
    %c208_i32 = arith.constant 208 : i32
    %602 = tpu.dynamic_rotate %14 by %c208_i32 dim 1 : vector<2x256xf32>, i32 -> vector<2x256xf32>
    %c208_i32_146 = arith.constant 208 : i32
    %603 = tpu.dynamic_rotate %15 by %c208_i32_146 dim 1 : vector<2x256xf32>, i32 -> vector<2x256xf32>
    %c45 = arith.constant 45 : index
    %c0_147 = arith.constant 0 : index
    %604 = vector.load %arg3[%c45, %c0_147] : memref<49x256xf32, #tpu.memory_space<vmem>>, vector<1x256xf32>
    %c45_148 = arith.constant 45 : index
    %605 = memref.load %arg1[%c45_148] : memref<98xf32, #tpu.memory_space<smem>>
    %606 = vector.broadcast %605 : f32 to vector<2x256xf32>
    %607 = arith.mulf %606, %602 : vector<2x256xf32>
    %c94 = arith.constant 94 : index
    %608 = memref.load %arg1[%c94] : memref<98xf32, #tpu.memory_space<smem>>
    %609 = vector.broadcast %608 : f32 to vector<2x256xf32>
    %610 = arith.mulf %609, %603 : vector<2x256xf32>
    %611 = arith.addf %607, %610 : vector<2x256xf32>
    %612 = vector.broadcast %604 : vector<1x256xf32> to vector<2x256xf32>
    %613 = arith.mulf %612, %611 : vector<2x256xf32>
    %614 = arith.addf %588, %613 : vector<2x256xf32>
    %c207_i32 = arith.constant 207 : i32
    %615 = tpu.dynamic_rotate %14 by %c207_i32 dim 1 : vector<2x256xf32>, i32 -> vector<2x256xf32>
    %c207_i32_149 = arith.constant 207 : i32
    %616 = tpu.dynamic_rotate %15 by %c207_i32_149 dim 1 : vector<2x256xf32>, i32 -> vector<2x256xf32>
    %c46 = arith.constant 46 : index
    %c0_150 = arith.constant 0 : index
    %617 = vector.load %arg3[%c46, %c0_150] : memref<49x256xf32, #tpu.memory_space<vmem>>, vector<1x256xf32>
    %c46_151 = arith.constant 46 : index
    %618 = memref.load %arg1[%c46_151] : memref<98xf32, #tpu.memory_space<smem>>
    %619 = vector.broadcast %618 : f32 to vector<2x256xf32>
    %620 = arith.mulf %619, %615 : vector<2x256xf32>
    %c95 = arith.constant 95 : index
    %621 = memref.load %arg1[%c95] : memref<98xf32, #tpu.memory_space<smem>>
    %622 = vector.broadcast %621 : f32 to vector<2x256xf32>
    %623 = arith.mulf %622, %616 : vector<2x256xf32>
    %624 = arith.addf %620, %623 : vector<2x256xf32>
    %625 = vector.broadcast %617 : vector<1x256xf32> to vector<2x256xf32>
    %626 = arith.mulf %625, %624 : vector<2x256xf32>
    %627 = arith.addf %601, %626 : vector<2x256xf32>
    %c206_i32 = arith.constant 206 : i32
    %628 = tpu.dynamic_rotate %14 by %c206_i32 dim 1 : vector<2x256xf32>, i32 -> vector<2x256xf32>
    %c206_i32_152 = arith.constant 206 : i32
    %629 = tpu.dynamic_rotate %15 by %c206_i32_152 dim 1 : vector<2x256xf32>, i32 -> vector<2x256xf32>
    %c47 = arith.constant 47 : index
    %c0_153 = arith.constant 0 : index
    %630 = vector.load %arg3[%c47, %c0_153] : memref<49x256xf32, #tpu.memory_space<vmem>>, vector<1x256xf32>
    %c47_154 = arith.constant 47 : index
    %631 = memref.load %arg1[%c47_154] : memref<98xf32, #tpu.memory_space<smem>>
    %632 = vector.broadcast %631 : f32 to vector<2x256xf32>
    %633 = arith.mulf %632, %628 : vector<2x256xf32>
    %c96 = arith.constant 96 : index
    %634 = memref.load %arg1[%c96] : memref<98xf32, #tpu.memory_space<smem>>
    %635 = vector.broadcast %634 : f32 to vector<2x256xf32>
    %636 = arith.mulf %635, %629 : vector<2x256xf32>
    %637 = arith.addf %633, %636 : vector<2x256xf32>
    %638 = vector.broadcast %630 : vector<1x256xf32> to vector<2x256xf32>
    %639 = arith.mulf %638, %637 : vector<2x256xf32>
    %640 = arith.addf %614, %639 : vector<2x256xf32>
    %c205_i32 = arith.constant 205 : i32
    %641 = tpu.dynamic_rotate %14 by %c205_i32 dim 1 : vector<2x256xf32>, i32 -> vector<2x256xf32>
    %c205_i32_155 = arith.constant 205 : i32
    %642 = tpu.dynamic_rotate %15 by %c205_i32_155 dim 1 : vector<2x256xf32>, i32 -> vector<2x256xf32>
    %c48 = arith.constant 48 : index
    %c0_156 = arith.constant 0 : index
    %643 = vector.load %arg3[%c48, %c0_156] : memref<49x256xf32, #tpu.memory_space<vmem>>, vector<1x256xf32>
    %c48_157 = arith.constant 48 : index
    %644 = memref.load %arg1[%c48_157] : memref<98xf32, #tpu.memory_space<smem>>
    %645 = vector.broadcast %644 : f32 to vector<2x256xf32>
    %646 = arith.mulf %645, %641 : vector<2x256xf32>
    %c97 = arith.constant 97 : index
    %647 = memref.load %arg1[%c97] : memref<98xf32, #tpu.memory_space<smem>>
    %648 = vector.broadcast %647 : f32 to vector<2x256xf32>
    %649 = arith.mulf %648, %642 : vector<2x256xf32>
    %650 = arith.addf %646, %649 : vector<2x256xf32>
    %651 = vector.broadcast %643 : vector<1x256xf32> to vector<2x256xf32>
    %652 = arith.mulf %651, %650 : vector<2x256xf32>
    %653 = arith.addf %627, %652 : vector<2x256xf32>
    %654 = arith.addf %653, %640 : vector<2x256xf32>
    %655 = arith.negf %654 : vector<2x256xf32>
    %656 = math.exp %655 : vector<2x256xf32>
    %cst_158 = arith.constant 1.000000e+00 : f32
    %657 = vector.broadcast %cst_158 : f32 to vector<2x256xf32>
    %658 = arith.addf %657, %656 : vector<2x256xf32>
    %659 = arith.divf %657, %658 : vector<2x256xf32>
    %cst_159 = arith.constant 2.000000e-01 : f32
    %660 = vector.broadcast %cst_159 : f32 to vector<2x256xf32>
    %661 = arith.cmpf oge, %659, %660 : vector<2x256xf32>
    %cst_160 = arith.constant 0.000000e+00 : f32
    %662 = vector.broadcast %cst_160 : f32 to vector<2x256xf32>
    %663 = arith.select %661, %659, %662 : vector<2x256xi1>, vector<2x256xf32>
    %664 = vector.shape_cast %663 : vector<2x256xf32> to vector<2x1x256xf32>
    %665 = vector.shape_cast %664 : vector<2x1x256xf32> to vector<2x1x256xf32>
    %666 = vector.broadcast %665 : vector<2x1x256xf32> to vector<2x4x256xf32>
    %c0_161 = arith.constant 0 : index
    %c0_162 = arith.constant 0 : index
    %c0_163 = arith.constant 0 : index
    %667 = vector.load %arg5[%c0_161, %c0_162, %c0_163] : memref<2x4x256xf32, #tpu.memory_space<vmem>>, vector<2x4x256xf32>
    tpu.vector_store %arg5[%c0_161, %c0_162, %c0_163], %666 {strides = array<i32>} : memref<2x4x256xf32, #tpu.memory_space<vmem>>, vector<2x4x256xf32>,
    return
  }
  func.func @transform_0(%arg0: i32) -> i32 {
    %c0_i32 = arith.constant 0 : i32
    %c0_i32_0 = arith.constant 0 : i32
    return %c0_i32 : i32
  }
  func.func @transform_1(%arg0: i32) -> i32 {
    %c0_i32 = arith.constant 0 : i32
    %c0_i32_0 = arith.constant 0 : i32
    return %c0_i32 : i32
  }
  func.func @transform_2(%arg0: i32) -> (i32, i32) {
    %c0_i32 = arith.constant 0 : i32
    %c0_i32_0 = arith.constant 0 : i32
    %c0_i32_1 = arith.constant 0 : i32
    return %c0_i32, %c0_i32_0 : i32, i32
  }
  func.func @transform_3(%arg0: i32) -> (i32, i32, i32) {
    %c0_i32 = arith.constant 0 : i32
    %c0_i32_0 = arith.constant 0 : i32
    %c0_i32_1 = arith.constant 0 : i32
    return %arg0, %c0_i32, %c0_i32_0 : i32, i32, i32
  }
  func.func @transform_4(%arg0: i32) -> (i32, i32, i32) {
    %c0_i32 = arith.constant 0 : i32
    %c0_i32_0 = arith.constant 0 : i32
    %c0_i32_1 = arith.constant 0 : i32
    return %arg0, %c0_i32, %c0_i32_0 : i32, i32, i32
  }
}

</mosaic_0001>

<llo_original>
// kernel: tpu_custom_call.1
$region0: #{tpu_custom_call.1}
  #allocation0 [shape = 'u32[]', space=smem, size = 0x4, offset = 0x4, fixed_abs, tag = 'smem constant byte address 0x4 - core index']
  #allocation1 [shape = 'u32[144,128]{1,0:T(1,128)}', space=vmem, size = 0x12000, scoped, tag = 'internal scratch']
  #allocation2 [shape = 'f32[1]{0:T(128)S(6)}', space=smem, size = 0x200, scoped, tag = 'scoped memory for tpu_custom_call.1']
  %s0 = inlined_call_operand.vmem [shape: f32[98], index: 0, kind: input, shape index: {}]
  %s1 = inlined_call_operand.<no memory space> [shape: f32[1], index: 1, kind: input, shape index: {}]
  %s2 = inlined_call_operand.hbm [shape: f32[49,256], index: 2, kind: input, shape index: {}]
  %s3 = inlined_call_operand.hbm [shape: f32[2,4,256], index: 3, kind: input, shape index: {}]
  %s4 = inlined_call_operand.hbm [shape: f32[2,4,256], index: 4, kind: output, shape index: {}]
  %s5 = sld [smem:[#allocation0]]
  $region38: #{tpu_custom_call.1} parent=0
    _
  %s7 = ssub.s32 1, %s5
  %s8 = scalar_select 0, %s7, %s5
  %9 = sst [smem:[#allocation2]] %s1
  $region1: #{tpu_custom_call.1} parent=0
    #allocation3 [shape = 'u8[512]{0}', space=smem, size = 0x200, scoped, tag = 'input window, operand 0, single buffered']
    #allocation4 [shape = 's32[1]{0}', space=sflag, size = 0x4, scoped, tag = 'scoped memory for tpu_custom_call.1']
    #allocation5 [shape = 's32[1]{0}', space=sflag, size = 0x4, scoped, tag = 'scoped memory for tpu_custom_call.1']
    #allocation6 [shape = 's32[1]{0}', space=sflag, size = 0x4, scoped, tag = 'scoped memory for tpu_custom_call.1']
    #allocation7 [shape = 'u8[57344]{0}', space=vmem, size = 0xe000, scoped, tag = 'input window, operand 2, single buffered']
    #allocation8 [shape = 'u8[8192]{0}', space=vmem, size = 0x2000, scoped, tag = 'input window, operand 3, single buffered']
    #allocation9 [shape = 's32[1]{0}', space=sflag, size = 0x4, scoped, tag = 'scoped memory for tpu_custom_call.1']
    #allocation10 [shape = 'u8[8192]{0}', space=vmem, size = 0x2000, scoped, tag = 'output window, operand 0, single buffered']
    %10 = vsyncpa [#allocation6], 0
    %11 = vsyncpa [#allocation4], 0
    %12 = vsyncpa [#allocation9], 0
    %13 = vsyncpa [#allocation5], 0
    // Predicated region
    $region2: #{tpu_custom_call.1} parent=1 // pred_check
      _
    $region3: #{tpu_custom_call.1} parent=1 // pred_check_branch
      %15 = sbr.rel (0) target = $region5
    $region4: #{tpu_custom_call.1} parent=1 // pred_region
      %s17 = ssub.s32 16, 16
      %18 = vsyncadd [#allocation6], %s17
      %s20 = sshll.u32 %s0, 4
      %s21 = int_to_ptr.vmem [resolvable:$true] %s20
      %23 = dma.vmem_to_smem %s21, 16, [#allocation3], [#allocation6]
    $region5: #{tpu_custom_call.1} parent=1 // pred_fallthru
      _
    // Predicated region
    $region6: #{tpu_custom_call.1} parent=1 // pred_check
      _
    $region7: #{tpu_custom_call.1} parent=1 // pred_check_branch
      %25 = sbr.rel (0) target = $region9
    $region8: #{tpu_custom_call.1} parent=1 // pred_region
      _
    $region9: #{tpu_custom_call.1} parent=1 // pred_fallthru
      _
    // Predicated region
    $region10: #{tpu_custom_call.1} parent=1 // pred_check
      _
    $region11: #{tpu_custom_call.1} parent=1 // pred_check_branch
      %27 = sbr.rel (0) target = $region13
    $region12: #{tpu_custom_call.1} parent=1 // pred_region
      %s29 = ssub.s32 1792, 1792
      %30 = vsyncadd [#allocation4], %s29
      %s31 = sshll.u32 [#allocation7], 4
      %s32 = int_to_ptr.vmem [resolvable:$true] %s31
      %37 = dma.hbm_to_vmem [thread:$0]  %s2, 1792, %s32, [#allocation4], 256, 256, 16
    $region13: #{tpu_custom_call.1} parent=1 // pred_fallthru
      _
    // Predicated region
    $region14: #{tpu_custom_call.1} parent=1 // pred_check
      _
    $region15: #{tpu_custom_call.1} parent=1 // pred_check_branch
      %39 = sbr.rel (0) target = $region17
    $region16: #{tpu_custom_call.1} parent=1 // pred_region
      %s41 = ssub.s32 256, 256
      %42 = vsyncadd [#allocation9], %s41
      %s43 = sshll.u32 [#allocation8], 4
      %s44 = int_to_ptr.vmem [resolvable:$true] %s43
      %49 = dma.hbm_to_vmem [thread:$0]  %s3, 256, %s44, [#allocation9], 128, 128, 8
    $region17: #{tpu_custom_call.1} parent=1 // pred_fallthru
      _
    // Predicated region
    $region18: #{tpu_custom_call.1} parent=1 // pred_check
      _
    $region19: #{tpu_custom_call.1} parent=1 // pred_check_branch
      %51 = sbr.rel (0) target = $region21
    $region20: #{tpu_custom_call.1} parent=1 // pred_region
      %52 = dma.done [#allocation6], 16
    $region21: #{tpu_custom_call.1} parent=1 // pred_fallthru
      _
    // Predicated region
    $region22: #{tpu_custom_call.1} parent=1 // pred_check
      _
    $region23: #{tpu_custom_call.1} parent=1 // pred_check_branch
      %54 = sbr.rel (0) target = $region25
    $region24: #{tpu_custom_call.1} parent=1 // pred_region
      %55 = dma.done [#allocation4], 1792
    $region25: #{tpu_custom_call.1} parent=1 // pred_fallthru
      _
    // Predicated region
    $region26: #{tpu_custom_call.1} parent=1 // pred_check
      _
    $region27: #{tpu_custom_call.1} parent=1 // pred_check_branch
      %57 = sbr.rel (0) target = $region29
    $region28: #{tpu_custom_call.1} parent=1 // pred_region
      %58 = dma.done [#allocation9], 256
    $region29: #{tpu_custom_call.1} parent=1 // pred_fallthru
      _
    %59 = sfence
    %v60 = vld [vmem:[#allocation8] sm:$0xff]
    %v62 = vcombine.high %v60, %v60
    %vm64 = vcmask 1043456
    %v65 = vsel %vm64, %v60, 0.0
    %v66 = vrot.slane %v65, 4
    %v67 = vadd.f32 %v65, %v66
    %v68 = vrot.slane %v67, 2
    %v69 = vadd.f32 %v67, %v68
    %v70 = vrot.slane %v69, 1
    %v71 = vadd.f32 %v69, %v70
    %v72 = vsel %vm64, %v62, 0.0
    %v73 = vrot.slane %v72, 4
    %v74 = vadd.f32 %v72, %v73
    %v75 = vrot.slane %v74, 2
    %v76 = vadd.f32 %v74, %v75
    %v77 = vrot.slane %v76, 1
    %v78 = vadd.f32 %v76, %v77
    %v79 = vsel %vm64, %v60, -inf
    %v80 = vrot.slane %v79, 4
    %v81 = vmax.f32 %v79, %v80
    %v82 = vrot.slane %v81, 2
    %v83 = vmax.f32 %v81, %v82
    %v84 = vrot.slane %v83, 1
    %v85 = vmax.f32 %v83, %v84
    %v86 = vsel %vm64, %v62, -inf
    %v87 = vrot.slane %v86, 4
    %v88 = vmax.f32 %v86, %v87
    %v89 = vrot.slane %v88, 2
    %v90 = vmax.f32 %v88, %v89
    %v91 = vrot.slane %v90, 1
    %v92 = vmax.f32 %v90, %v91
    %s93 = scalar_lea.vmem [#allocation8], 8
    %v94 = vld [vmem:[%s93] sm:$0xff]
    %v96 = vcombine.high %v94, %v94
    %v98 = vsel %vm64, %v94, 0.0
    %v99 = vrot.slane %v98, 4
    %v100 = vadd.f32 %v98, %v99
    %v101 = vrot.slane %v100, 2
    %v102 = vadd.f32 %v100, %v101
    %v103 = vrot.slane %v102, 1
    %v104 = vadd.f32 %v102, %v103
    %v105 = vsel %vm64, %v96, 0.0
    %v106 = vrot.slane %v105, 4
    %v107 = vadd.f32 %v105, %v106
    %v108 = vrot.slane %v107, 2
    %v109 = vadd.f32 %v107, %v108
    %v110 = vrot.slane %v109, 1
    %v111 = vadd.f32 %v109, %v110
    %v112 = vsel %vm64, %v94, -inf
    %v113 = vrot.slane %v112, 4
    %v114 = vmax.f32 %v112, %v113
    %v115 = vrot.slane %v114, 2
    %v116 = vmax.f32 %v114, %v115
    %v117 = vrot.slane %v116, 1
    %v118 = vmax.f32 %v116, %v117
    %v119 = vsel %vm64, %v96, -inf
    %v120 = vrot.slane %v119, 4
    %v121 = vmax.f32 %v119, %v120
    %v122 = vrot.slane %v121, 2
    %v123 = vmax.f32 %v121, %v122
    %v124 = vrot.slane %v123, 1
    %v125 = vmax.f32 %v123, %v124
    %vm126 = vcmask 1040384
    %v127 = vsel %vm126, %v71, %v104
    %v128 = vsel %vm126, %v78, %v111
    %v129 = vmul.f32 %v127, 0.25
    %v130 = vmul.f32 %v128, 0.25
    %v131 = vsel %vm126, %v85, %v118
    %v132 = vsel %vm126, %v92, %v125
    %s133 = sld [smem:[#allocation2]]
    %v134 = vstv %s133
    %135 = vrot.lane.b32.xlu0 %v129, 51
    %v136 = vpop.permute.xlu0 %135
    %137 = vrot.lane.b32.xlu0 %v130, 51
    %v138 = vpop.permute.xlu0 %137
    %v139 = vlaneseq
    %v140 = vand.u32 %v139, 127
    %vm141 = vcmp.lt.s32.totalorder %v140, 51
    %v142 = vsel %vm141, %v136, %v138
    %v143 = vsel %vm141, %v138, %v136
    %144 = vrot.lane.b32.xlu0 %v131, 51
    %v145 = vpop.permute.xlu0 %144
    %146 = vrot.lane.b32.xlu0 %v132, 51
    %v147 = vpop.permute.xlu0 %146
    %v148 = vsel %vm141, %v145, %v147
    %v149 = vsel %vm141, %v147, %v145
    %v150 = vld [vmem:[#allocation7] ss:$8 sm:$0x3]
    %s151 = sld [smem:[#allocation3]]
    %v152 = vstv %s151
    %v153 = vmul.f32 %v152, %v143
    %v154 = vmul.f32 %v152, %v142
    %s155 = sld [smem:[#allocation3 + $0x31]]
    %v156 = vstv %s155
    %v157 = vmul.f32 %v156, %v149
    %v158 = vmul.f32 %v156, %v148
    %v159 = vadd.f32 %v153, %v157
    %v160 = vadd.f32 %v154, %v158
    %v162 = vlaneseq
    %v163 = vshrl.u32 %v162, 7
    %v164 = vsub.s32 0, %v163
    %v165 = vrot.slane %v150, %v164
    %v166 = vlaneseq
    %v167 = vshrl.u32 %v166, 7
    %v168 = vsub.s32 1, %v167
    %v169 = vrot.slane %v150, %v168
    %v172 = vmul.f32 %v165, %v159
    %v173 = vmul.f32 %v169, %v160
    %v174 = vadd.f32 %v134, %v172
    %v175 = vadd.f32 %v134, %v173
    %176 = vrot.lane.b32.xlu0 %v129, 50
    %v177 = vpop.permute.xlu0 %176
    %178 = vrot.lane.b32.xlu0 %v130, 50
    %v179 = vpop.permute.xlu0 %178
    %vm180 = vcmp.lt.s32.totalorder %v140, 50
    %v181 = vsel %vm180, %v177, %v179
    %v182 = vsel %vm180, %v179, %v177
    %183 = vrot.lane.b32.xlu0 %v131, 50
    %v184 = vpop.permute.xlu0 %183
    %185 = vrot.lane.b32.xlu0 %v132, 50
    %v186 = vpop.permute.xlu0 %185
    %v187 = vsel %vm180, %v184, %v186
    %v188 = vsel %vm180, %v186, %v184
    %s189 = scalar_lea.vmem [#allocation7], 1
    %v190 = vld [vmem:[%s189] ss:$8 sm:$0x3]
    %s191 = sld [smem:[#allocation3 + $0x1]]
    %v192 = vstv %s191
    %v193 = vmul.f32 %v192, %v182
    %v194 = vmul.f32 %v192, %v181
    %s195 = sld [smem:[#allocation3 + $0x32]]
    %v196 = vstv %s195
    %v197 = vmul.f32 %v196, %v188
    %v198 = vmul.f32 %v196, %v187
    %v199 = vadd.f32 %v193, %v197
    %v200 = vadd.f32 %v194, %v198
    %v202 = vlaneseq
    %v203 = vshrl.u32 %v202, 7
    %v204 = vsub.s32 0, %v203
    %v205 = vrot.slane %v190, %v204
    %v206 = vlaneseq
    %v207 = vshrl.u32 %v206, 7
    %v208 = vsub.s32 1, %v207
    %v209 = vrot.slane %v190, %v208
    %v212 = vmul.f32 %v205, %v199
    %v213 = vmul.f32 %v209, %v200
    %v214 = vadd.f32 %v212, 0.0
    %v215 = vadd.f32 %v213, 0.0
    %216 = vrot.lane.b32.xlu0 %v129, 49
    %v217 = vpop.permute.xlu0 %216
    %218 = vrot.lane.b32.xlu0 %v130, 49
    %v219 = vpop.permute.xlu0 %218
    %vm220 = vcmp.lt.s32.totalorder %v140, 49
    %v221 = vsel %vm220, %v217, %v219
    %v222 = vsel %vm220, %v219, %v217
    %223 = vrot.lane.b32.xlu0 %v131, 49
    %v224 = vpop.permute.xlu0 %223
    %225 = vrot.lane.b32.xlu0 %v132, 49
    %v226 = vpop.permute.xlu0 %225
    %v227 = vsel %vm220, %v224, %v226
    %v228 = vsel %vm220, %v226, %v224
    %s229 = scalar_lea.vmem [#allocation7], 2
    %v230 = vld [vmem:[%s229] ss:$8 sm:$0x3]
    %s231 = sld [smem:[#allocation3 + $0x2]]
    %v232 = vstv %s231
    %v233 = vmul.f32 %v232, %v222
    %v234 = vmul.f32 %v232, %v221
    %s235 = sld [smem:[#allocation3 + $0x33]]
    %v236 = vstv %s235
    %v237 = vmul.f32 %v236, %v228
    %v238 = vmul.f32 %v236, %v227
    %v239 = vadd.f32 %v233, %v237
    %v240 = vadd.f32 %v234, %v238
    %v242 = vlaneseq
    %v243 = vshrl.u32 %v242, 7
    %v244 = vsub.s32 0, %v243
    %v245 = vrot.slane %v230, %v244
    %v246 = vlaneseq
    %v247 = vshrl.u32 %v246, 7
    %v248 = vsub.s32 1, %v247
    %v249 = vrot.slane %v230, %v248
    %v252 = vmul.f32 %v245, %v239
    %v253 = vmul.f32 %v249, %v240
    %v254 = vadd.f32 %v174, %v252
    %v255 = vadd.f32 %v175, %v253
    %256 = vrot.lane.b32.xlu0 %v129, 48
    %v257 = vpop.permute.xlu0 %256
    %258 = vrot.lane.b32.xlu0 %v130, 48
    %v259 = vpop.permute.xlu0 %258
    %vm260 = vcmp.lt.s32.totalorder %v140, 48
    %v261 = vsel %vm260, %v257, %v259
    %v262 = vsel %vm260, %v259, %v257
    %263 = vrot.lane.b32.xlu0 %v131, 48
    %v264 = vpop.permute.xlu0 %263
    %265 = vrot.lane.b32.xlu0 %v132, 48
    %v266 = vpop.permute.xlu0 %265
    %v267 = vsel %vm260, %v264, %v266
    %v268 = vsel %vm260, %v266, %v264
    %s269 = scalar_lea.vmem [#allocation7], 3
    %v270 = vld [vmem:[%s269] ss:$8 sm:$0x3]
    %s271 = sld [smem:[#allocation3 + $0x3]]
    %v272 = vstv %s271
    %v273 = vmul.f32 %v272, %v262
    %v274 = vmul.f32 %v272, %v261
    %s275 = sld [smem:[#allocation3 + $0x34]]
    %v276 = vstv %s275
    %v277 = vmul.f32 %v276, %v268
    %v278 = vmul.f32 %v276, %v267
    %v279 = vadd.f32 %v273, %v277
    %v280 = vadd.f32 %v274, %v278
    %v282 = vlaneseq
    %v283 = vshrl.u32 %v282, 7
    %v284 = vsub.s32 0, %v283
    %v285 = vrot.slane %v270, %v284
    %v286 = vlaneseq
    %v287 = vshrl.u32 %v286, 7
    %v288 = vsub.s32 1, %v287
    %v289 = vrot.slane %v270, %v288
    %v292 = vmul.f32 %v285, %v279
    %v293 = vmul.f32 %v289, %v280
    %v294 = vadd.f32 %v214, %v292
    %v295 = vadd.f32 %v215, %v293
    %296 = vrot.lane.b32.xlu0 %v129, 47
    %v297 = vpop.permute.xlu0 %296
    %298 = vrot.lane.b32.xlu0 %v130, 47
    %v299 = vpop.permute.xlu0 %298
    %vm300 = vcmp.lt.s32.totalorder %v140, 47
    %v301 = vsel %vm300, %v297, %v299
    %v302 = vsel %vm300, %v299, %v297
    %303 = vrot.lane.b32.xlu0 %v131, 47
    %v304 = vpop.permute.xlu0 %303
    %305 = vrot.lane.b32.xlu0 %v132, 47
    %v306 = vpop.permute.xlu0 %305
    %v307 = vsel %vm300, %v304, %v306
    %v308 = vsel %vm300, %v306, %v304
    %s309 = scalar_lea.vmem [#allocation7], 4
    %v310 = vld [vmem:[%s309] ss:$8 sm:$0x3]
    %s311 = sld [smem:[#allocation3 + $0x4]]
    %v312 = vstv %s311
    %v313 = vmul.f32 %v312, %v302
    %v314 = vmul.f32 %v312, %v301
    %s315 = sld [smem:[#allocation3 + $0x35]]
    %v316 = vstv %s315
    %v317 = vmul.f32 %v316, %v308
    %v318 = vmul.f32 %v316, %v307
    %v319 = vadd.f32 %v313, %v317
    %v320 = vadd.f32 %v314, %v318
    %v322 = vlaneseq
    %v323 = vshrl.u32 %v322, 7
    %v324 = vsub.s32 0, %v323
    %v325 = vrot.slane %v310, %v324
    %v326 = vlaneseq
    %v327 = vshrl.u32 %v326, 7
    %v328 = vsub.s32 1, %v327
    %v329 = vrot.slane %v310, %v328
    %v332 = vmul.f32 %v325, %v319
    %v333 = vmul.f32 %v329, %v320
    %v334 = vadd.f32 %v254, %v332
    %v335 = vadd.f32 %v255, %v333
    %336 = vrot.lane.b32.xlu0 %v129, 46
    %v337 = vpop.permute.xlu0 %336
    %338 = vrot.lane.b32.xlu0 %v130, 46
    %v339 = vpop.permute.xlu0 %338
    %vm340 = vcmp.lt.s32.totalorder %v140, 46
    %v341 = vsel %vm340, %v337, %v339
    %v342 = vsel %vm340, %v339, %v337
    %343 = vrot.lane.b32.xlu0 %v131, 46
    %v344 = vpop.permute.xlu0 %343
    %345 = vrot.lane.b32.xlu0 %v132, 46
    %v346 = vpop.permute.xlu0 %345
    %v347 = vsel %vm340, %v344, %v346
    %v348 = vsel %vm340, %v346, %v344
    %s349 = scalar_lea.vmem [#allocation7], 5
    %v350 = vld [vmem:[%s349] ss:$8 sm:$0x3]
    %s351 = sld [smem:[#allocation3 + $0x5]]
    %v352 = vstv %s351
    %v353 = vmul.f32 %v352, %v342
    %v354 = vmul.f32 %v352, %v341
    %s355 = sld [smem:[#allocation3 + $0x36]]
    %v356 = vstv %s355
    %v357 = vmul.f32 %v356, %v348
    %v358 = vmul.f32 %v356, %v347
    %v359 = vadd.f32 %v353, %v357
    %v360 = vadd.f32 %v354, %v358
    %v362 = vlaneseq
    %v363 = vshrl.u32 %v362, 7
    %v364 = vsub.s32 0, %v363
    %v365 = vrot.slane %v350, %v364
    %v366 = vlaneseq
    %v367 = vshrl.u32 %v366, 7
    %v368 = vsub.s32 1, %v367
    %v369 = vrot.slane %v350, %v368
    %v372 = vmul.f32 %v365, %v359
    %v373 = vmul.f32 %v369, %v360
    %v374 = vadd.f32 %v294, %v372
    %v375 = vadd.f32 %v295, %v373
    %376 = vrot.lane.b32.xlu0 %v129, 45
    %v377 = vpop.permute.xlu0 %376
    %378 = vrot.lane.b32.xlu0 %v130, 45
    %v379 = vpop.permute.xlu0 %378
    %vm380 = vcmp.lt.s32.totalorder %v140, 45
    %v381 = vsel %vm380, %v377, %v379
    %v382 = vsel %vm380, %v379, %v377
    %383 = vrot.lane.b32.xlu0 %v131, 45
    %v384 = vpop.permute.xlu0 %383
    %385 = vrot.lane.b32.xlu0 %v132, 45
    %v386 = vpop.permute.xlu0 %385
    %v387 = vsel %vm380, %v384, %v386
    %v388 = vsel %vm380, %v386, %v384
    %s389 = scalar_lea.vmem [#allocation7], 6
    %v390 = vld [vmem:[%s389] ss:$8 sm:$0x3]
    %s391 = sld [smem:[#allocation3 + $0x6]]
    %v392 = vstv %s391
    %v393 = vmul.f32 %v392, %v382
    %v394 = vmul.f32 %v392, %v381
    %s395 = sld [smem:[#allocation3 + $0x37]]
    %v396 = vstv %s395
    %v397 = vmul.f32 %v396, %v388
    %v398 = vmul.f32 %v396, %v387
    %v399 = vadd.f32 %v393, %v397
    %v400 = vadd.f32 %v394, %v398
    %v402 = vlaneseq
    %v403 = vshrl.u32 %v402, 7
    %v404 = vsub.s32 0, %v403
    %v405 = vrot.slane %v390, %v404
    %v406 = vlaneseq
    %v407 = vshrl.u32 %v406, 7
    %v408 = vsub.s32 1, %v407
    %v409 = vrot.slane %v390, %v408
    %v412 = vmul.f32 %v405, %v399
    %v413 = vmul.f32 %v409, %v400
    %v414 = vadd.f32 %v334, %v412
    %v415 = vadd.f32 %v335, %v413
    %416 = vrot.lane.b32.xlu0 %v129, 35
    %v417 = vpop.permute.xlu0 %416
    %418 = vrot.lane.b32.xlu0 %v130, 35
    %v419 = vpop.permute.xlu0 %418
    %vm420 = vcmp.lt.s32.totalorder %v140, 35
    %v421 = vsel %vm420, %v417, %v419
    %v422 = vsel %vm420, %v419, %v417
    %423 = vrot.lane.b32.xlu0 %v131, 35
    %v424 = vpop.permute.xlu0 %423
    %425 = vrot.lane.b32.xlu0 %v132, 35
    %v426 = vpop.permute.xlu0 %425
    %v427 = vsel %vm420, %v424, %v426
    %v428 = vsel %vm420, %v426, %v424
    %s429 = scalar_lea.vmem [#allocation7], 7
    %v430 = vld [vmem:[%s429] ss:$8 sm:$0x3]
    %s431 = sld [smem:[#allocation3 + $0x7]]
    %v432 = vstv %s431
    %v433 = vmul.f32 %v432, %v422
    %v434 = vmul.f32 %v432, %v421
    %s435 = sld [smem:[#allocation3 + $0x38]]
    %v436 = vstv %s435
    %v437 = vmul.f32 %v436, %v428
    %v438 = vmul.f32 %v436, %v427
    %v439 = vadd.f32 %v433, %v437
    %v440 = vadd.f32 %v434, %v438
    %v442 = vlaneseq
    %v443 = vshrl.u32 %v442, 7
    %v444 = vsub.s32 0, %v443
    %v445 = vrot.slane %v430, %v444
    %v446 = vlaneseq
    %v447 = vshrl.u32 %v446, 7
    %v448 = vsub.s32 1, %v447
    %v449 = vrot.slane %v430, %v448
    %v452 = vmul.f32 %v445, %v439
    %v453 = vmul.f32 %v449, %v440
    %v454 = vadd.f32 %v374, %v452
    %v455 = vadd.f32 %v375, %v453
    %456 = vrot.lane.b32.xlu0 %v129, 34
    %v457 = vpop.permute.xlu0 %456
    %458 = vrot.lane.b32.xlu0 %v130, 34
    %v459 = vpop.permute.xlu0 %458
    %vm460 = vcmp.lt.s32.totalorder %v140, 34
    %v461 = vsel %vm460, %v457, %v459
    %v462 = vsel %vm460, %v459, %v457
    %463 = vrot.lane.b32.xlu0 %v131, 34
    %v464 = vpop.permute.xlu0 %463
    %465 = vrot.lane.b32.xlu0 %v132, 34
    %v466 = vpop.permute.xlu0 %465
    %v467 = vsel %vm460, %v464, %v466
    %v468 = vsel %vm460, %v466, %v464
    %s469 = scalar_lea.vmem [#allocation7], 16
    %v470 = vld [vmem:[%s469] ss:$8 sm:$0x3]
    %s471 = sld [smem:[#allocation3 + $0x8]]
    %v472 = vstv %s471
    %v473 = vmul.f32 %v472, %v462
    %v474 = vmul.f32 %v472, %v461
    %s475 = sld [smem:[#allocation3 + $0x39]]
    %v476 = vstv %s475
    %v477 = vmul.f32 %v476, %v468
    %v478 = vmul.f32 %v476, %v467
    %v479 = vadd.f32 %v473, %v477
    %v480 = vadd.f32 %v474, %v478
    %v482 = vlaneseq
    %v483 = vshrl.u32 %v482, 7
    %v484 = vsub.s32 0, %v483
    %v485 = vrot.slane %v470, %v484
    %v486 = vlaneseq
    %v487 = vshrl.u32 %v486, 7
    %v488 = vsub.s32 1, %v487
    %v489 = vrot.slane %v470, %v488
    %v492 = vmul.f32 %v485, %v479
    %v493 = vmul.f32 %v489, %v480
    %v494 = vadd.f32 %v414, %v492
    %v495 = vadd.f32 %v415, %v493
    %496 = vrot.lane.b32.xlu0 %v129, 33
    %v497 = vpop.permute.xlu0 %496
    %498 = vrot.lane.b32.xlu0 %v130, 33
    %v499 = vpop.permute.xlu0 %498
    %vm500 = vcmp.lt.s32.totalorder %v140, 33
    %v501 = vsel %vm500, %v497, %v499
    %v502 = vsel %vm500, %v499, %v497
    %503 = vrot.lane.b32.xlu0 %v131, 33
    %v504 = vpop.permute.xlu0 %503
    %505 = vrot.lane.b32.xlu0 %v132, 33
    %v506 = vpop.permute.xlu0 %505
    %v507 = vsel %vm500, %v504, %v506
    %v508 = vsel %vm500, %v506, %v504
    %s509 = scalar_lea.vmem [#allocation7], 17
    %v510 = vld [vmem:[%s509] ss:$8 sm:$0x3]
    %s511 = sld [smem:[#allocation3 + $0x9]]
    %v512 = vstv %s511
    %v513 = vmul.f32 %v512, %v502
    %v514 = vmul.f32 %v512, %v501
    %s515 = sld [smem:[#allocation3 + $0x3a]]
    %v516 = vstv %s515
    %v517 = vmul.f32 %v516, %v508
    %v518 = vmul.f32 %v516, %v507
    %v519 = vadd.f32 %v513, %v517
    %v520 = vadd.f32 %v514, %v518
    %v522 = vlaneseq
    %v523 = vshrl.u32 %v522, 7
    %v524 = vsub.s32 0, %v523
    %v525 = vrot.slane %v510, %v524
    %v526 = vlaneseq
    %v527 = vshrl.u32 %v526, 7
    %v528 = vsub.s32 1, %v527
    %v529 = vrot.slane %v510, %v528
    %v532 = vmul.f32 %v525, %v519
    %v533 = vmul.f32 %v529, %v520
    %v534 = vadd.f32 %v454, %v532
    %v535 = vadd.f32 %v455, %v533
    %536 = vrot.lane.b32.xlu0 %v129, 32
    %v537 = vpop.permute.xlu0 %536
    %538 = vrot.lane.b32.xlu0 %v130, 32
    %v539 = vpop.permute.xlu0 %538
    %vm540 = vcmp.lt.s32.totalorder %v140, 32
    %v541 = vsel %vm540, %v537, %v539
    %v542 = vsel %vm540, %v539, %v537
    %543 = vrot.lane.b32.xlu0 %v131, 32
    %v544 = vpop.permute.xlu0 %543
    %545 = vrot.lane.b32.xlu0 %v132, 32
    %v546 = vpop.permute.xlu0 %545
    %v547 = vsel %vm540, %v544, %v546
    %v548 = vsel %vm540, %v546, %v544
    %s549 = scalar_lea.vmem [#allocation7], 18
    %v550 = vld [vmem:[%s549] ss:$8 sm:$0x3]
    %s551 = sld [smem:[#allocation3 + $0xa]]
    %v552 = vstv %s551
    %v553 = vmul.f32 %v552, %v542
    %v554 = vmul.f32 %v552, %v541
    %s555 = sld [smem:[#allocation3 + $0x3b]]
    %v556 = vstv %s555
    %v557 = vmul.f32 %v556, %v548
    %v558 = vmul.f32 %v556, %v547
    %v559 = vadd.f32 %v553, %v557
    %v560 = vadd.f32 %v554, %v558
    %v562 = vlaneseq
    %v563 = vshrl.u32 %v562, 7
    %v564 = vsub.s32 0, %v563
    %v565 = vrot.slane %v550, %v564
    %v566 = vlaneseq
    %v567 = vshrl.u32 %v566, 7
    %v568 = vsub.s32 1, %v567
    %v569 = vrot.slane %v550, %v568
    %v572 = vmul.f32 %v565, %v559
    %v573 = vmul.f32 %v569, %v560
    %v574 = vadd.f32 %v494, %v572
    %v575 = vadd.f32 %v495, %v573
    %576 = vrot.lane.b32.xlu0 %v129, 31
    %v577 = vpop.permute.xlu0 %576
    %578 = vrot.lane.b32.xlu0 %v130, 31
    %v579 = vpop.permute.xlu0 %578
    %vm580 = vcmp.lt.s32.totalorder %v140, 31
    %v581 = vsel %vm580, %v577, %v579
    %v582 = vsel %vm580, %v579, %v577
    %583 = vrot.lane.b32.xlu0 %v131, 31
    %v584 = vpop.permute.xlu0 %583
    %585 = vrot.lane.b32.xlu0 %v132, 31
    %v586 = vpop.permute.xlu0 %585
    %v587 = vsel %vm580, %v584, %v586
    %v588 = vsel %vm580, %v586, %v584
    %s589 = scalar_lea.vmem [#allocation7], 19
    %v590 = vld [vmem:[%s589] ss:$8 sm:$0x3]
    %s591 = sld [smem:[#allocation3 + $0xb]]
    %v592 = vstv %s591
    %v593 = vmul.f32 %v592, %v582
    %v594 = vmul.f32 %v592, %v581
    %s595 = sld [smem:[#allocation3 + $0x3c]]
    %v596 = vstv %s595
    %v597 = vmul.f32 %v596, %v588
    %v598 = vmul.f32 %v596, %v587
    %v599 = vadd.f32 %v593, %v597
    %v600 = vadd.f32 %v594, %v598
    %v602 = vlaneseq
    %v603 = vshrl.u32 %v602, 7
    %v604 = vsub.s32 0, %v603
    %v605 = vrot.slane %v590, %v604
    %v606 = vlaneseq
    %v607 = vshrl.u32 %v606, 7
    %v608 = vsub.s32 1, %v607
    %v609 = vrot.slane %v590, %v608
    %v612 = vmul.f32 %v605, %v599
    %v613 = vmul.f32 %v609, %v600
    %v614 = vadd.f32 %v534, %v612
    %v615 = vadd.f32 %v535, %v613
    %616 = vrot.lane.b32.xlu0 %v129, 30
    %v617 = vpop.permute.xlu0 %616
    %618 = vrot.lane.b32.xlu0 %v130, 30
    %v619 = vpop.permute.xlu0 %618
    %vm620 = vcmp.lt.s32.totalorder %v140, 30
    %v621 = vsel %vm620, %v617, %v619
    %v622 = vsel %vm620, %v619, %v617
    %623 = vrot.lane.b32.xlu0 %v131, 30
    %v624 = vpop.permute.xlu0 %623
    %625 = vrot.lane.b32.xlu0 %v132, 30
    %v626 = vpop.permute.xlu0 %625
    %v627 = vsel %vm620, %v624, %v626
    %v628 = vsel %vm620, %v626, %v624
    %s629 = scalar_lea.vmem [#allocation7], 20
    %v630 = vld [vmem:[%s629] ss:$8 sm:$0x3]
    %s631 = sld [smem:[#allocation3 + $0xc]]
    %v632 = vstv %s631
    %v633 = vmul.f32 %v632, %v622
    %v634 = vmul.f32 %v632, %v621
    %s635 = sld [smem:[#allocation3 + $0x3d]]
    %v636 = vstv %s635
    %v637 = vmul.f32 %v636, %v628
    %v638 = vmul.f32 %v636, %v627
    %v639 = vadd.f32 %v633, %v637
    %v640 = vadd.f32 %v634, %v638
    %v642 = vlaneseq
    %v643 = vshrl.u32 %v642, 7
    %v644 = vsub.s32 0, %v643
    %v645 = vrot.slane %v630, %v644
    %v646 = vlaneseq
    %v647 = vshrl.u32 %v646, 7
    %v648 = vsub.s32 1, %v647
    %v649 = vrot.slane %v630, %v648
    %v652 = vmul.f32 %v645, %v639
    %v653 = vmul.f32 %v649, %v640
    %v654 = vadd.f32 %v574, %v652
    %v655 = vadd.f32 %v575, %v653
    %656 = vrot.lane.b32.xlu0 %v129, 29
    %v657 = vpop.permute.xlu0 %656
    %658 = vrot.lane.b32.xlu0 %v130, 29
    %v659 = vpop.permute.xlu0 %658
    %vm660 = vcmp.lt.s32.totalorder %v140, 29
    %v661 = vsel %vm660, %v657, %v659
    %v662 = vsel %vm660, %v659, %v657
    %663 = vrot.lane.b32.xlu0 %v131, 29
    %v664 = vpop.permute.xlu0 %663
    %665 = vrot.lane.b32.xlu0 %v132, 29
    %v666 = vpop.permute.xlu0 %665
    %v667 = vsel %vm660, %v664, %v666
    %v668 = vsel %vm660, %v666, %v664
    %s669 = scalar_lea.vmem [#allocation7], 21
    %v670 = vld [vmem:[%s669] ss:$8 sm:$0x3]
    %s671 = sld [smem:[#allocation3 + $0xd]]
    %v672 = vstv %s671
    %v673 = vmul.f32 %v672, %v662
    %v674 = vmul.f32 %v672, %v661
    %s675 = sld [smem:[#allocation3 + $0x3e]]
    %v676 = vstv %s675
    %v677 = vmul.f32 %v676, %v668
    %v678 = vmul.f32 %v676, %v667
    %v679 = vadd.f32 %v673, %v677
    %v680 = vadd.f32 %v674, %v678
    %v682 = vlaneseq
    %v683 = vshrl.u32 %v682, 7
    %v684 = vsub.s32 0, %v683
    %v685 = vrot.slane %v670, %v684
    %v686 = vlaneseq
    %v687 = vshrl.u32 %v686, 7
    %v688 = vsub.s32 1, %v687
    %v689 = vrot.slane %v670, %v688
    %v692 = vmul.f32 %v685, %v679
    %v693 = vmul.f32 %v689, %v680
    %v694 = vadd.f32 %v614, %v692
    %v695 = vadd.f32 %v615, %v693
    %696 = vrot.lane.b32.xlu0 %v129, 19
    %v697 = vpop.permute.xlu0 %696
    %698 = vrot.lane.b32.xlu0 %v130, 19
    %v699 = vpop.permute.xlu0 %698
    %vm700 = vcmp.lt.s32.totalorder %v140, 19
    %v701 = vsel %vm700, %v697, %v699
    %v702 = vsel %vm700, %v699, %v697
    %703 = vrot.lane.b32.xlu0 %v131, 19
    %v704 = vpop.permute.xlu0 %703
    %705 = vrot.lane.b32.xlu0 %v132, 19
    %v706 = vpop.permute.xlu0 %705
    %v707 = vsel %vm700, %v704, %v706
    %v708 = vsel %vm700, %v706, %v704
    %s709 = scalar_lea.vmem [#allocation7], 22
    %v710 = vld [vmem:[%s709] ss:$8 sm:$0x3]
    %s711 = sld [smem:[#allocation3 + $0xe]]
    %v712 = vstv %s711
    %v713 = vmul.f32 %v712, %v702
    %v714 = vmul.f32 %v712, %v701
    %s715 = sld [smem:[#allocation3 + $0x3f]]
    %v716 = vstv %s715
    %v717 = vmul.f32 %v716, %v708
    %v718 = vmul.f32 %v716, %v707
    %v719 = vadd.f32 %v713, %v717
    %v720 = vadd.f32 %v714, %v718
    %v722 = vlaneseq
    %v723 = vshrl.u32 %v722, 7
    %v724 = vsub.s32 0, %v723
    %v725 = vrot.slane %v710, %v724
    %v726 = vlaneseq
    %v727 = vshrl.u32 %v726, 7
    %v728 = vsub.s32 1, %v727
    %v729 = vrot.slane %v710, %v728
    %v732 = vmul.f32 %v725, %v719
    %v733 = vmul.f32 %v729, %v720
    %v734 = vadd.f32 %v654, %v732
    %v735 = vadd.f32 %v655, %v733
    %736 = vrot.lane.b32.xlu0 %v129, 18
    %v737 = vpop.permute.xlu0 %736
    %738 = vrot.lane.b32.xlu0 %v130, 18
    %v739 = vpop.permute.xlu0 %738
    %vm740 = vcmp.lt.s32.totalorder %v140, 18
    %v741 = vsel %vm740, %v737, %v739
    %v742 = vsel %vm740, %v739, %v737
    %743 = vrot.lane.b32.xlu0 %v131, 18
    %v744 = vpop.permute.xlu0 %743
    %745 = vrot.lane.b32.xlu0 %v132, 18
    %v746 = vpop.permute.xlu0 %745
    %v747 = vsel %vm740, %v744, %v746
    %v748 = vsel %vm740, %v746, %v744
    %s749 = scalar_lea.vmem [#allocation7], 23
    %v750 = vld [vmem:[%s749] ss:$8 sm:$0x3]
    %s751 = sld [smem:[#allocation3 + $0xf]]
    %v752 = vstv %s751
    %v753 = vmul.f32 %v752, %v742
    %v754 = vmul.f32 %v752, %v741
    %s755 = sld [smem:[#allocation3 + $0x40]]
    %v756 = vstv %s755
    %v757 = vmul.f32 %v756, %v748
    %v758 = vmul.f32 %v756, %v747
    %v759 = vadd.f32 %v753, %v757
    %v760 = vadd.f32 %v754, %v758
    %v762 = vlaneseq
    %v763 = vshrl.u32 %v762, 7
    %v764 = vsub.s32 0, %v763
    %v765 = vrot.slane %v750, %v764
    %v766 = vlaneseq
    %v767 = vshrl.u32 %v766, 7
    %v768 = vsub.s32 1, %v767
    %v769 = vrot.slane %v750, %v768
    %v772 = vmul.f32 %v765, %v759
    %v773 = vmul.f32 %v769, %v760
    %v774 = vadd.f32 %v694, %v772
    %v775 = vadd.f32 %v695, %v773
    %776 = vrot.lane.b32.xlu0 %v129, 17
    %v777 = vpop.permute.xlu0 %776
    %778 = vrot.lane.b32.xlu0 %v130, 17
    %v779 = vpop.permute.xlu0 %778
    %vm780 = vcmp.lt.s32.totalorder %v140, 17
    %v781 = vsel %vm780, %v777, %v779
    %v782 = vsel %vm780, %v779, %v777
    %783 = vrot.lane.b32.xlu0 %v131, 17
    %v784 = vpop.permute.xlu0 %783
    %785 = vrot.lane.b32.xlu0 %v132, 17
    %v786 = vpop.permute.xlu0 %785
    %v787 = vsel %vm780, %v784, %v786
    %v788 = vsel %vm780, %v786, %v784
    %s789 = scalar_lea.vmem [#allocation7], 32
    %v790 = vld [vmem:[%s789] ss:$8 sm:$0x3]
    %s791 = sld [smem:[#allocation3 + $0x10]]
    %v792 = vstv %s791
    %v793 = vmul.f32 %v792, %v782
    %v794 = vmul.f32 %v792, %v781
    %s795 = sld [smem:[#allocation3 + $0x41]]
    %v796 = vstv %s795
    %v797 = vmul.f32 %v796, %v788
    %v798 = vmul.f32 %v796, %v787
    %v799 = vadd.f32 %v793, %v797
    %v800 = vadd.f32 %v794, %v798
    %v802 = vlaneseq
    %v803 = vshrl.u32 %v802, 7
    %v804 = vsub.s32 0, %v803
    %v805 = vrot.slane %v790, %v804
    %v806 = vlaneseq
    %v807 = vshrl.u32 %v806, 7
    %v808 = vsub.s32 1, %v807
    %v809 = vrot.slane %v790, %v808
    %v812 = vmul.f32 %v805, %v799
    %v813 = vmul.f32 %v809, %v800
    %v814 = vadd.f32 %v734, %v812
    %v815 = vadd.f32 %v735, %v813
    %816 = vrot.lane.b32.xlu0 %v129, 16
    %v817 = vpop.permute.xlu0 %816
    %818 = vrot.lane.b32.xlu0 %v130, 16
    %v819 = vpop.permute.xlu0 %818
    %vm820 = vcmp.lt.s32.totalorder %v140, 16
    %v821 = vsel %vm820, %v817, %v819
    %v822 = vsel %vm820, %v819, %v817
    %823 = vrot.lane.b32.xlu0 %v131, 16
    %v824 = vpop.permute.xlu0 %823
    %825 = vrot.lane.b32.xlu0 %v132, 16
    %v826 = vpop.permute.xlu0 %825
    %v827 = vsel %vm820, %v824, %v826
    %v828 = vsel %vm820, %v826, %v824
    %s829 = scalar_lea.vmem [#allocation7], 33
    %v830 = vld [vmem:[%s829] ss:$8 sm:$0x3]
    %s831 = sld [smem:[#allocation3 + $0x11]]
    %v832 = vstv %s831
    %v833 = vmul.f32 %v832, %v822
    %v834 = vmul.f32 %v832, %v821
    %s835 = sld [smem:[#allocation3 + $0x42]]
    %v836 = vstv %s835
    %v837 = vmul.f32 %v836, %v828
    %v838 = vmul.f32 %v836, %v827
    %v839 = vadd.f32 %v833, %v837
    %v840 = vadd.f32 %v834, %v838
    %v842 = vlaneseq
    %v843 = vshrl.u32 %v842, 7
    %v844 = vsub.s32 0, %v843
    %v845 = vrot.slane %v830, %v844
    %v846 = vlaneseq
    %v847 = vshrl.u32 %v846, 7
    %v848 = vsub.s32 1, %v847
    %v849 = vrot.slane %v830, %v848
    %v852 = vmul.f32 %v845, %v839
    %v853 = vmul.f32 %v849, %v840
    %v854 = vadd.f32 %v774, %v852
    %v855 = vadd.f32 %v775, %v853
    %856 = vrot.lane.b32.xlu0 %v129, 15
    %v857 = vpop.permute.xlu0 %856
    %858 = vrot.lane.b32.xlu0 %v130, 15
    %v859 = vpop.permute.xlu0 %858
    %vm860 = vcmp.lt.s32.totalorder %v140, 15
    %v861 = vsel %vm860, %v857, %v859
    %v862 = vsel %vm860, %v859, %v857
    %863 = vrot.lane.b32.xlu0 %v131, 15
    %v864 = vpop.permute.xlu0 %863
    %865 = vrot.lane.b32.xlu0 %v132, 15
    %v866 = vpop.permute.xlu0 %865
    %v867 = vsel %vm860, %v864, %v866
    %v868 = vsel %vm860, %v866, %v864
    %s869 = scalar_lea.vmem [#allocation7], 34
    %v870 = vld [vmem:[%s869] ss:$8 sm:$0x3]
    %s871 = sld [smem:[#allocation3 + $0x12]]
    %v872 = vstv %s871
    %v873 = vmul.f32 %v872, %v862
    %v874 = vmul.f32 %v872, %v861
    %s875 = sld [smem:[#allocation3 + $0x43]]
    %v876 = vstv %s875
    %v877 = vmul.f32 %v876, %v868
    %v878 = vmul.f32 %v876, %v867
    %v879 = vadd.f32 %v873, %v877
    %v880 = vadd.f32 %v874, %v878
    %v882 = vlaneseq
    %v883 = vshrl.u32 %v882, 7
    %v884 = vsub.s32 0, %v883
    %v885 = vrot.slane %v870, %v884
    %v886 = vlaneseq
    %v887 = vshrl.u32 %v886, 7
    %v888 = vsub.s32 1, %v887
    %v889 = vrot.slane %v870, %v888
    %v892 = vmul.f32 %v885, %v879
    %v893 = vmul.f32 %v889, %v880
    %v894 = vadd.f32 %v814, %v892
    %v895 = vadd.f32 %v815, %v893
    %896 = vrot.lane.b32.xlu0 %v129, 14
    %v897 = vpop.permute.xlu0 %896
    %898 = vrot.lane.b32.xlu0 %v130, 14
    %v899 = vpop.permute.xlu0 %898
    %vm900 = vcmp.lt.s32.totalorder %v140, 14
    %v901 = vsel %vm900, %v897, %v899
    %v902 = vsel %vm900, %v899, %v897
    %903 = vrot.lane.b32.xlu0 %v131, 14
    %v904 = vpop.permute.xlu0 %903
    %905 = vrot.lane.b32.xlu0 %v132, 14
    %v906 = vpop.permute.xlu0 %905
    %v907 = vsel %vm900, %v904, %v906
    %v908 = vsel %vm900, %v906, %v904
    %s909 = scalar_lea.vmem [#allocation7], 35
    %v910 = vld [vmem:[%s909] ss:$8 sm:$0x3]
    %s911 = sld [smem:[#allocation3 + $0x13]]
    %v912 = vstv %s911
    %v913 = vmul.f32 %v912, %v902
    %v914 = vmul.f32 %v912, %v901
    %s915 = sld [smem:[#allocation3 + $0x44]]
    %v916 = vstv %s915
    %v917 = vmul.f32 %v916, %v908
    %v918 = vmul.f32 %v916, %v907
    %v919 = vadd.f32 %v913, %v917
    %v920 = vadd.f32 %v914, %v918
    %v922 = vlaneseq
    %v923 = vshrl.u32 %v922, 7
    %v924 = vsub.s32 0, %v923
    %v925 = vrot.slane %v910, %v924
    %v926 = vlaneseq
    %v927 = vshrl.u32 %v926, 7
    %v928 = vsub.s32 1, %v927
    %v929 = vrot.slane %v910, %v928
    %v932 = vmul.f32 %v925, %v919
    %v933 = vmul.f32 %v929, %v920
    %v934 = vadd.f32 %v854, %v932
    %v935 = vadd.f32 %v855, %v933
    %936 = vrot.lane.b32.xlu0 %v129, 13
    %v937 = vpop.permute.xlu0 %936
    %938 = vrot.lane.b32.xlu0 %v130, 13
    %v939 = vpop.permute.xlu0 %938
    %vm940 = vcmp.lt.s32.totalorder %v140, 13
    %v941 = vsel %vm940, %v937, %v939
    %v942 = vsel %vm940, %v939, %v937
    %943 = vrot.lane.b32.xlu0 %v131, 13
    %v944 = vpop.permute.xlu0 %943
    %945 = vrot.lane.b32.xlu0 %v132, 13
    %v946 = vpop.permute.xlu0 %945
    %v947 = vsel %vm940, %v944, %v946
    %v948 = vsel %vm940, %v946, %v944
    %s949 = scalar_lea.vmem [#allocation7], 36
    %v950 = vld [vmem:[%s949] ss:$8 sm:$0x3]
    %s951 = sld [smem:[#allocation3 + $0x14]]
    %v952 = vstv %s951
    %v953 = vmul.f32 %v952, %v942
    %v954 = vmul.f32 %v952, %v941
    %s955 = sld [smem:[#allocation3 + $0x45]]
    %v956 = vstv %s955
    %v957 = vmul.f32 %v956, %v948
    %v958 = vmul.f32 %v956, %v947
    %v959 = vadd.f32 %v953, %v957
    %v960 = vadd.f32 %v954, %v958
    %v962 = vlaneseq
    %v963 = vshrl.u32 %v962, 7
    %v964 = vsub.s32 0, %v963
    %v965 = vrot.slane %v950, %v964
    %v966 = vlaneseq
    %v967 = vshrl.u32 %v966, 7
    %v968 = vsub.s32 1, %v967
    %v969 = vrot.slane %v950, %v968
    %v972 = vmul.f32 %v965, %v959
    %v973 = vmul.f32 %v969, %v960
    %v974 = vadd.f32 %v894, %v972
    %v975 = vadd.f32 %v895, %v973
    %976 = vrot.lane.b32.xlu0 %v129, 3
    %v977 = vpop.permute.xlu0 %976
    %978 = vrot.lane.b32.xlu0 %v130, 3
    %v979 = vpop.permute.xlu0 %978
    %vm980 = vcmp.lt.s32.totalorder %v140, 3
    %v981 = vsel %vm980, %v977, %v979
    %v982 = vsel %vm980, %v979, %v977
    %983 = vrot.lane.b32.xlu0 %v131, 3
    %v984 = vpop.permute.xlu0 %983
    %985 = vrot.lane.b32.xlu0 %v132, 3
    %v986 = vpop.permute.xlu0 %985
    %v987 = vsel %vm980, %v984, %v986
    %v988 = vsel %vm980, %v986, %v984
    %s989 = scalar_lea.vmem [#allocation7], 37
    %v990 = vld [vmem:[%s989] ss:$8 sm:$0x3]
    %s991 = sld [smem:[#allocation3 + $0x15]]
    %v992 = vstv %s991
    %v993 = vmul.f32 %v992, %v982
    %v994 = vmul.f32 %v992, %v981
    %s995 = sld [smem:[#allocation3 + $0x46]]
    %v996 = vstv %s995
    %v997 = vmul.f32 %v996, %v988
    %v998 = vmul.f32 %v996, %v987
    %v999 = vadd.f32 %v993, %v997
    %v1000 = vadd.f32 %v994, %v998
    %v1002 = vlaneseq
    %v1003 = vshrl.u32 %v1002, 7
    %v1004 = vsub.s32 0, %v1003
    %v1005 = vrot.slane %v990, %v1004
    %v1006 = vlaneseq
    %v1007 = vshrl.u32 %v1006, 7
    %v1008 = vsub.s32 1, %v1007
    %v1009 = vrot.slane %v990, %v1008
    %v1012 = vmul.f32 %v1005, %v999
    %v1013 = vmul.f32 %v1009, %v1000
    %v1014 = vadd.f32 %v934, %v1012
    %v1015 = vadd.f32 %v935, %v1013
    %1016 = vrot.lane.b32.xlu0 %v129, 2
    %v1017 = vpop.permute.xlu0 %1016
    %1018 = vrot.lane.b32.xlu0 %v130, 2
    %v1019 = vpop.permute.xlu0 %1018
    %vm1020 = vcmp.lt.s32.totalorder %v140, 2
    %v1021 = vsel %vm1020, %v1017, %v1019
    %v1022 = vsel %vm1020, %v1019, %v1017
    %1023 = vrot.lane.b32.xlu0 %v131, 2
    %v1024 = vpop.permute.xlu0 %1023
    %1025 = vrot.lane.b32.xlu0 %v132, 2
    %v1026 = vpop.permute.xlu0 %1025
    %v1027 = vsel %vm1020, %v1024, %v1026
    %v1028 = vsel %vm1020, %v1026, %v1024
    %s1029 = scalar_lea.vmem [#allocation7], 38
    %v1030 = vld [vmem:[%s1029] ss:$8 sm:$0x3]
    %s1031 = sld [smem:[#allocation3 + $0x16]]
    %v1032 = vstv %s1031
    %v1033 = vmul.f32 %v1032, %v1022
    %v1034 = vmul.f32 %v1032, %v1021
    %s1035 = sld [smem:[#allocation3 + $0x47]]
    %v1036 = vstv %s1035
    %v1037 = vmul.f32 %v1036, %v1028
    %v1038 = vmul.f32 %v1036, %v1027
    %v1039 = vadd.f32 %v1033, %v1037
    %v1040 = vadd.f32 %v1034, %v1038
    %v1042 = vlaneseq
    %v1043 = vshrl.u32 %v1042, 7
    %v1044 = vsub.s32 0, %v1043
    %v1045 = vrot.slane %v1030, %v1044
    %v1046 = vlaneseq
    %v1047 = vshrl.u32 %v1046, 7
    %v1048 = vsub.s32 1, %v1047
    %v1049 = vrot.slane %v1030, %v1048
    %v1052 = vmul.f32 %v1045, %v1039
    %v1053 = vmul.f32 %v1049, %v1040
    %v1054 = vadd.f32 %v974, %v1052
    %v1055 = vadd.f32 %v975, %v1053
    %1056 = vrot.lane.b32.xlu0 %v129, 1
    %v1057 = vpop.permute.xlu0 %1056
    %1058 = vrot.lane.b32.xlu0 %v130, 1
    %v1059 = vpop.permute.xlu0 %1058
    %vm1060 = vcmp.lt.s32.totalorder %v140, 1
    %v1061 = vsel %vm1060, %v1057, %v1059
    %v1062 = vsel %vm1060, %v1059, %v1057
    %1063 = vrot.lane.b32.xlu0 %v131, 1
    %v1064 = vpop.permute.xlu0 %1063
    %1065 = vrot.lane.b32.xlu0 %v132, 1
    %v1066 = vpop.permute.xlu0 %1065
    %v1067 = vsel %vm1060, %v1064, %v1066
    %v1068 = vsel %vm1060, %v1066, %v1064
    %s1069 = scalar_lea.vmem [#allocation7], 39
    %v1070 = vld [vmem:[%s1069] ss:$8 sm:$0x3]
    %s1071 = sld [smem:[#allocation3 + $0x17]]
    %v1072 = vstv %s1071
    %v1073 = vmul.f32 %v1072, %v1062
    %v1074 = vmul.f32 %v1072, %v1061
    %s1075 = sld [smem:[#allocation3 + $0x48]]
    %v1076 = vstv %s1075
    %v1077 = vmul.f32 %v1076, %v1068
    %v1078 = vmul.f32 %v1076, %v1067
    %v1079 = vadd.f32 %v1073, %v1077
    %v1080 = vadd.f32 %v1074, %v1078
    %v1082 = vlaneseq
    %v1083 = vshrl.u32 %v1082, 7
    %v1084 = vsub.s32 0, %v1083
    %v1085 = vrot.slane %v1070, %v1084
    %v1086 = vlaneseq
    %v1087 = vshrl.u32 %v1086, 7
    %v1088 = vsub.s32 1, %v1087
    %v1089 = vrot.slane %v1070, %v1088
    %v1092 = vmul.f32 %v1085, %v1079
    %v1093 = vmul.f32 %v1089, %v1080
    %v1094 = vadd.f32 %v1014, %v1092
    %v1095 = vadd.f32 %v1015, %v1093
    %s1096 = scalar_lea.vmem [#allocation7], 48
    %v1097 = vld [vmem:[%s1096] ss:$8 sm:$0x3]
    %s1098 = sld [smem:[#allocation3 + $0x18]]
    %v1099 = vstv %s1098
    %v1100 = vmul.f32 %v1099, %v129
    %v1101 = vmul.f32 %v1099, %v130
    %s1102 = sld [smem:[#allocation3 + $0x49]]
    %v1103 = vstv %s1102
    %v1104 = vmul.f32 %v1103, %v131
    %v1105 = vmul.f32 %v1103, %v132
    %v1106 = vadd.f32 %v1100, %v1104
    %v1107 = vadd.f32 %v1101, %v1105
    %v1109 = vlaneseq
    %v1110 = vshrl.u32 %v1109, 7
    %v1111 = vsub.s32 0, %v1110
    %v1112 = vrot.slane %v1097, %v1111
    %v1113 = vlaneseq
    %v1114 = vshrl.u32 %v1113, 7
    %v1115 = vsub.s32 1, %v1114
    %v1116 = vrot.slane %v1097, %v1115
    %v1119 = vmul.f32 %v1112, %v1106
    %v1120 = vmul.f32 %v1116, %v1107
    %v1121 = vadd.f32 %v1054, %v1119
    %v1122 = vadd.f32 %v1055, %v1120
    %1123 = vrot.lane.b32.xlu0 %v129, 127
    %v1124 = vpop.permute.xlu0 %1123
    %1125 = vrot.lane.b32.xlu0 %v130, 127
    %v1126 = vpop.permute.xlu0 %1125
    %vm1127 = vcmp.lt.s32.totalorder %v140, 127
    %v1128 = vsel %vm1127, %v1124, %v1126
    %v1129 = vsel %vm1127, %v1126, %v1124
    %1130 = vrot.lane.b32.xlu0 %v131, 127
    %v1131 = vpop.permute.xlu0 %1130
    %1132 = vrot.lane.b32.xlu0 %v132, 127
    %v1133 = vpop.permute.xlu0 %1132
    %v1134 = vsel %vm1127, %v1131, %v1133
    %v1135 = vsel %vm1127, %v1133, %v1131
    %s1136 = scalar_lea.vmem [#allocation7], 49
    %v1137 = vld [vmem:[%s1136] ss:$8 sm:$0x3]
    %s1138 = sld [smem:[#allocation3 + $0x19]]
    %v1139 = vstv %s1138
    %v1140 = vmul.f32 %v1139, %v1128
    %v1141 = vmul.f32 %v1139, %v1129
    %s1142 = sld [smem:[#allocation3 + $0x4a]]
    %v1143 = vstv %s1142
    %v1144 = vmul.f32 %v1143, %v1134
    %v1145 = vmul.f32 %v1143, %v1135
    %v1146 = vadd.f32 %v1140, %v1144
    %v1147 = vadd.f32 %v1141, %v1145
    %v1149 = vlaneseq
    %v1150 = vshrl.u32 %v1149, 7
    %v1151 = vsub.s32 0, %v1150
    %v1152 = vrot.slane %v1137, %v1151
    %v1153 = vlaneseq
    %v1154 = vshrl.u32 %v1153, 7
    %v1155 = vsub.s32 1, %v1154
    %v1156 = vrot.slane %v1137, %v1155
    %v1159 = vmul.f32 %v1152, %v1146
    %v1160 = vmul.f32 %v1156, %v1147
    %v1161 = vadd.f32 %v1094, %v1159
    %v1162 = vadd.f32 %v1095, %v1160
    %1163 = vrot.lane.b32.xlu0 %v129, 126
    %v1164 = vpop.permute.xlu0 %1163
    %1165 = vrot.lane.b32.xlu0 %v130, 126
    %v1166 = vpop.permute.xlu0 %1165
    %vm1167 = vcmp.lt.s32.totalorder %v140, 126
    %v1168 = vsel %vm1167, %v1164, %v1166
    %v1169 = vsel %vm1167, %v1166, %v1164
    %1170 = vrot.lane.b32.xlu0 %v131, 126
    %v1171 = vpop.permute.xlu0 %1170
    %1172 = vrot.lane.b32.xlu0 %v132, 126
    %v1173 = vpop.permute.xlu0 %1172
    %v1174 = vsel %vm1167, %v1171, %v1173
    %v1175 = vsel %vm1167, %v1173, %v1171
    %s1176 = scalar_lea.vmem [#allocation7], 50
    %v1177 = vld [vmem:[%s1176] ss:$8 sm:$0x3]
    %s1178 = sld [smem:[#allocation3 + $0x1a]]
    %v1179 = vstv %s1178
    %v1180 = vmul.f32 %v1179, %v1168
    %v1181 = vmul.f32 %v1179, %v1169
    %s1182 = sld [smem:[#allocation3 + $0x4b]]
    %v1183 = vstv %s1182
    %v1184 = vmul.f32 %v1183, %v1174
    %v1185 = vmul.f32 %v1183, %v1175
    %v1186 = vadd.f32 %v1180, %v1184
    %v1187 = vadd.f32 %v1181, %v1185
    %v1189 = vlaneseq
    %v1190 = vshrl.u32 %v1189, 7
    %v1191 = vsub.s32 0, %v1190
    %v1192 = vrot.slane %v1177, %v1191
    %v1193 = vlaneseq
    %v1194 = vshrl.u32 %v1193, 7
    %v1195 = vsub.s32 1, %v1194
    %v1196 = vrot.slane %v1177, %v1195
    %v1199 = vmul.f32 %v1192, %v1186
    %v1200 = vmul.f32 %v1196, %v1187
    %v1201 = vadd.f32 %v1121, %v1199
    %v1202 = vadd.f32 %v1122, %v1200
    %1203 = vrot.lane.b32.xlu0 %v129, 125
    %v1204 = vpop.permute.xlu0 %1203
    %1205 = vrot.lane.b32.xlu0 %v130, 125
    %v1206 = vpop.permute.xlu0 %1205
    %vm1207 = vcmp.lt.s32.totalorder %v140, 125
    %v1208 = vsel %vm1207, %v1204, %v1206
    %v1209 = vsel %vm1207, %v1206, %v1204
    %1210 = vrot.lane.b32.xlu0 %v131, 125
    %v1211 = vpop.permute.xlu0 %1210
    %1212 = vrot.lane.b32.xlu0 %v132, 125
    %v1213 = vpop.permute.xlu0 %1212
    %v1214 = vsel %vm1207, %v1211, %v1213
    %v1215 = vsel %vm1207, %v1213, %v1211
    %s1216 = scalar_lea.vmem [#allocation7], 51
    %v1217 = vld [vmem:[%s1216] ss:$8 sm:$0x3]
    %s1218 = sld [smem:[#allocation3 + $0x1b]]
    %v1219 = vstv %s1218
    %v1220 = vmul.f32 %v1219, %v1208
    %v1221 = vmul.f32 %v1219, %v1209
    %s1222 = sld [smem:[#allocation3 + $0x4c]]
    %v1223 = vstv %s1222
    %v1224 = vmul.f32 %v1223, %v1214
    %v1225 = vmul.f32 %v1223, %v1215
    %v1226 = vadd.f32 %v1220, %v1224
    %v1227 = vadd.f32 %v1221, %v1225
    %v1229 = vlaneseq
    %v1230 = vshrl.u32 %v1229, 7
    %v1231 = vsub.s32 0, %v1230
    %v1232 = vrot.slane %v1217, %v1231
    %v1233 = vlaneseq
    %v1234 = vshrl.u32 %v1233, 7
    %v1235 = vsub.s32 1, %v1234
    %v1236 = vrot.slane %v1217, %v1235
    %v1239 = vmul.f32 %v1232, %v1226
    %v1240 = vmul.f32 %v1236, %v1227
    %v1241 = vadd.f32 %v1161, %v1239
    %v1242 = vadd.f32 %v1162, %v1240
    %1243 = vrot.lane.b32.xlu0 %v129, 115
    %v1244 = vpop.permute.xlu0 %1243
    %1245 = vrot.lane.b32.xlu0 %v130, 115
    %v1246 = vpop.permute.xlu0 %1245
    %vm1247 = vcmp.lt.s32.totalorder %v140, 115
    %v1248 = vsel %vm1247, %v1244, %v1246
    %v1249 = vsel %vm1247, %v1246, %v1244
    %1250 = vrot.lane.b32.xlu0 %v131, 115
    %v1251 = vpop.permute.xlu0 %1250
    %1252 = vrot.lane.b32.xlu0 %v132, 115
    %v1253 = vpop.permute.xlu0 %1252
    %v1254 = vsel %vm1247, %v1251, %v1253
    %v1255 = vsel %vm1247, %v1253, %v1251
    %s1256 = scalar_lea.vmem [#allocation7], 52
    %v1257 = vld [vmem:[%s1256] ss:$8 sm:$0x3]
    %s1258 = sld [smem:[#allocation3 + $0x1c]]
    %v1259 = vstv %s1258
    %v1260 = vmul.f32 %v1259, %v1248
    %v1261 = vmul.f32 %v1259, %v1249
    %s1262 = sld [smem:[#allocation3 + $0x4d]]
    %v1263 = vstv %s1262
    %v1264 = vmul.f32 %v1263, %v1254
    %v1265 = vmul.f32 %v1263, %v1255
    %v1266 = vadd.f32 %v1260, %v1264
    %v1267 = vadd.f32 %v1261, %v1265
    %v1269 = vlaneseq
    %v1270 = vshrl.u32 %v1269, 7
    %v1271 = vsub.s32 0, %v1270
    %v1272 = vrot.slane %v1257, %v1271
    %v1273 = vlaneseq
    %v1274 = vshrl.u32 %v1273, 7
    %v1275 = vsub.s32 1, %v1274
    %v1276 = vrot.slane %v1257, %v1275
    %v1279 = vmul.f32 %v1272, %v1266
    %v1280 = vmul.f32 %v1276, %v1267
    %v1281 = vadd.f32 %v1201, %v1279
    %v1282 = vadd.f32 %v1202, %v1280
    %1283 = vrot.lane.b32.xlu0 %v129, 114
    %v1284 = vpop.permute.xlu0 %1283
    %1285 = vrot.lane.b32.xlu0 %v130, 114
    %v1286 = vpop.permute.xlu0 %1285
    %vm1287 = vcmp.lt.s32.totalorder %v140, 114
    %v1288 = vsel %vm1287, %v1284, %v1286
    %v1289 = vsel %vm1287, %v1286, %v1284
    %1290 = vrot.lane.b32.xlu0 %v131, 114
    %v1291 = vpop.permute.xlu0 %1290
    %1292 = vrot.lane.b32.xlu0 %v132, 114
    %v1293 = vpop.permute.xlu0 %1292
    %v1294 = vsel %vm1287, %v1291, %v1293
    %v1295 = vsel %vm1287, %v1293, %v1291
    %s1296 = scalar_lea.vmem [#allocation7], 53
    %v1297 = vld [vmem:[%s1296] ss:$8 sm:$0x3]
    %s1298 = sld [smem:[#allocation3 + $0x1d]]
    %v1299 = vstv %s1298
    %v1300 = vmul.f32 %v1299, %v1288
    %v1301 = vmul.f32 %v1299, %v1289
    %s1302 = sld [smem:[#allocation3 + $0x4e]]
    %v1303 = vstv %s1302
    %v1304 = vmul.f32 %v1303, %v1294
    %v1305 = vmul.f32 %v1303, %v1295
    %v1306 = vadd.f32 %v1300, %v1304
    %v1307 = vadd.f32 %v1301, %v1305
    %v1309 = vlaneseq
    %v1310 = vshrl.u32 %v1309, 7
    %v1311 = vsub.s32 0, %v1310
    %v1312 = vrot.slane %v1297, %v1311
    %v1313 = vlaneseq
    %v1314 = vshrl.u32 %v1313, 7
    %v1315 = vsub.s32 1, %v1314
    %v1316 = vrot.slane %v1297, %v1315
    %v1319 = vmul.f32 %v1312, %v1306
    %v1320 = vmul.f32 %v1316, %v1307
    %v1321 = vadd.f32 %v1241, %v1319
    %v1322 = vadd.f32 %v1242, %v1320
    %1323 = vrot.lane.b32.xlu0 %v129, 113
    %v1324 = vpop.permute.xlu0 %1323
    %1325 = vrot.lane.b32.xlu0 %v130, 113
    %v1326 = vpop.permute.xlu0 %1325
    %vm1327 = vcmp.lt.s32.totalorder %v140, 113
    %v1328 = vsel %vm1327, %v1324, %v1326
    %v1329 = vsel %vm1327, %v1326, %v1324
    %1330 = vrot.lane.b32.xlu0 %v131, 113
    %v1331 = vpop.permute.xlu0 %1330
    %1332 = vrot.lane.b32.xlu0 %v132, 113
    %v1333 = vpop.permute.xlu0 %1332
    %v1334 = vsel %vm1327, %v1331, %v1333
    %v1335 = vsel %vm1327, %v1333, %v1331
    %s1336 = scalar_lea.vmem [#allocation7], 54
    %v1337 = vld [vmem:[%s1336] ss:$8 sm:$0x3]
    %s1338 = sld [smem:[#allocation3 + $0x1e]]
    %v1339 = vstv %s1338
    %v1340 = vmul.f32 %v1339, %v1328
    %v1341 = vmul.f32 %v1339, %v1329
    %s1342 = sld [smem:[#allocation3 + $0x4f]]
    %v1343 = vstv %s1342
    %v1344 = vmul.f32 %v1343, %v1334
    %v1345 = vmul.f32 %v1343, %v1335
    %v1346 = vadd.f32 %v1340, %v1344
    %v1347 = vadd.f32 %v1341, %v1345
    %v1349 = vlaneseq
    %v1350 = vshrl.u32 %v1349, 7
    %v1351 = vsub.s32 0, %v1350
    %v1352 = vrot.slane %v1337, %v1351
    %v1353 = vlaneseq
    %v1354 = vshrl.u32 %v1353, 7
    %v1355 = vsub.s32 1, %v1354
    %v1356 = vrot.slane %v1337, %v1355
    %v1359 = vmul.f32 %v1352, %v1346
    %v1360 = vmul.f32 %v1356, %v1347
    %v1361 = vadd.f32 %v1281, %v1359
    %v1362 = vadd.f32 %v1282, %v1360
    %1363 = vrot.lane.b32.xlu0 %v129, 112
    %v1364 = vpop.permute.xlu0 %1363
    %1365 = vrot.lane.b32.xlu0 %v130, 112
    %v1366 = vpop.permute.xlu0 %1365
    %vm1367 = vcmp.lt.s32.totalorder %v140, 112
    %v1368 = vsel %vm1367, %v1364, %v1366
    %v1369 = vsel %vm1367, %v1366, %v1364
    %1370 = vrot.lane.b32.xlu0 %v131, 112
    %v1371 = vpop.permute.xlu0 %1370
    %1372 = vrot.lane.b32.xlu0 %v132, 112
    %v1373 = vpop.permute.xlu0 %1372
    %v1374 = vsel %vm1367, %v1371, %v1373
    %v1375 = vsel %vm1367, %v1373, %v1371
    %s1376 = scalar_lea.vmem [#allocation7], 55
    %v1377 = vld [vmem:[%s1376] ss:$8 sm:$0x3]
    %s1378 = sld [smem:[#allocation3 + $0x1f]]
    %v1379 = vstv %s1378
    %v1380 = vmul.f32 %v1379, %v1368
    %v1381 = vmul.f32 %v1379, %v1369
    %s1382 = sld [smem:[#allocation3 + $0x50]]
    %v1383 = vstv %s1382
    %v1384 = vmul.f32 %v1383, %v1374
    %v1385 = vmul.f32 %v1383, %v1375
    %v1386 = vadd.f32 %v1380, %v1384
    %v1387 = vadd.f32 %v1381, %v1385
    %v1389 = vlaneseq
    %v1390 = vshrl.u32 %v1389, 7
    %v1391 = vsub.s32 0, %v1390
    %v1392 = vrot.slane %v1377, %v1391
    %v1393 = vlaneseq
    %v1394 = vshrl.u32 %v1393, 7
    %v1395 = vsub.s32 1, %v1394
    %v1396 = vrot.slane %v1377, %v1395
    %v1399 = vmul.f32 %v1392, %v1386
    %v1400 = vmul.f32 %v1396, %v1387
    %v1401 = vadd.f32 %v1321, %v1399
    %v1402 = vadd.f32 %v1322, %v1400
    %1403 = vrot.lane.b32.xlu0 %v129, 111
    %v1404 = vpop.permute.xlu0 %1403
    %1405 = vrot.lane.b32.xlu0 %v130, 111
    %v1406 = vpop.permute.xlu0 %1405
    %vm1407 = vcmp.lt.s32.totalorder %v140, 111
    %v1408 = vsel %vm1407, %v1404, %v1406
    %v1409 = vsel %vm1407, %v1406, %v1404
    %1410 = vrot.lane.b32.xlu0 %v131, 111
    %v1411 = vpop.permute.xlu0 %1410
    %1412 = vrot.lane.b32.xlu0 %v132, 111
    %v1413 = vpop.permute.xlu0 %1412
    %v1414 = vsel %vm1407, %v1411, %v1413
    %v1415 = vsel %vm1407, %v1413, %v1411
    %s1416 = scalar_lea.vmem [#allocation7], 64
    %v1417 = vld [vmem:[%s1416] ss:$8 sm:$0x3]
    %s1418 = sld [smem:[#allocation3 + $0x20]]
    %v1419 = vstv %s1418
    %v1420 = vmul.f32 %v1419, %v1408
    %v1421 = vmul.f32 %v1419, %v1409
    %s1422 = sld [smem:[#allocation3 + $0x51]]
    %v1423 = vstv %s1422
    %v1424 = vmul.f32 %v1423, %v1414
    %v1425 = vmul.f32 %v1423, %v1415
    %v1426 = vadd.f32 %v1420, %v1424
    %v1427 = vadd.f32 %v1421, %v1425
    %v1429 = vlaneseq
    %v1430 = vshrl.u32 %v1429, 7
    %v1431 = vsub.s32 0, %v1430
    %v1432 = vrot.slane %v1417, %v1431
    %v1433 = vlaneseq
    %v1434 = vshrl.u32 %v1433, 7
    %v1435 = vsub.s32 1, %v1434
    %v1436 = vrot.slane %v1417, %v1435
    %v1439 = vmul.f32 %v1432, %v1426
    %v1440 = vmul.f32 %v1436, %v1427
    %v1441 = vadd.f32 %v1361, %v1439
    %v1442 = vadd.f32 %v1362, %v1440
    %1443 = vrot.lane.b32.xlu0 %v129, 110
    %v1444 = vpop.permute.xlu0 %1443
    %1445 = vrot.lane.b32.xlu0 %v130, 110
    %v1446 = vpop.permute.xlu0 %1445
    %vm1447 = vcmp.lt.s32.totalorder %v140, 110
    %v1448 = vsel %vm1447, %v1444, %v1446
    %v1449 = vsel %vm1447, %v1446, %v1444
    %1450 = vrot.lane.b32.xlu0 %v131, 110
    %v1451 = vpop.permute.xlu0 %1450
    %1452 = vrot.lane.b32.xlu0 %v132, 110
    %v1453 = vpop.permute.xlu0 %1452
    %v1454 = vsel %vm1447, %v1451, %v1453
    %v1455 = vsel %vm1447, %v1453, %v1451
    %s1456 = scalar_lea.vmem [#allocation7], 65
    %v1457 = vld [vmem:[%s1456] ss:$8 sm:$0x3]
    %s1458 = sld [smem:[#allocation3 + $0x21]]
    %v1459 = vstv %s1458
    %v1460 = vmul.f32 %v1459, %v1448
    %v1461 = vmul.f32 %v1459, %v1449
    %s1462 = sld [smem:[#allocation3 + $0x52]]
    %v1463 = vstv %s1462
    %v1464 = vmul.f32 %v1463, %v1454
    %v1465 = vmul.f32 %v1463, %v1455
    %v1466 = vadd.f32 %v1460, %v1464
    %v1467 = vadd.f32 %v1461, %v1465
    %v1469 = vlaneseq
    %v1470 = vshrl.u32 %v1469, 7
    %v1471 = vsub.s32 0, %v1470
    %v1472 = vrot.slane %v1457, %v1471
    %v1473 = vlaneseq
    %v1474 = vshrl.u32 %v1473, 7
    %v1475 = vsub.s32 1, %v1474
    %v1476 = vrot.slane %v1457, %v1475
    %v1479 = vmul.f32 %v1472, %v1466
    %v1480 = vmul.f32 %v1476, %v1467
    %v1481 = vadd.f32 %v1401, %v1479
    %v1482 = vadd.f32 %v1402, %v1480
    %1483 = vrot.lane.b32.xlu0 %v129, 109
    %v1484 = vpop.permute.xlu0 %1483
    %1485 = vrot.lane.b32.xlu0 %v130, 109
    %v1486 = vpop.permute.xlu0 %1485
    %vm1487 = vcmp.lt.s32.totalorder %v140, 109
    %v1488 = vsel %vm1487, %v1484, %v1486
    %v1489 = vsel %vm1487, %v1486, %v1484
    %1490 = vrot.lane.b32.xlu0 %v131, 109
    %v1491 = vpop.permute.xlu0 %1490
    %1492 = vrot.lane.b32.xlu0 %v132, 109
    %v1493 = vpop.permute.xlu0 %1492
    %v1494 = vsel %vm1487, %v1491, %v1493
    %v1495 = vsel %vm1487, %v1493, %v1491
    %s1496 = scalar_lea.vmem [#allocation7], 66
    %v1497 = vld [vmem:[%s1496] ss:$8 sm:$0x3]
    %s1498 = sld [smem:[#allocation3 + $0x22]]
    %v1499 = vstv %s1498
    %v1500 = vmul.f32 %v1499, %v1488
    %v1501 = vmul.f32 %v1499, %v1489
    %s1502 = sld [smem:[#allocation3 + $0x53]]
    %v1503 = vstv %s1502
    %v1504 = vmul.f32 %v1503, %v1494
    %v1505 = vmul.f32 %v1503, %v1495
    %v1506 = vadd.f32 %v1500, %v1504
    %v1507 = vadd.f32 %v1501, %v1505
    %v1509 = vlaneseq
    %v1510 = vshrl.u32 %v1509, 7
    %v1511 = vsub.s32 0, %v1510
    %v1512 = vrot.slane %v1497, %v1511
    %v1513 = vlaneseq
    %v1514 = vshrl.u32 %v1513, 7
    %v1515 = vsub.s32 1, %v1514
    %v1516 = vrot.slane %v1497, %v1515
    %v1519 = vmul.f32 %v1512, %v1506
    %v1520 = vmul.f32 %v1516, %v1507
    %v1521 = vadd.f32 %v1441, %v1519
    %v1522 = vadd.f32 %v1442, %v1520
    %1523 = vrot.lane.b32.xlu0 %v129, 99
    %v1524 = vpop.permute.xlu0 %1523
    %1525 = vrot.lane.b32.xlu0 %v130, 99
    %v1526 = vpop.permute.xlu0 %1525
    %vm1527 = vcmp.lt.s32.totalorder %v140, 99
    %v1528 = vsel %vm1527, %v1524, %v1526
    %v1529 = vsel %vm1527, %v1526, %v1524
    %1530 = vrot.lane.b32.xlu0 %v131, 99
    %v1531 = vpop.permute.xlu0 %1530
    %1532 = vrot.lane.b32.xlu0 %v132, 99
    %v1533 = vpop.permute.xlu0 %1532
    %v1534 = vsel %vm1527, %v1531, %v1533
    %v1535 = vsel %vm1527, %v1533, %v1531
    %s1536 = scalar_lea.vmem [#allocation7], 67
    %v1537 = vld [vmem:[%s1536] ss:$8 sm:$0x3]
    %s1538 = sld [smem:[#allocation3 + $0x23]]
    %v1539 = vstv %s1538
    %v1540 = vmul.f32 %v1539, %v1528
    %v1541 = vmul.f32 %v1539, %v1529
    %s1542 = sld [smem:[#allocation3 + $0x54]]
    %v1543 = vstv %s1542
    %v1544 = vmul.f32 %v1543, %v1534
    %v1545 = vmul.f32 %v1543, %v1535
    %v1546 = vadd.f32 %v1540, %v1544
    %v1547 = vadd.f32 %v1541, %v1545
    %v1549 = vlaneseq
    %v1550 = vshrl.u32 %v1549, 7
    %v1551 = vsub.s32 0, %v1550
    %v1552 = vrot.slane %v1537, %v1551
    %v1553 = vlaneseq
    %v1554 = vshrl.u32 %v1553, 7
    %v1555 = vsub.s32 1, %v1554
    %v1556 = vrot.slane %v1537, %v1555
    %v1559 = vmul.f32 %v1552, %v1546
    %v1560 = vmul.f32 %v1556, %v1547
    %v1561 = vadd.f32 %v1481, %v1559
    %v1562 = vadd.f32 %v1482, %v1560
    %1563 = vrot.lane.b32.xlu0 %v129, 98
    %v1564 = vpop.permute.xlu0 %1563
    %1565 = vrot.lane.b32.xlu0 %v130, 98
    %v1566 = vpop.permute.xlu0 %1565
    %vm1567 = vcmp.lt.s32.totalorder %v140, 98
    %v1568 = vsel %vm1567, %v1564, %v1566
    %v1569 = vsel %vm1567, %v1566, %v1564
    %1570 = vrot.lane.b32.xlu0 %v131, 98
    %v1571 = vpop.permute.xlu0 %1570
    %1572 = vrot.lane.b32.xlu0 %v132, 98
    %v1573 = vpop.permute.xlu0 %1572
    %v1574 = vsel %vm1567, %v1571, %v1573
    %v1575 = vsel %vm1567, %v1573, %v1571
    %s1576 = scalar_lea.vmem [#allocation7], 68
    %v1577 = vld [vmem:[%s1576] ss:$8 sm:$0x3]
    %s1578 = sld [smem:[#allocation3 + $0x24]]
    %v1579 = vstv %s1578
    %v1580 = vmul.f32 %v1579, %v1568
    %v1581 = vmul.f32 %v1579, %v1569
    %s1582 = sld [smem:[#allocation3 + $0x55]]
    %v1583 = vstv %s1582
    %v1584 = vmul.f32 %v1583, %v1574
    %v1585 = vmul.f32 %v1583, %v1575
    %v1586 = vadd.f32 %v1580, %v1584
    %v1587 = vadd.f32 %v1581, %v1585
    %v1589 = vlaneseq
    %v1590 = vshrl.u32 %v1589, 7
    %v1591 = vsub.s32 0, %v1590
    %v1592 = vrot.slane %v1577, %v1591
    %v1593 = vlaneseq
    %v1594 = vshrl.u32 %v1593, 7
    %v1595 = vsub.s32 1, %v1594
    %v1596 = vrot.slane %v1577, %v1595
    %v1599 = vmul.f32 %v1592, %v1586
    %v1600 = vmul.f32 %v1596, %v1587
    %v1601 = vadd.f32 %v1521, %v1599
    %v1602 = vadd.f32 %v1522, %v1600
    %1603 = vrot.lane.b32.xlu0 %v129, 97
    %v1604 = vpop.permute.xlu0 %1603
    %1605 = vrot.lane.b32.xlu0 %v130, 97
    %v1606 = vpop.permute.xlu0 %1605
    %vm1607 = vcmp.lt.s32.totalorder %v140, 97
    %v1608 = vsel %vm1607, %v1604, %v1606
    %v1609 = vsel %vm1607, %v1606, %v1604
    %1610 = vrot.lane.b32.xlu0 %v131, 97
    %v1611 = vpop.permute.xlu0 %1610
    %1612 = vrot.lane.b32.xlu0 %v132, 97
    %v1613 = vpop.permute.xlu0 %1612
    %v1614 = vsel %vm1607, %v1611, %v1613
    %v1615 = vsel %vm1607, %v1613, %v1611
    %s1616 = scalar_lea.vmem [#allocation7], 69
    %v1617 = vld [vmem:[%s1616] ss:$8 sm:$0x3]
    %s1618 = sld [smem:[#allocation3 + $0x25]]
    %v1619 = vstv %s1618
    %v1620 = vmul.f32 %v1619, %v1608
    %v1621 = vmul.f32 %v1619, %v1609
    %s1622 = sld [smem:[#allocation3 + $0x56]]
    %v1623 = vstv %s1622
    %v1624 = vmul.f32 %v1623, %v1614
    %v1625 = vmul.f32 %v1623, %v1615
    %v1626 = vadd.f32 %v1620, %v1624
    %v1627 = vadd.f32 %v1621, %v1625
    %v1629 = vlaneseq
    %v1630 = vshrl.u32 %v1629, 7
    %v1631 = vsub.s32 0, %v1630
    %v1632 = vrot.slane %v1617, %v1631
    %v1633 = vlaneseq
    %v1634 = vshrl.u32 %v1633, 7
    %v1635 = vsub.s32 1, %v1634
    %v1636 = vrot.slane %v1617, %v1635
    %v1639 = vmul.f32 %v1632, %v1626
    %v1640 = vmul.f32 %v1636, %v1627
    %v1641 = vadd.f32 %v1561, %v1639
    %v1642 = vadd.f32 %v1562, %v1640
    %1643 = vrot.lane.b32.xlu0 %v129, 96
    %v1644 = vpop.permute.xlu0 %1643
    %1645 = vrot.lane.b32.xlu0 %v130, 96
    %v1646 = vpop.permute.xlu0 %1645
    %vm1647 = vcmp.lt.s32.totalorder %v140, 96
    %v1648 = vsel %vm1647, %v1644, %v1646
    %v1649 = vsel %vm1647, %v1646, %v1644
    %1650 = vrot.lane.b32.xlu0 %v131, 96
    %v1651 = vpop.permute.xlu0 %1650
    %1652 = vrot.lane.b32.xlu0 %v132, 96
    %v1653 = vpop.permute.xlu0 %1652
    %v1654 = vsel %vm1647, %v1651, %v1653
    %v1655 = vsel %vm1647, %v1653, %v1651
    %s1656 = scalar_lea.vmem [#allocation7], 70
    %v1657 = vld [vmem:[%s1656] ss:$8 sm:$0x3]
    %s1658 = sld [smem:[#allocation3 + $0x26]]
    %v1659 = vstv %s1658
    %v1660 = vmul.f32 %v1659, %v1648
    %v1661 = vmul.f32 %v1659, %v1649
    %s1662 = sld [smem:[#allocation3 + $0x57]]
    %v1663 = vstv %s1662
    %v1664 = vmul.f32 %v1663, %v1654
    %v1665 = vmul.f32 %v1663, %v1655
    %v1666 = vadd.f32 %v1660, %v1664
    %v1667 = vadd.f32 %v1661, %v1665
    %v1669 = vlaneseq
    %v1670 = vshrl.u32 %v1669, 7
    %v1671 = vsub.s32 0, %v1670
    %v1672 = vrot.slane %v1657, %v1671
    %v1673 = vlaneseq
    %v1674 = vshrl.u32 %v1673, 7
    %v1675 = vsub.s32 1, %v1674
    %v1676 = vrot.slane %v1657, %v1675
    %v1679 = vmul.f32 %v1672, %v1666
    %v1680 = vmul.f32 %v1676, %v1667
    %v1681 = vadd.f32 %v1601, %v1679
    %v1682 = vadd.f32 %v1602, %v1680
    %1683 = vrot.lane.b32.xlu0 %v129, 95
    %v1684 = vpop.permute.xlu0 %1683
    %1685 = vrot.lane.b32.xlu0 %v130, 95
    %v1686 = vpop.permute.xlu0 %1685
    %vm1687 = vcmp.lt.s32.totalorder %v140, 95
    %v1688 = vsel %vm1687, %v1684, %v1686
    %v1689 = vsel %vm1687, %v1686, %v1684
    %1690 = vrot.lane.b32.xlu0 %v131, 95
    %v1691 = vpop.permute.xlu0 %1690
    %1692 = vrot.lane.b32.xlu0 %v132, 95
    %v1693 = vpop.permute.xlu0 %1692
    %v1694 = vsel %vm1687, %v1691, %v1693
    %v1695 = vsel %vm1687, %v1693, %v1691
    %s1696 = scalar_lea.vmem [#allocation7], 71
    %v1697 = vld [vmem:[%s1696] ss:$8 sm:$0x3]
    %s1698 = sld [smem:[#allocation3 + $0x27]]
    %v1699 = vstv %s1698
    %v1700 = vmul.f32 %v1699, %v1688
    %v1701 = vmul.f32 %v1699, %v1689
    %s1702 = sld [smem:[#allocation3 + $0x58]]
    %v1703 = vstv %s1702
    %v1704 = vmul.f32 %v1703, %v1694
    %v1705 = vmul.f32 %v1703, %v1695
    %v1706 = vadd.f32 %v1700, %v1704
    %v1707 = vadd.f32 %v1701, %v1705
    %v1709 = vlaneseq
    %v1710 = vshrl.u32 %v1709, 7
    %v1711 = vsub.s32 0, %v1710
    %v1712 = vrot.slane %v1697, %v1711
    %v1713 = vlaneseq
    %v1714 = vshrl.u32 %v1713, 7
    %v1715 = vsub.s32 1, %v1714
    %v1716 = vrot.slane %v1697, %v1715
    %v1719 = vmul.f32 %v1712, %v1706
    %v1720 = vmul.f32 %v1716, %v1707
    %v1721 = vadd.f32 %v1641, %v1719
    %v1722 = vadd.f32 %v1642, %v1720
    %1723 = vrot.lane.b32.xlu0 %v129, 94
    %v1724 = vpop.permute.xlu0 %1723
    %1725 = vrot.lane.b32.xlu0 %v130, 94
    %v1726 = vpop.permute.xlu0 %1725
    %vm1727 = vcmp.lt.s32.totalorder %v140, 94
    %v1728 = vsel %vm1727, %v1724, %v1726
    %v1729 = vsel %vm1727, %v1726, %v1724
    %1730 = vrot.lane.b32.xlu0 %v131, 94
    %v1731 = vpop.permute.xlu0 %1730
    %1732 = vrot.lane.b32.xlu0 %v132, 94
    %v1733 = vpop.permute.xlu0 %1732
    %v1734 = vsel %vm1727, %v1731, %v1733
    %v1735 = vsel %vm1727, %v1733, %v1731
    %s1736 = scalar_lea.vmem [#allocation7], 80
    %v1737 = vld [vmem:[%s1736] ss:$8 sm:$0x3]
    %s1738 = sld [smem:[#allocation3 + $0x28]]
    %v1739 = vstv %s1738
    %v1740 = vmul.f32 %v1739, %v1728
    %v1741 = vmul.f32 %v1739, %v1729
    %s1742 = sld [smem:[#allocation3 + $0x59]]
    %v1743 = vstv %s1742
    %v1744 = vmul.f32 %v1743, %v1734
    %v1745 = vmul.f32 %v1743, %v1735
    %v1746 = vadd.f32 %v1740, %v1744
    %v1747 = vadd.f32 %v1741, %v1745
    %v1749 = vlaneseq
    %v1750 = vshrl.u32 %v1749, 7
    %v1751 = vsub.s32 0, %v1750
    %v1752 = vrot.slane %v1737, %v1751
    %v1753 = vlaneseq
    %v1754 = vshrl.u32 %v1753, 7
    %v1755 = vsub.s32 1, %v1754
    %v1756 = vrot.slane %v1737, %v1755
    %v1759 = vmul.f32 %v1752, %v1746
    %v1760 = vmul.f32 %v1756, %v1747
    %v1761 = vadd.f32 %v1681, %v1759
    %v1762 = vadd.f32 %v1682, %v1760
    %1763 = vrot.lane.b32.xlu0 %v129, 93
    %v1764 = vpop.permute.xlu0 %1763
    %1765 = vrot.lane.b32.xlu0 %v130, 93
    %v1766 = vpop.permute.xlu0 %1765
    %vm1767 = vcmp.lt.s32.totalorder %v140, 93
    %v1768 = vsel %vm1767, %v1764, %v1766
    %v1769 = vsel %vm1767, %v1766, %v1764
    %1770 = vrot.lane.b32.xlu0 %v131, 93
    %v1771 = vpop.permute.xlu0 %1770
    %1772 = vrot.lane.b32.xlu0 %v132, 93
    %v1773 = vpop.permute.xlu0 %1772
    %v1774 = vsel %vm1767, %v1771, %v1773
    %v1775 = vsel %vm1767, %v1773, %v1771
    %s1776 = scalar_lea.vmem [#allocation7], 81
    %v1777 = vld [vmem:[%s1776] ss:$8 sm:$0x3]
    %s1778 = sld [smem:[#allocation3 + $0x29]]
    %v1779 = vstv %s1778
    %v1780 = vmul.f32 %v1779, %v1768
    %v1781 = vmul.f32 %v1779, %v1769
    %s1782 = sld [smem:[#allocation3 + $0x5a]]
    %v1783 = vstv %s1782
    %v1784 = vmul.f32 %v1783, %v1774
    %v1785 = vmul.f32 %v1783, %v1775
    %v1786 = vadd.f32 %v1780, %v1784
    %v1787 = vadd.f32 %v1781, %v1785
    %v1789 = vlaneseq
    %v1790 = vshrl.u32 %v1789, 7
    %v1791 = vsub.s32 0, %v1790
    %v1792 = vrot.slane %v1777, %v1791
    %v1793 = vlaneseq
    %v1794 = vshrl.u32 %v1793, 7
    %v1795 = vsub.s32 1, %v1794
    %v1796 = vrot.slane %v1777, %v1795
    %v1799 = vmul.f32 %v1792, %v1786
    %v1800 = vmul.f32 %v1796, %v1787
    %v1801 = vadd.f32 %v1721, %v1799
    %v1802 = vadd.f32 %v1722, %v1800
    %1803 = vrot.lane.b32.xlu0 %v129, 83
    %v1804 = vpop.permute.xlu0 %1803
    %1805 = vrot.lane.b32.xlu0 %v130, 83
    %v1806 = vpop.permute.xlu0 %1805
    %vm1807 = vcmp.lt.s32.totalorder %v140, 83
    %v1808 = vsel %vm1807, %v1804, %v1806
    %v1809 = vsel %vm1807, %v1806, %v1804
    %1810 = vrot.lane.b32.xlu0 %v131, 83
    %v1811 = vpop.permute.xlu0 %1810
    %1812 = vrot.lane.b32.xlu0 %v132, 83
    %v1813 = vpop.permute.xlu0 %1812
    %v1814 = vsel %vm1807, %v1811, %v1813
    %v1815 = vsel %vm1807, %v1813, %v1811
    %s1816 = scalar_lea.vmem [#allocation7], 82
    %v1817 = vld [vmem:[%s1816] ss:$8 sm:$0x3]
    %s1818 = sld [smem:[#allocation3 + $0x2a]]
    %v1819 = vstv %s1818
    %v1820 = vmul.f32 %v1819, %v1808
    %v1821 = vmul.f32 %v1819, %v1809
    %s1822 = sld [smem:[#allocation3 + $0x5b]]
    %v1823 = vstv %s1822
    %v1824 = vmul.f32 %v1823, %v1814
    %v1825 = vmul.f32 %v1823, %v1815
    %v1826 = vadd.f32 %v1820, %v1824
    %v1827 = vadd.f32 %v1821, %v1825
    %v1829 = vlaneseq
    %v1830 = vshrl.u32 %v1829, 7
    %v1831 = vsub.s32 0, %v1830
    %v1832 = vrot.slane %v1817, %v1831
    %v1833 = vlaneseq
    %v1834 = vshrl.u32 %v1833, 7
    %v1835 = vsub.s32 1, %v1834
    %v1836 = vrot.slane %v1817, %v1835
    %v1839 = vmul.f32 %v1832, %v1826
    %v1840 = vmul.f32 %v1836, %v1827
    %v1841 = vadd.f32 %v1761, %v1839
    %v1842 = vadd.f32 %v1762, %v1840
    %1843 = vrot.lane.b32.xlu0 %v129, 82
    %v1844 = vpop.permute.xlu0 %1843
    %1845 = vrot.lane.b32.xlu0 %v130, 82
    %v1846 = vpop.permute.xlu0 %1845
    %vm1847 = vcmp.lt.s32.totalorder %v140, 82
    %v1848 = vsel %vm1847, %v1844, %v1846
    %v1849 = vsel %vm1847, %v1846, %v1844
    %1850 = vrot.lane.b32.xlu0 %v131, 82
    %v1851 = vpop.permute.xlu0 %1850
    %1852 = vrot.lane.b32.xlu0 %v132, 82
    %v1853 = vpop.permute.xlu0 %1852
    %v1854 = vsel %vm1847, %v1851, %v1853
    %v1855 = vsel %vm1847, %v1853, %v1851
    %s1856 = scalar_lea.vmem [#allocation7], 83
    %v1857 = vld [vmem:[%s1856] ss:$8 sm:$0x3]
    %s1858 = sld [smem:[#allocation3 + $0x2b]]
    %v1859 = vstv %s1858
    %v1860 = vmul.f32 %v1859, %v1848
    %v1861 = vmul.f32 %v1859, %v1849
    %s1862 = sld [smem:[#allocation3 + $0x5c]]
    %v1863 = vstv %s1862
    %v1864 = vmul.f32 %v1863, %v1854
    %v1865 = vmul.f32 %v1863, %v1855
    %v1866 = vadd.f32 %v1860, %v1864
    %v1867 = vadd.f32 %v1861, %v1865
    %v1869 = vlaneseq
    %v1870 = vshrl.u32 %v1869, 7
    %v1871 = vsub.s32 0, %v1870
    %v1872 = vrot.slane %v1857, %v1871
    %v1873 = vlaneseq
    %v1874 = vshrl.u32 %v1873, 7
    %v1875 = vsub.s32 1, %v1874
    %v1876 = vrot.slane %v1857, %v1875
    %v1879 = vmul.f32 %v1872, %v1866
    %v1880 = vmul.f32 %v1876, %v1867
    %v1881 = vadd.f32 %v1801, %v1879
    %v1882 = vadd.f32 %v1802, %v1880
    %1883 = vrot.lane.b32.xlu0 %v129, 81
    %v1884 = vpop.permute.xlu0 %1883
    %1885 = vrot.lane.b32.xlu0 %v130, 81
    %v1886 = vpop.permute.xlu0 %1885
    %vm1887 = vcmp.lt.s32.totalorder %v140, 81
    %v1888 = vsel %vm1887, %v1884, %v1886
    %v1889 = vsel %vm1887, %v1886, %v1884
    %1890 = vrot.lane.b32.xlu0 %v131, 81
    %v1891 = vpop.permute.xlu0 %1890
    %1892 = vrot.lane.b32.xlu0 %v132, 81
    %v1893 = vpop.permute.xlu0 %1892
    %v1894 = vsel %vm1887, %v1891, %v1893
    %v1895 = vsel %vm1887, %v1893, %v1891
    %s1896 = scalar_lea.vmem [#allocation7], 84
    %v1897 = vld [vmem:[%s1896] ss:$8 sm:$0x3]
    %s1898 = sld [smem:[#allocation3 + $0x2c]]
    %v1899 = vstv %s1898
    %v1900 = vmul.f32 %v1899, %v1888
    %v1901 = vmul.f32 %v1899, %v1889
    %s1902 = sld [smem:[#allocation3 + $0x5d]]
    %v1903 = vstv %s1902
    %v1904 = vmul.f32 %v1903, %v1894
    %v1905 = vmul.f32 %v1903, %v1895
    %v1906 = vadd.f32 %v1900, %v1904
    %v1907 = vadd.f32 %v1901, %v1905
    %v1909 = vlaneseq
    %v1910 = vshrl.u32 %v1909, 7
    %v1911 = vsub.s32 0, %v1910
    %v1912 = vrot.slane %v1897, %v1911
    %v1913 = vlaneseq
    %v1914 = vshrl.u32 %v1913, 7
    %v1915 = vsub.s32 1, %v1914
    %v1916 = vrot.slane %v1897, %v1915
    %v1919 = vmul.f32 %v1912, %v1906
    %v1920 = vmul.f32 %v1916, %v1907
    %v1921 = vadd.f32 %v1841, %v1919
    %v1922 = vadd.f32 %v1842, %v1920
    %1923 = vrot.lane.b32.xlu0 %v129, 80
    %v1924 = vpop.permute.xlu0 %1923
    %1925 = vrot.lane.b32.xlu0 %v130, 80
    %v1926 = vpop.permute.xlu0 %1925
    %vm1927 = vcmp.lt.s32.totalorder %v140, 80
    %v1928 = vsel %vm1927, %v1924, %v1926
    %v1929 = vsel %vm1927, %v1926, %v1924
    %1930 = vrot.lane.b32.xlu0 %v131, 80
    %v1931 = vpop.permute.xlu0 %1930
    %1932 = vrot.lane.b32.xlu0 %v132, 80
    %v1933 = vpop.permute.xlu0 %1932
    %v1934 = vsel %vm1927, %v1931, %v1933
    %v1935 = vsel %vm1927, %v1933, %v1931
    %s1936 = scalar_lea.vmem [#allocation7], 85
    %v1937 = vld [vmem:[%s1936] ss:$8 sm:$0x3]
    %s1938 = sld [smem:[#allocation3 + $0x2d]]
    %v1939 = vstv %s1938
    %v1940 = vmul.f32 %v1939, %v1928
    %v1941 = vmul.f32 %v1939, %v1929
    %s1942 = sld [smem:[#allocation3 + $0x5e]]
    %v1943 = vstv %s1942
    %v1944 = vmul.f32 %v1943, %v1934
    %v1945 = vmul.f32 %v1943, %v1935
    %v1946 = vadd.f32 %v1940, %v1944
    %v1947 = vadd.f32 %v1941, %v1945
    %v1949 = vlaneseq
    %v1950 = vshrl.u32 %v1949, 7
    %v1951 = vsub.s32 0, %v1950
    %v1952 = vrot.slane %v1937, %v1951
    %v1953 = vlaneseq
    %v1954 = vshrl.u32 %v1953, 7
    %v1955 = vsub.s32 1, %v1954
    %v1956 = vrot.slane %v1937, %v1955
    %v1959 = vmul.f32 %v1952, %v1946
    %v1960 = vmul.f32 %v1956, %v1947
    %v1961 = vadd.f32 %v1881, %v1959
    %v1962 = vadd.f32 %v1882, %v1960
    %1963 = vrot.lane.b32.xlu0 %v129, 79
    %v1964 = vpop.permute.xlu0 %1963
    %1965 = vrot.lane.b32.xlu0 %v130, 79
    %v1966 = vpop.permute.xlu0 %1965
    %vm1967 = vcmp.lt.s32.totalorder %v140, 79
    %v1968 = vsel %vm1967, %v1964, %v1966
    %v1969 = vsel %vm1967, %v1966, %v1964
    %1970 = vrot.lane.b32.xlu0 %v131, 79
    %v1971 = vpop.permute.xlu0 %1970
    %1972 = vrot.lane.b32.xlu0 %v132, 79
    %v1973 = vpop.permute.xlu0 %1972
    %v1974 = vsel %vm1967, %v1971, %v1973
    %v1975 = vsel %vm1967, %v1973, %v1971
    %s1976 = scalar_lea.vmem [#allocation7], 86
    %v1977 = vld [vmem:[%s1976] ss:$8 sm:$0x3]
    %s1978 = sld [smem:[#allocation3 + $0x2e]]
    %v1979 = vstv %s1978
    %v1980 = vmul.f32 %v1979, %v1968
    %v1981 = vmul.f32 %v1979, %v1969
    %s1982 = sld [smem:[#allocation3 + $0x5f]]
    %v1983 = vstv %s1982
    %v1984 = vmul.f32 %v1983, %v1974
    %v1985 = vmul.f32 %v1983, %v1975
    %v1986 = vadd.f32 %v1980, %v1984
    %v1987 = vadd.f32 %v1981, %v1985
    %v1989 = vlaneseq
    %v1990 = vshrl.u32 %v1989, 7
    %v1991 = vsub.s32 0, %v1990
    %v1992 = vrot.slane %v1977, %v1991
    %v1993 = vlaneseq
    %v1994 = vshrl.u32 %v1993, 7
    %v1995 = vsub.s32 1, %v1994
    %v1996 = vrot.slane %v1977, %v1995
    %v1999 = vmul.f32 %v1992, %v1986
    %v2000 = vmul.f32 %v1996, %v1987
    %v2001 = vadd.f32 %v1921, %v1999
    %v2002 = vadd.f32 %v1922, %v2000
    %2003 = vrot.lane.b32.xlu0 %v129, 78
    %v2004 = vpop.permute.xlu0 %2003
    %2005 = vrot.lane.b32.xlu0 %v130, 78
    %v2006 = vpop.permute.xlu0 %2005
    %vm2007 = vcmp.lt.s32.totalorder %v140, 78
    %v2008 = vsel %vm2007, %v2004, %v2006
    %v2009 = vsel %vm2007, %v2006, %v2004
    %2010 = vrot.lane.b32.xlu0 %v131, 78
    %v2011 = vpop.permute.xlu0 %2010
    %2012 = vrot.lane.b32.xlu0 %v132, 78
    %v2013 = vpop.permute.xlu0 %2012
    %v2014 = vsel %vm2007, %v2011, %v2013
    %v2015 = vsel %vm2007, %v2013, %v2011
    %s2016 = scalar_lea.vmem [#allocation7], 87
    %v2017 = vld [vmem:[%s2016] ss:$8 sm:$0x3]
    %s2018 = sld [smem:[#allocation3 + $0x2f]]
    %v2019 = vstv %s2018
    %v2020 = vmul.f32 %v2019, %v2008
    %v2021 = vmul.f32 %v2019, %v2009
    %s2022 = sld [smem:[#allocation3 + $0x60]]
    %v2023 = vstv %s2022
    %v2024 = vmul.f32 %v2023, %v2014
    %v2025 = vmul.f32 %v2023, %v2015
    %v2026 = vadd.f32 %v2020, %v2024
    %v2027 = vadd.f32 %v2021, %v2025
    %v2029 = vlaneseq
    %v2030 = vshrl.u32 %v2029, 7
    %v2031 = vsub.s32 0, %v2030
    %v2032 = vrot.slane %v2017, %v2031
    %v2033 = vlaneseq
    %v2034 = vshrl.u32 %v2033, 7
    %v2035 = vsub.s32 1, %v2034
    %v2036 = vrot.slane %v2017, %v2035
    %v2039 = vmul.f32 %v2032, %v2026
    %v2040 = vmul.f32 %v2036, %v2027
    %v2041 = vadd.f32 %v1961, %v2039
    %v2042 = vadd.f32 %v1962, %v2040
    %2043 = vrot.lane.b32.xlu0 %v129, 77
    %v2044 = vpop.permute.xlu0 %2043
    %2045 = vrot.lane.b32.xlu0 %v130, 77
    %v2046 = vpop.permute.xlu0 %2045
    %vm2047 = vcmp.lt.s32.totalorder %v140, 77
    %v2048 = vsel %vm2047, %v2044, %v2046
    %v2049 = vsel %vm2047, %v2046, %v2044
    %2050 = vrot.lane.b32.xlu0 %v131, 77
    %v2051 = vpop.permute.xlu0 %2050
    %2052 = vrot.lane.b32.xlu0 %v132, 77
    %v2053 = vpop.permute.xlu0 %2052
    %v2054 = vsel %vm2047, %v2051, %v2053
    %v2055 = vsel %vm2047, %v2053, %v2051
    %s2056 = scalar_lea.vmem [#allocation7], 96
    %v2057 = vld [vmem:[%s2056] ss:$8 sm:$0x3]
    %s2058 = sld [smem:[#allocation3 + $0x30]]
    %v2059 = vstv %s2058
    %v2060 = vmul.f32 %v2059, %v2048
    %v2061 = vmul.f32 %v2059, %v2049
    %s2062 = sld [smem:[#allocation3 + $0x61]]
    %v2063 = vstv %s2062
    %v2064 = vmul.f32 %v2063, %v2054
    %v2065 = vmul.f32 %v2063, %v2055
    %v2066 = vadd.f32 %v2060, %v2064
    %v2067 = vadd.f32 %v2061, %v2065
    %v2069 = vlaneseq
    %v2070 = vshrl.u32 %v2069, 7
    %v2071 = vsub.s32 0, %v2070
    %v2072 = vrot.slane %v2057, %v2071
    %v2073 = vlaneseq
    %v2074 = vshrl.u32 %v2073, 7
    %v2075 = vsub.s32 1, %v2074
    %v2076 = vrot.slane %v2057, %v2075
    %v2079 = vmul.f32 %v2072, %v2066
    %v2080 = vmul.f32 %v2076, %v2067
    %v2081 = vadd.f32 %v2001, %v2079
    %v2082 = vadd.f32 %v2002, %v2080
    %v2083 = vadd.f32 %v2081, %v2041
    %v2084 = vadd.f32 %v2082, %v2042
    %v2085 = vxor.u32 %v2083, 2147483648
    %v2086 = vxor.u32 %v2084, 2147483648
    %v2087 = vmul.f32 %v2085, 1.442695
    %v2088 = vpow.pop %v2087
    %v2089 = vmul.f32 %v2086, 1.442695
    %v2090 = vpow.pop %v2089
    %v2091 = vadd.f32 %v2088, 1.0
    %v2092 = vadd.f32 %v2090, 1.0
    %v2093 = vrcp.pop %v2091
    %v2094 = vmul.f32 1.0, %v2093
    %v2095 = vrcp.pop %v2092
    %v2096 = vmul.f32 1.0, %v2095
    %vm2097 = vcmp.ge.f32.partialorder %v2094, 0.2
    %vm2098 = vcmp.ge.f32.partialorder %v2096, 0.2
    %v2099 = vsel %vm2097, %v2094, 0.0
    %v2100 = vsel %vm2098, %v2096, 0.0
    %v2103 = vcombine.low %v2099, %v2100
    %v2105 = vunpack.c.l.s4 1966171168
    %v2106 = vunpack.c.0.s8 %v2105
    %v2107 = vlaneseq
    %v2108 = vshrl.u32 %v2107, 7
    %v2109 = vsub.s32 %v2106, %v2108
    %v2110 = vrot.slane %v2103, %v2109
    %v2111 = vcombine.high %v2110, %v2110
    %v2113 = vunpack.c.l.s4 1966171168
    %v2114 = vunpack.c.0.s8 %v2113
    %v2115 = vlaneseq
    %v2116 = vshrl.u32 %v2115, 7
    %v2117 = vsub.s32 %v2114, %v2116
    %v2118 = vrot.slane %v2110, %v2117
    %v2120 = vunpack.c.l.s4 1966171168
    %v2121 = vunpack.c.0.s8 %v2120
    %v2122 = vlaneseq
    %v2123 = vshrl.u32 %v2122, 7
    %v2124 = vsub.s32 %v2121, %v2123
    %v2125 = vrot.slane %v2111, %v2124
    %v2126 = vlaneseq
    %v2127 = vshrl.u32 %v2126, 7
    %v2128 = vsub.s32 0, %v2127
    %v2129 = vrot.slane %v2118, %v2128
    %v2130 = vlaneseq
    %v2131 = vshrl.u32 %v2130, 7
    %v2132 = vsub.s32 1, %v2131
    %v2133 = vrot.slane %v2118, %v2132
    %v2134 = vlaneseq
    %v2135 = vshrl.u32 %v2134, 7
    %v2136 = vsub.s32 0, %v2135
    %v2137 = vrot.slane %v2125, %v2136
    %v2138 = vlaneseq
    %v2139 = vshrl.u32 %v2138, 7
    %v2140 = vsub.s32 1, %v2139
    %v2141 = vrot.slane %v2125, %v2140
    %v2142 = vcombine.low %v2129, %v2133
    %v2143 = vcombine.low %v2137, %v2141
    %2146 = vst [vmem:[#allocation10] sm:$0xff] %v2142
    %2147 = vst [vmem:[#allocation10 + $0x8] sm:$0xff] %v2143
    // Predicated region
    $region30: #{tpu_custom_call.1} parent=1 // pred_check
      _
    $region31: #{tpu_custom_call.1} parent=1 // pred_check_branch
      %2149 = sbr.rel (0) target = $region33
    $region32: #{tpu_custom_call.1} parent=1 // pred_region
      %s2151 = ssub.s32 256, 256
      %2152 = vsyncadd [#allocation5], %s2151
      %s2153 = sshll.u32 [#allocation10], 4
      %s2154 = int_to_ptr.vmem [resolvable:$true] %s2153
      %2159 = dma.vmem_to_hbm [thread:$0]  %s2154, 256, %s4, [#allocation5], 128, 128, 8
    $region33: #{tpu_custom_call.1} parent=1 // pred_fallthru
      _
    // Predicated region
    $region34: #{tpu_custom_call.1} parent=1 // pred_check
      _
    $region35: #{tpu_custom_call.1} parent=1 // pred_check_branch
      %2161 = sbr.rel (0) target = $region37
    $region36: #{tpu_custom_call.1} parent=1 // pred_region
      %2162 = dma.done [#allocation5], 256
    $region37: #{tpu_custom_call.1} parent=1 // pred_fallthru
      _
    %2163 = vsyncpa [#allocation4], 1
    %2164 = vsyncpa [#allocation9], 1
    %2165 = vsyncpa [#allocation5], 1
    %2166 = vsyncpa [#allocation6], 1

</llo_original>
